<compile_context>
chip_gen: v6e
topology: v6e:2x2x1
jax: 0.10.0
libtpu: 0.0.40
codegen_flags: <defaults>
</compile_context>

<pallas_src>
import jax
import jax.numpy as jnp
from jax.experimental import pallas as pl
from jax.experimental.pallas import tpu as pltpu


_LANE = 128


def _round_up(n, m=_LANE):
    return ((n + m - 1) // m) * m


# --------------------------- fused GNN kernel -----------------------------

def _make_gnn_kernel(nlayers, ones_cols):
    """Kernel refs: x, stats, [gather, scatter, gate_pre, w2, b2, wbig, blk,
    blkT] * nlayers, out_slab, out_stats."""

    def kernel(*refs):
        f32 = jnp.float32
        x_ref, stats_ref = refs[0], refs[1]
        o_ref, ostats_ref = refs[-2], refs[-1]

        x = x_ref[...]
        for i in range(nlayers):
            (g_ref, s_ref, gp_ref, w2_ref, b2_ref,
             wbig_ref, blk_ref, blkT_ref) = refs[2 + 8 * i: 2 + 8 * (i + 1)]

            gather = g_ref[...].astype(f32)       # bf16 one-hot -> f32 (exact)
            scatter = s_ref[...].astype(f32)

            # edge gate: relu(precomputed pre-activation) -> Linear(3,1) -> sigmoid
            gate = jax.nn.sigmoid(
                jnp.dot(jnp.maximum(gp_ref[...], 0.0), w2_ref[...],
                        preferred_element_type=f32) + b2_ref[...])       # (E,1)

            # gather source rows, gate, scatter-add into destinations.
            xj = jnp.dot(gather, x, preferred_element_type=f32)          # (E, Pin)
            agg = jnp.dot(scatter, xj * gate, preferred_element_type=f32)  # (Rd, Pin)

            # lin applied after aggregation (linearity); constant-1 lane of the
            # slab carries sum(gate) and wbig's matching row carries the bias.
            out = jnp.dot(agg, wbig_ref[...], preferred_element_type=f32)  # (Rd, Pout)

            # F.normalize(p=2, dim=-1) per (node, b, s) block via thin
            # block-indicator matmuls, then ReLU.  rsqrt instead of sqrt+div.
            bn = jnp.dot(out * out, blk_ref[...], preferred_element_type=f32)
            nsq = jnp.dot(bn, blkT_ref[...], preferred_element_type=f32)
            y = jnp.maximum(out * jax.lax.rsqrt(jnp.maximum(nsq, 1e-24)), 0.0)

            if i + 1 < nlayers:
                # inject the constant-1 lane consumed by the next layer's
                # fused gate-sum / bias row.
                lane = jax.lax.broadcasted_iota(jnp.int32, y.shape, 1)
                x = jnp.where(lane == ones_cols[i + 1], 1.0, y)
            else:
                o_ref[...] = y
                # frozen gs_sum (w=1, b=0): un-gated gather + scatter-add over
                # the [x_org | nonzero-mask] columns (same operands as above).
                sj = jnp.dot(gather, stats_ref[...], preferred_element_type=f32)
                ostats_ref[...] = jnp.dot(scatter, sj, preferred_element_type=f32)

    return kernel


# ------------------------- host-side operand prep -------------------------

def _node_major_slab(x, n_keep, p_cols):
    """(B,S,N,C) -> (n_keep, p_cols) node-major, columns ordered (b,s,c)."""
    B, S, _, C = x.shape
    slab = x[:, :, :n_keep, :].transpose(2, 0, 1, 3).reshape(n_keep, B * S * C)
    return jnp.pad(slab, ((0, 0), (0, p_cols - B * S * C)))


def _layer_consts(W, b, BS, p_in, p_out, bias_row):
    """kron(I_BS, W) with the bias folded into `bias_row`, plus the thin
    per-(b,s)-block indicator used for the L2 norm."""
    cin, cout = W.shape
    assert bias_row >= BS * cin and bias_row < p_in
    assert BS <= _LANE
    eye = jnp.eye(BS, dtype=jnp.float32)
    wbig = jnp.zeros((p_in, p_out), jnp.float32)
    wbig = wbig.at[:BS * cin, :BS * cout].set(jnp.kron(eye, W))
    wbig = wbig.at[bias_row, :BS * cout].set(jnp.tile(b, BS))
    blk = jnp.zeros((p_out, _LANE), jnp.float32)
    blk = blk.at[:BS * cout, :BS].set(
        jnp.kron(eye, jnp.ones((cout, 1), jnp.float32)))
    return wbig, blk, blk.T


def _edge_prep(gp, ei_f, ei_r, eid_f, eid_r, edge_weight, lipschitz,
               n_src, n_dst):
    """Per-edge operands for one layer, both directions fused (rev rows are
    block-offset).  The lin_ew / gate-W1 algebra is folded exactly."""
    src = jnp.concatenate([ei_f[0], ei_r[0] + n_src])
    dst = jnp.concatenate([ei_f[1], ei_r[1] + n_dst])
    gather = jax.nn.one_hot(src, 2 * n_src, dtype=jnp.bfloat16)     # (E, 2Nsrc)
    scatter = jax.nn.one_hot(dst, 2 * n_dst, dtype=jnp.bfloat16).T  # (2Ndst, E)

    w1 = gp["gate_w1"]                                              # (48, 3)
    w_fold = gp["ew_w"] @ w1[:16]                                   # (1, 3)
    b_fold = gp["ew_b"] @ w1[:16]                                   # (3,)
    lip_i_proj = lipschitz @ w1[16:32]                              # (N, 3)
    lip_j_proj = lipschitz @ w1[32:48]                              # (N, 3)

    ew = jnp.concatenate([edge_weight[eid_f], edge_weight[eid_r]])[:, None]
    # PyG convention: i = target, j = source.
    idx_i = jnp.concatenate([ei_f[1], ei_r[1]])
    idx_j = jnp.concatenate([ei_f[0], ei_r[0]])
    gate_pre = (ew * w_fold + lip_i_proj[idx_i] + lip_j_proj[idx_j]
                + b_fold + gp["gate_b1"])                           # (E, 3)
    return gather, scatter, gate_pre


def gnn_bidir_pallas(params, xs, xrev, adjs_f, adjs_r, edge_weight,
                     lipschitz, mu, std):
    """Whole bidirectional GNN stack (+ last-layer stats) in one pallas_call."""
    B, S, N0, Cin = xs.shape
    BS = B * S
    nlayers = len(adjs_f)

    # stacked fwd/rev node-major slab with the constant-1 gate-sum lane.
    ones_col0 = BS * Cin
    p_in0 = _round_up(BS * Cin + 1)
    x_slab = jnp.concatenate([_node_major_slab(xs, N0, p_in0),
                              _node_major_slab(xrev, N0, p_in0)], axis=0)
    x_slab = x_slab.at[:, ones_col0].set(1.0)

    x_org_f = xs[:, :, :, 0] * std + mu
    x_org_r = xrev[:, :, :, 0] * std + mu

    layer_args = []
    ones_cols = [ones_col0]
    p_in, ones_col, n_src = p_in0, ones_col0, N0
    flops = 0
    trans = 0
    bytes_acc = x_slab.size * 4
    for i in range(nlayers):
        ei_f, eid_f, size = adjs_f[i]
        ei_r, eid_r, _ = adjs_r[i]
        gp = params["gc"][i]
        cout = gp["lin_w"].shape[1]
        n_dst = size[1]

        gather, scatter, gate_pre = _edge_prep(
            gp, ei_f, ei_r, eid_f, eid_r, edge_weight, lipschitz, n_src, n_dst)
        p_out = _round_up(BS * cout + 1)
        wbig, blk, blkT = _layer_consts(gp["lin_w"], gp["lin_b"], BS,
                                        p_in, p_out, ones_col)

        layer_args += [gather, scatter, gate_pre, gp["gate_w2"],
                       gp["gate_b2"].reshape(1, 1), wbig, blk, blkT]

        E, nsrc2 = gather.shape
        ndst2 = scatter.shape[0]
        flops += (2 * E * nsrc2 * p_in + 2 * ndst2 * E * p_in
                  + 2 * ndst2 * p_in * p_out + 4 * ndst2 * p_out * _LANE)
        trans += E + ndst2 * p_out
        bytes_acc += 2 * (gather.size + scatter.size) + 4 * (
            gate_pre.size + wbig.size + 2 * blk.size + ndst2 * p_out)

        p_in, ones_col, n_src = p_out, BS * cout, n_dst
        ones_cols.append(ones_col)

    # last-layer gs_sum / count statistics share the last gather/scatter.
    n_src_last = adjs_f[-1][2][0]
    p_stats = _round_up(2 * BS)

    def stats_slab_of(xo):
        sel = xo[:, :, :n_src_last]
        nz = (sel != 0).astype(jnp.float32)
        s = jnp.concatenate(
            [sel.transpose(2, 0, 1).reshape(n_src_last, BS),
             nz.transpose(2, 0, 1).reshape(n_src_last, BS)], axis=1)
        return jnp.pad(s, ((0, 0), (0, p_stats - 2 * BS)))

    stats_slab = jnp.concatenate(
        [stats_slab_of(x_org_f), stats_slab_of(x_org_r)], axis=0)
    bytes_acc += 4 * stats_slab.size

    n_last = adjs_f[-1][2][1]
    cout_last = params["gc"][-1]["lin_w"].shape[1]
    p_out_last = p_in

    slab, stats = pl.pallas_call(
        _make_gnn_kernel(nlayers, ones_cols),
        out_shape=(jax.ShapeDtypeStruct((2 * n_last, p_out_last), jnp.float32),
                   jax.ShapeDtypeStruct((2 * n_last, p_stats), jnp.float32)),
        compiler_params=pltpu.CompilerParams(
            vmem_limit_bytes=32 * 1024 * 1024),
        cost_estimate=pl.CostEstimate(flops=int(flops),
                                      transcendentals=int(trans),
                                      bytes_accessed=int(bytes_acc)),
    )(x_slab, stats_slab, *layer_args)
    return slab, stats, n_last, cout_last


# -------------------------------- LSTM ------------------------------------

def _lstm_kernel(x_ref, wih1_ref, whh1_ref, b1_ref, wih2_ref, whh2_ref, b2_ref,
                 h0_ref, c0_ref, o_ref, xp_ref):
    f32 = jnp.float32
    T, Bp, D = x_ref.shape
    H = whh1_ref.shape[0]

    # layer-1 input projection for ALL time steps in one (T*Bp, D)x(D, 4H) dot.
    xp_ref[...] = jnp.dot(x_ref[...].reshape(T * Bp, D), wih1_ref[...],
                          preferred_element_type=f32).reshape(T, Bp, 4 * H)

    # lane mask: tanh for the "g" gate lanes [2H, 3H), sigmoid elsewhere.
    lane = jax.lax.broadcasted_iota(jnp.int32, (Bp, 4 * H), 1)
    is_g = jnp.logical_and(lane >= 2 * H, lane < 3 * H)

    whh1 = whh1_ref[...]
    b1 = b1_ref[...]
    wih2 = wih2_ref[...]
    whh2 = whh2_ref[...]
    b2 = b2_ref[...]

    def act(g):
        # single tanh: sigmoid(z) = 0.5 * tanh(z/2) + 0.5
        t = jnp.tanh(jnp.where(is_g, g, 0.5 * g))
        return jnp.where(is_g, t, 0.5 * t + 0.5)

    def cell_update(a, c):
        i = a[:, 0:H]
        f = a[:, H:2 * H]
        gg = a[:, 2 * H:3 * H]
        o = a[:, 3 * H:4 * H]
        c_new = f * c + i * gg
        h_new = o * jnp.tanh(c_new)
        return h_new, c_new

    def step(t, carry):
        h1, c1, h2, c2 = carry
        g1 = (xp_ref[t] + jnp.dot(h1, whh1, preferred_element_type=f32) + b1)
        h1, c1 = cell_update(act(g1), c1)
        # TODO(synk): a single stacked [wih2; whh2] (2H,4H) matmul would halve
        # MXU issues here; kept as two dots to avoid a 32-lane-offset concat.
        g2 = (jnp.dot(h1, wih2, preferred_element_type=f32)
              + jnp.dot(h2, whh2, preferred_element_type=f32) + b2)
        h2, c2 = cell_update(act(g2), c2)
        return (h1, c1, h2, c2)

    init = (h0_ref[0], c0_ref[0], h0_ref[1], c0_ref[1])
    # TODO(synk): inter-layer dropout(p=0.1) omitted (eval-mode semantics).
    _, _, h2, _ = jax.lax.fori_loop(0, T, step, init, unroll=True)
    o_ref[...] = h2


def lstm_last_pallas(x_tmd, p, h0, c0):
    """x_tmd: (T, B', D) time-major (B' already padded to a multiple of 8).
    Returns top-layer h at the last step: (B', H)."""
    T, Bp, D = x_tmd.shape
    H = p["whh1"].shape[0]
    h0b = jnp.broadcast_to(h0[:, None, :], (2, Bp, H))
    c0b = jnp.broadcast_to(c0[:, None, :], (2, Bp, H))
    return pl.pallas_call(
        _lstm_kernel,
        out_shape=jax.ShapeDtypeStruct((Bp, H), jnp.float32),
        scratch_shapes=[pltpu.VMEM((T, Bp, 4 * H), jnp.float32)],
        compiler_params=pltpu.CompilerParams(
            vmem_limit_bytes=32 * 1024 * 1024),
    )(x_tmd, p["wih1"], p["whh1"], p["b1"].reshape(1, -1),
      p["wih2"], p["whh2"], p["b2"].reshape(1, -1), h0b, c0b)


# ------------------------------- model glue -------------------------------

def encoder_forward(params, xs, xrev, adjs, adjs_rev, edge_weight,
                    lipschitz, mu, std):
    B, S = xs.shape[0], xs.shape[1]
    BS = B * S
    slab, stats, n_f, cout = gnn_bidir_pallas(
        params, xs, xrev, adjs, adjs_rev, edge_weight, lipschitz, mu, std)

    def unslab(block):                        # (n_f, P) -> (B, S, n_f, cout)
        return block[:, :BS * cout].reshape(n_f, B, S, cout).transpose(1, 2, 0, 3)

    hs = jnp.concatenate([unslab(slab[:n_f]), unslab(slab[n_f:])], axis=-1)

    def unstat(block, c0):                    # (n_f, Pst) -> (B, S, n_f, 1)
        return block[:, c0:c0 + BS].reshape(n_f, B, S, 1).transpose(1, 2, 0, 3)

    mean_f = unstat(stats[:n_f], 0) / unstat(stats[:n_f], BS)
    mean_r = unstat(stats[n_f:], 0) / unstat(stats[n_f:], BS)
    mean_f = jnp.where(jnp.isnan(mean_f), 0.0, mean_f)   # mean[mean != mean] = 0
    mean_r = jnp.where(jnp.isnan(mean_r), 0.0, mean_r)
    mean = (mean_f + mean_r) / 2.0

    D = hs.shape[-1]
    x_lstm = hs.transpose(1, 0, 2, 3).reshape(S, B * n_f, D)   # time-major
    Bp = B * n_f
    Bp_pad = ((Bp + 7) // 8) * 8                               # sublane-align
    x_lstm = jnp.pad(x_lstm, ((0, 0), (0, Bp_pad - Bp), (0, 0)))
    h_last = lstm_last_pallas(x_lstm, params["lstm"], params["h_0"],
                              params["c_0"])
    rnn_outputs = h_last[:Bp].reshape(B, n_f, -1)[:, None, :, :]  # (B,1,Nf,H)
    return rnn_outputs, mean


# ----------------------------- parameter init -----------------------------

def init_params(key, input_dim, hidden_dim, enc_input_dim, enc_hidden_dim,
                nlayers):
    dims = [input_dim] + [hidden_dim] * (nlayers - 1) + [enc_input_dim // 2]
    keys = jax.random.split(key, 64)
    it = iter(keys)

    def nrm(shape, scale=0.2):
        return jax.random.normal(next(it), shape, jnp.float32) * scale

    gc = []
    for i in range(nlayers):
        cin, cout = dims[i], dims[i + 1]
        gc.append(dict(
            lin_w=nrm((cin, cout)), lin_b=nrm((cout,)),
            ew_w=nrm((1, 16)), ew_b=nrm((16,)),
            gate_w1=nrm((48, 3)), gate_b1=nrm((3,)),
            gate_w2=nrm((3, 1)), gate_b2=nrm((1,)),
        ))

    H = enc_hidden_dim

    def lstm_bias():
        b_ih = nrm((4 * H,), 0.1)
        b_hh = nrm((4 * H,), 0.1)
        # Encoder.reset_bias(): forget-gate slice [H:2H] of EACH bias -> 1.0
        b_ih = b_ih.at[H:2 * H].set(1.0)
        b_hh = b_hh.at[H:2 * H].set(1.0)
        return b_ih + b_hh

    lstm = dict(
        wih1=nrm((enc_input_dim, 4 * H)), whh1=nrm((H, 4 * H)), b1=lstm_bias(),
        wih2=nrm((H, 4 * H)), whh2=nrm((H, 4 * H)), b2=lstm_bias(),
    )
    return dict(gc=gc, lstm=lstm,
                h_0=jax.random.normal(next(it), (2, H), jnp.float32),
                c_0=jax.random.normal(next(it), (2, H), jnp.float32))


# ----------------------------------- main ----------------------------------

if __name__ == "__main__":
    key = jax.random.PRNGKey(0)
    B, S = 2, 6                          # batch, sequence length
    N0, N1, N2 = 8, 5, 3                 # sampled node counts per GNN hop
    input_dim, hidden_dim = 4, 8
    enc_input_dim, enc_hidden_dim = 16, 32
    nlayers = 2

    k_par, k_x, k_xr, k_ew, k_lip = jax.random.split(key, 5)
    params = init_params(k_par, input_dim, hidden_dim, enc_input_dim,
                         enc_hidden_dim, nlayers)

    xs = jax.random.normal(k_x, (B, S, N0, input_dim), jnp.float32)
    xrev = jax.random.normal(k_xr, (B, S, N0, input_dim), jnp.float32)
    edge_weight = jax.random.uniform(k_ew, (16,), jnp.float32)
    lipschitz = jax.random.normal(k_lip, (N0, 16), jnp.float32)

    # synthetic NeighborSampler-style adjs: (edge_index[src;dst], e_id, size)
    ei0 = jnp.array([[0, 1, 2, 3, 4, 5, 6, 7, 2, 5],
                     [0, 1, 2, 3, 4, 0, 1, 2, 4, 3]], jnp.int32)
    eid0 = jnp.arange(10, dtype=jnp.int32)
    ei1 = jnp.array([[0, 1, 2, 3, 4, 2],
                     [0, 1, 2, 0, 1, 1]], jnp.int32)
    eid1 = jnp.arange(10, 16, dtype=jnp.int32)
    adjs = [(ei0, eid0, (N0, N1)), (ei1, eid1, (N1, N2))]

    ei0r = jnp.array([[7, 6, 5, 4, 3, 2, 1, 0, 3, 6],
                      [0, 1, 2, 3, 4, 1, 0, 2, 3, 4]], jnp.int32)
    eid0r = jnp.array([15, 14, 13, 12, 11, 10, 9, 8, 7, 6], jnp.int32)
    ei1r = jnp.array([[4, 3, 2, 1, 0, 1],
                      [2, 1, 0, 2, 1, 0]], jnp.int32)
    eid1r = jnp.array([5, 4, 3, 2, 1, 0], jnp.int32)
    adjs_rev = [(ei0r, eid0r, (N0, N1)), (ei1r, eid1r, (N1, N2))]

    mu, std = 0.5, 2.0

    fwd = jax.jit(lambda p, a, b, ew, lip: encoder_forward(
        p, a, b, adjs, adjs_rev, ew, lip, mu, std))
    rnn_out, mean = fwd(params, xs, xrev, edge_weight, lipschitz)
    jax.block_until_ready((rnn_out, mean))
    assert rnn_out.shape == (B, 1, N2, enc_hidden_dim)
    assert mean.shape == (B, S, N2, 1)
    print("KERNEL_OK")
</pallas_src>

<mosaic_0001>
module attributes {stable_mosaic.version = 11 : i64} {
  func.func @kernel(%arg0: memref<16x128xf32, #tpu.memory_space<vmem>>, %arg1: memref<10x128xf32, #tpu.memory_space<vmem>>, %arg2: memref<20x16xbf16, #tpu.memory_space<vmem>>, %arg3: memref<10x20xbf16, #tpu.memory_space<vmem>>, %arg4: memref<20x3xf32, #tpu.memory_space<vmem>>, %arg5: memref<3x1xf32, #tpu.memory_space<vmem>>, %arg6: memref<1x1xf32, #tpu.memory_space<vmem>>, %arg7: memref<128x128xf32, #tpu.memory_space<vmem>>, %arg8: memref<128x128xf32, #tpu.memory_space<vmem>>, %arg9: memref<128x128xf32, #tpu.memory_space<vmem>>, %arg10: memref<12x10xbf16, #tpu.memory_space<vmem>>, %arg11: memref<6x12xbf16, #tpu.memory_space<vmem>>, %arg12: memref<12x3xf32, #tpu.memory_space<vmem>>, %arg13: memref<3x1xf32, #tpu.memory_space<vmem>>, %arg14: memref<1x1xf32, #tpu.memory_space<vmem>>, %arg15: memref<128x128xf32, #tpu.memory_space<vmem>>, %arg16: memref<128x128xf32, #tpu.memory_space<vmem>>, %arg17: memref<128x128xf32, #tpu.memory_space<vmem>>, %arg18: memref<6x128xf32, #tpu.memory_space<vmem>>, %arg19: memref<6x128xf32, #tpu.memory_space<vmem>>) attributes {dimension_semantics = [], scalar_prefetch = 0 : i64, scratch_operands = 0 : i64, tpu.core_type = #tpu.core_type<tc>} {
    %c0 = arith.constant 0 : index
    %c0_0 = arith.constant 0 : index
    %0 = vector.load %arg0[%c0, %c0_0] : memref<16x128xf32, #tpu.memory_space<vmem>>, vector<16x128xf32>
    %c0_1 = arith.constant 0 : index
    %c0_2 = arith.constant 0 : index
    %1 = vector.load %arg2[%c0_1, %c0_2] : memref<20x16xbf16, #tpu.memory_space<vmem>>, vector<20x16xbf16>
    %2 = arith.extf %1 : vector<20x16xbf16> to vector<20x16xf32>
    %c0_3 = arith.constant 0 : index
    %c0_4 = arith.constant 0 : index
    %3 = vector.load %arg3[%c0_3, %c0_4] : memref<10x20xbf16, #tpu.memory_space<vmem>>, vector<10x20xbf16>
    %4 = arith.extf %3 : vector<10x20xbf16> to vector<10x20xf32>
    %c0_5 = arith.constant 0 : index
    %c0_6 = arith.constant 0 : index
    %5 = vector.load %arg4[%c0_5, %c0_6] : memref<20x3xf32, #tpu.memory_space<vmem>>, vector<20x3xf32>
    %cst = arith.constant 0.000000e+00 : f32
    %6 = vector.broadcast %cst : f32 to vector<20x3xf32>
    %7 = arith.maximumf %5, %6 : vector<20x3xf32>
    %c0_7 = arith.constant 0 : index
    %c0_8 = arith.constant 0 : index
    %8 = vector.load %arg5[%c0_7, %c0_8] : memref<3x1xf32, #tpu.memory_space<vmem>>, vector<3x1xf32>
    %cst_9 = arith.constant dense<0.000000e+00> : vector<20x1xf32>
    %9 = tpu.matmul %7, %8, %cst_9 {dimension_numbers = #tpu.dot_dimension_numbers<[1], [0], [0], [1], [0, 0, 1, 1], [], []>} : vector<20x3xf32>, vector<3x1xf32>, vector<20x1xf32> -> vector<20x1xf32>
    %c0_10 = arith.constant 0 : index
    %c0_11 = arith.constant 0 : index
    %10 = vector.load %arg6[%c0_10, %c0_11] : memref<1x1xf32, #tpu.memory_space<vmem>>, vector<1x1xf32>
    %11 = vector.broadcast %10 : vector<1x1xf32> to vector<20x1xf32>
    %12 = arith.addf %9, %11 : vector<20x1xf32>
    %13 = arith.negf %12 : vector<20x1xf32>
    %14 = math.exp %13 : vector<20x1xf32>
    %cst_12 = arith.constant 1.000000e+00 : f32
    %15 = vector.broadcast %cst_12 : f32 to vector<20x1xf32>
    %16 = arith.addf %15, %14 : vector<20x1xf32>
    %17 = arith.divf %15, %16 : vector<20x1xf32>
    %cst_13 = arith.constant dense<0.000000e+00> : vector<20x128xf32>
    %18 = tpu.matmul %2, %0, %cst_13 {dimension_numbers = #tpu.dot_dimension_numbers<[1], [0], [0], [1], [0, 0, 1, 1], [], []>} : vector<20x16xf32>, vector<16x128xf32>, vector<20x128xf32> -> vector<20x128xf32>
    %19 = vector.broadcast %17 : vector<20x1xf32> to vector<20x128xf32>
    %20 = arith.mulf %18, %19 : vector<20x128xf32>
    %cst_14 = arith.constant dense<0.000000e+00> : vector<10x128xf32>
    %21 = tpu.matmul %4, %20, %cst_14 {dimension_numbers = #tpu.dot_dimension_numbers<[1], [0], [0], [1], [0, 0, 1, 1], [], []>} : vector<10x20xf32>, vector<20x128xf32>, vector<10x128xf32> -> vector<10x128xf32>
    %c0_15 = arith.constant 0 : index
    %c0_16 = arith.constant 0 : index
    %22 = vector.load %arg7[%c0_15, %c0_16] : memref<128x128xf32, #tpu.memory_space<vmem>>, vector<128x128xf32>
    %cst_17 = arith.constant dense<0.000000e+00> : vector<10x128xf32>
    %23 = tpu.matmul %21, %22, %cst_17 {dimension_numbers = #tpu.dot_dimension_numbers<[1], [0], [0], [1], [0, 0, 1, 1], [], []>} : vector<10x128xf32>, vector<128x128xf32>, vector<10x128xf32> -> vector<10x128xf32>
    %24 = arith.mulf %23, %23 : vector<10x128xf32>
    %c0_18 = arith.constant 0 : index
    %c0_19 = arith.constant 0 : index
    %25 = vector.load %arg8[%c0_18, %c0_19] : memref<128x128xf32, #tpu.memory_space<vmem>>, vector<128x128xf32>
    %cst_20 = arith.constant dense<0.000000e+00> : vector<10x128xf32>
    %26 = tpu.matmul %24, %25, %cst_20 {dimension_numbers = #tpu.dot_dimension_numbers<[1], [0], [0], [1], [0, 0, 1, 1], [], []>} : vector<10x128xf32>, vector<128x128xf32>, vector<10x128xf32> -> vector<10x128xf32>
    %c0_21 = arith.constant 0 : index
    %c0_22 = arith.constant 0 : index
    %27 = vector.load %arg9[%c0_21, %c0_22] : memref<128x128xf32, #tpu.memory_space<vmem>>, vector<128x128xf32>
    %cst_23 = arith.constant dense<0.000000e+00> : vector<10x128xf32>
    %28 = tpu.matmul %26, %27, %cst_23 {dimension_numbers = #tpu.dot_dimension_numbers<[1], [0], [0], [1], [0, 0, 1, 1], [], []>} : vector<10x128xf32>, vector<128x128xf32>, vector<10x128xf32> -> vector<10x128xf32>
    %cst_24 = arith.constant 1.000000e-24 : f32
    %29 = vector.broadcast %cst_24 : f32 to vector<10x128xf32>
    %30 = arith.maximumf %28, %29 : vector<10x128xf32>
    %31 = math.rsqrt %30 : vector<10x128xf32>
    %32 = arith.mulf %23, %31 : vector<10x128xf32>
    %cst_25 = arith.constant 0.000000e+00 : f32
    %33 = vector.broadcast %cst_25 : f32 to vector<10x128xf32>
    %34 = arith.maximumf %32, %33 : vector<10x128xf32>
    %35 = tpu.iota {dimensions = array<i32: 1>} : vector<10x128xi32>
    %c96_i32 = arith.constant 96 : i32
    %36 = vector.broadcast %c96_i32 : i32 to vector<10x128xi32>
    %37 = arith.cmpi eq, %35, %36 : vector<10x128xi32>
    %cst_26 = arith.constant 1.000000e+00 : f32
    %38 = vector.broadcast %cst_26 : f32 to vector<10x128xf32>
    %39 = arith.select %37, %38, %34 : vector<10x128xi1>, vector<10x128xf32>
    %c0_27 = arith.constant 0 : index
    %c0_28 = arith.constant 0 : index
    %40 = vector.load %arg10[%c0_27, %c0_28] : memref<12x10xbf16, #tpu.memory_space<vmem>>, vector<12x10xbf16>
    %41 = arith.extf %40 : vector<12x10xbf16> to vector<12x10xf32>
    %c0_29 = arith.constant 0 : index
    %c0_30 = arith.constant 0 : index
    %42 = vector.load %arg11[%c0_29, %c0_30] : memref<6x12xbf16, #tpu.memory_space<vmem>>, vector<6x12xbf16>
    %43 = arith.extf %42 : vector<6x12xbf16> to vector<6x12xf32>
    %c0_31 = arith.constant 0 : index
    %c0_32 = arith.constant 0 : index
    %44 = vector.load %arg12[%c0_31, %c0_32] : memref<12x3xf32, #tpu.memory_space<vmem>>, vector<12x3xf32>
    %cst_33 = arith.constant 0.000000e+00 : f32
    %45 = vector.broadcast %cst_33 : f32 to vector<12x3xf32>
    %46 = arith.maximumf %44, %45 : vector<12x3xf32>
    %c0_34 = arith.constant 0 : index
    %c0_35 = arith.constant 0 : index
    %47 = vector.load %arg13[%c0_34, %c0_35] : memref<3x1xf32, #tpu.memory_space<vmem>>, vector<3x1xf32>
    %cst_36 = arith.constant dense<0.000000e+00> : vector<12x1xf32>
    %48 = tpu.matmul %46, %47, %cst_36 {dimension_numbers = #tpu.dot_dimension_numbers<[1], [0], [0], [1], [0, 0, 1, 1], [], []>} : vector<12x3xf32>, vector<3x1xf32>, vector<12x1xf32> -> vector<12x1xf32>
    %c0_37 = arith.constant 0 : index
    %c0_38 = arith.constant 0 : index
    %49 = vector.load %arg14[%c0_37, %c0_38] : memref<1x1xf32, #tpu.memory_space<vmem>>, vector<1x1xf32>
    %50 = vector.broadcast %49 : vector<1x1xf32> to vector<12x1xf32>
    %51 = arith.addf %48, %50 : vector<12x1xf32>
    %52 = arith.negf %51 : vector<12x1xf32>
    %53 = math.exp %52 : vector<12x1xf32>
    %cst_39 = arith.constant 1.000000e+00 : f32
    %54 = vector.broadcast %cst_39 : f32 to vector<12x1xf32>
    %55 = arith.addf %54, %53 : vector<12x1xf32>
    %56 = arith.divf %54, %55 : vector<12x1xf32>
    %cst_40 = arith.constant dense<0.000000e+00> : vector<12x128xf32>
    %57 = tpu.matmul %41, %39, %cst_40 {dimension_numbers = #tpu.dot_dimension_numbers<[1], [0], [0], [1], [0, 0, 1, 1], [], []>} : vector<12x10xf32>, vector<10x128xf32>, vector<12x128xf32> -> vector<12x128xf32>
    %58 = vector.broadcast %56 : vector<12x1xf32> to vector<12x128xf32>
    %59 = arith.mulf %57, %58 : vector<12x128xf32>
    %cst_41 = arith.constant dense<0.000000e+00> : vector<6x128xf32>
    %60 = tpu.matmul %43, %59, %cst_41 {dimension_numbers = #tpu.dot_dimension_numbers<[1], [0], [0], [1], [0, 0, 1, 1], [], []>} : vector<6x12xf32>, vector<12x128xf32>, vector<6x128xf32> -> vector<6x128xf32>
    %c0_42 = arith.constant 0 : index
    %c0_43 = arith.constant 0 : index
    %61 = vector.load %arg15[%c0_42, %c0_43] : memref<128x128xf32, #tpu.memory_space<vmem>>, vector<128x128xf32>
    %cst_44 = arith.constant dense<0.000000e+00> : vector<6x128xf32>
    %62 = tpu.matmul %60, %61, %cst_44 {dimension_numbers = #tpu.dot_dimension_numbers<[1], [0], [0], [1], [0, 0, 1, 1], [], []>} : vector<6x128xf32>, vector<128x128xf32>, vector<6x128xf32> -> vector<6x128xf32>
    %63 = arith.mulf %62, %62 : vector<6x128xf32>
    %c0_45 = arith.constant 0 : index
    %c0_46 = arith.constant 0 : index
    %64 = vector.load %arg16[%c0_45, %c0_46] : memref<128x128xf32, #tpu.memory_space<vmem>>, vector<128x128xf32>
    %cst_47 = arith.constant dense<0.000000e+00> : vector<6x128xf32>
    %65 = tpu.matmul %63, %64, %cst_47 {dimension_numbers = #tpu.dot_dimension_numbers<[1], [0], [0], [1], [0, 0, 1, 1], [], []>} : vector<6x128xf32>, vector<128x128xf32>, vector<6x128xf32> -> vector<6x128xf32>
    %c0_48 = arith.constant 0 : index
    %c0_49 = arith.constant 0 : index
    %66 = vector.load %arg17[%c0_48, %c0_49] : memref<128x128xf32, #tpu.memory_space<vmem>>, vector<128x128xf32>
    %cst_50 = arith.constant dense<0.000000e+00> : vector<6x128xf32>
    %67 = tpu.matmul %65, %66, %cst_50 {dimension_numbers = #tpu.dot_dimension_numbers<[1], [0], [0], [1], [0, 0, 1, 1], [], []>} : vector<6x128xf32>, vector<128x128xf32>, vector<6x128xf32> -> vector<6x128xf32>
    %cst_51 = arith.constant 1.000000e-24 : f32
    %68 = vector.broadcast %cst_51 : f32 to vector<6x128xf32>
    %69 = arith.maximumf %67, %68 : vector<6x128xf32>
    %70 = math.rsqrt %69 : vector<6x128xf32>
    %71 = arith.mulf %62, %70 : vector<6x128xf32>
    %cst_52 = arith.constant 0.000000e+00 : f32
    %72 = vector.broadcast %cst_52 : f32 to vector<6x128xf32>
    %73 = arith.maximumf %71, %72 : vector<6x128xf32>
    %c0_53 = arith.constant 0 : index
    %c0_54 = arith.constant 0 : index
    %74 = vector.load %arg18[%c0_53, %c0_54] : memref<6x128xf32, #tpu.memory_space<vmem>>, vector<6x128xf32>
    tpu.vector_store %arg18[%c0_53, %c0_54], %73 {strides = array<i32>} : memref<6x128xf32, #tpu.memory_space<vmem>>, vector<6x128xf32>,
    %c0_55 = arith.constant 0 : index
    %c0_56 = arith.constant 0 : index
    %75 = vector.load %arg1[%c0_55, %c0_56] : memref<10x128xf32, #tpu.memory_space<vmem>>, vector<10x128xf32>
    %cst_57 = arith.constant dense<0.000000e+00> : vector<12x128xf32>
    %76 = tpu.matmul %41, %75, %cst_57 {dimension_numbers = #tpu.dot_dimension_numbers<[1], [0], [0], [1], [0, 0, 1, 1], [], []>} : vector<12x10xf32>, vector<10x128xf32>, vector<12x128xf32> -> vector<12x128xf32>
    %cst_58 = arith.constant dense<0.000000e+00> : vector<6x128xf32>
    %77 = tpu.matmul %43, %76, %cst_58 {dimension_numbers = #tpu.dot_dimension_numbers<[1], [0], [0], [1], [0, 0, 1, 1], [], []>} : vector<6x12xf32>, vector<12x128xf32>, vector<6x128xf32> -> vector<6x128xf32>
    %c0_59 = arith.constant 0 : index
    %c0_60 = arith.constant 0 : index
    %78 = vector.load %arg19[%c0_59, %c0_60] : memref<6x128xf32, #tpu.memory_space<vmem>>, vector<6x128xf32>
    tpu.vector_store %arg19[%c0_59, %c0_60], %77 {strides = array<i32>} : memref<6x128xf32, #tpu.memory_space<vmem>>, vector<6x128xf32>,
    return
  }
}

module attributes {stable_mosaic.version = 11 : i64} {
  func.func @_lstm_kernel(%arg0: memref<6x8x16xf32, #tpu.memory_space<vmem>>, %arg1: memref<16x128xf32, #tpu.memory_space<vmem>>, %arg2: memref<32x128xf32, #tpu.memory_space<vmem>>, %arg3: memref<1x128xf32, #tpu.memory_space<vmem>>, %arg4: memref<32x128xf32, #tpu.memory_space<vmem>>, %arg5: memref<32x128xf32, #tpu.memory_space<vmem>>, %arg6: memref<1x128xf32, #tpu.memory_space<vmem>>, %arg7: memref<2x8x32xf32, #tpu.memory_space<vmem>>, %arg8: memref<2x8x32xf32, #tpu.memory_space<vmem>>, %arg9: memref<8x32xf32, #tpu.memory_space<vmem>>, %arg10: memref<6x8x128xf32, #tpu.memory_space<vmem>>) attributes {dimension_semantics = [], scalar_prefetch = 0 : i64, scratch_operands = 1 : i64, tpu.core_type = #tpu.core_type<tc>} {
    %c0 = arith.constant 0 : index
    %c0_0 = arith.constant 0 : index
    %c0_1 = arith.constant 0 : index
    %0 = vector.load %arg0[%c0, %c0_0, %c0_1] : memref<6x8x16xf32, #tpu.memory_space<vmem>>, vector<6x8x16xf32>
    %1 = vector.shape_cast %0 : vector<6x8x16xf32> to vector<48x16xf32>
    %c0_2 = arith.constant 0 : index
    %c0_3 = arith.constant 0 : index
    %2 = vector.load %arg1[%c0_2, %c0_3] : memref<16x128xf32, #tpu.memory_space<vmem>>, vector<16x128xf32>
    %cst = arith.constant dense<0.000000e+00> : vector<48x128xf32>
    %3 = tpu.matmul %1, %2, %cst {dimension_numbers = #tpu.dot_dimension_numbers<[1], [0], [0], [1], [0, 0, 1, 1], [], []>} : vector<48x16xf32>, vector<16x128xf32>, vector<48x128xf32> -> vector<48x128xf32>
    %4 = vector.shape_cast %3 : vector<48x128xf32> to vector<6x8x128xf32>
    %c0_4 = arith.constant 0 : index
    %c0_5 = arith.constant 0 : index
    %c0_6 = arith.constant 0 : index
    %5 = vector.load %arg10[%c0_4, %c0_5, %c0_6] : memref<6x8x128xf32, #tpu.memory_space<vmem>>, vector<6x8x128xf32>
    tpu.vector_store %arg10[%c0_4, %c0_5, %c0_6], %4 {strides = array<i32>} : memref<6x8x128xf32, #tpu.memory_space<vmem>>, vector<6x8x128xf32>,
    %6 = tpu.iota {dimensions = array<i32: 1>} : vector<8x128xi32>
    %c64_i32 = arith.constant 64 : i32
    %7 = vector.broadcast %c64_i32 : i32 to vector<8x128xi32>
    %8 = arith.cmpi sge, %6, %7 : vector<8x128xi32>
    %c96_i32 = arith.constant 96 : i32
    %9 = vector.broadcast %c96_i32 : i32 to vector<8x128xi32>
    %10 = arith.cmpi slt, %6, %9 : vector<8x128xi32>
    %11 = arith.andi %8, %10 : vector<8x128xi1>
    %c0_7 = arith.constant 0 : index
    %c0_8 = arith.constant 0 : index
    %12 = vector.load %arg2[%c0_7, %c0_8] : memref<32x128xf32, #tpu.memory_space<vmem>>, vector<32x128xf32>
    %c0_9 = arith.constant 0 : index
    %c0_10 = arith.constant 0 : index
    %13 = vector.load %arg3[%c0_9, %c0_10] : memref<1x128xf32, #tpu.memory_space<vmem>>, vector<1x128xf32>
    %c0_11 = arith.constant 0 : index
    %c0_12 = arith.constant 0 : index
    %14 = vector.load %arg4[%c0_11, %c0_12] : memref<32x128xf32, #tpu.memory_space<vmem>>, vector<32x128xf32>
    %c0_13 = arith.constant 0 : index
    %c0_14 = arith.constant 0 : index
    %15 = vector.load %arg5[%c0_13, %c0_14] : memref<32x128xf32, #tpu.memory_space<vmem>>, vector<32x128xf32>
    %c0_15 = arith.constant 0 : index
    %c0_16 = arith.constant 0 : index
    %16 = vector.load %arg6[%c0_15, %c0_16] : memref<1x128xf32, #tpu.memory_space<vmem>>, vector<1x128xf32>
    %c0_17 = arith.constant 0 : index
    %c0_18 = arith.constant 0 : index
    %c0_19 = arith.constant 0 : index
    %17 = vector.load %arg7[%c0_17, %c0_18, %c0_19] : memref<2x8x32xf32, #tpu.memory_space<vmem>>, vector<1x8x32xf32>
    %18 = vector.shape_cast %17 : vector<1x8x32xf32> to vector<8x32xf32>
    %c0_20 = arith.constant 0 : index
    %c0_21 = arith.constant 0 : index
    %c0_22 = arith.constant 0 : index
    %19 = vector.load %arg8[%c0_20, %c0_21, %c0_22] : memref<2x8x32xf32, #tpu.memory_space<vmem>>, vector<1x8x32xf32>
    %20 = vector.shape_cast %19 : vector<1x8x32xf32> to vector<8x32xf32>
    %c1 = arith.constant 1 : index
    %c0_23 = arith.constant 0 : index
    %c0_24 = arith.constant 0 : index
    %21 = vector.load %arg7[%c1, %c0_23, %c0_24] : memref<2x8x32xf32, #tpu.memory_space<vmem>>, vector<1x8x32xf32>
    %22 = vector.shape_cast %21 : vector<1x8x32xf32> to vector<8x32xf32>
    %c1_25 = arith.constant 1 : index
    %c0_26 = arith.constant 0 : index
    %c0_27 = arith.constant 0 : index
    %23 = vector.load %arg8[%c1_25, %c0_26, %c0_27] : memref<2x8x32xf32, #tpu.memory_space<vmem>>, vector<1x8x32xf32>
    %24 = vector.shape_cast %23 : vector<1x8x32xf32> to vector<8x32xf32>
    %c0_i32 = arith.constant 0 : i32
    %25 = arith.index_cast %c0_i32 : i32 to index
    %c0_28 = arith.constant 0 : index
    %c0_29 = arith.constant 0 : index
    %26 = vector.load %arg10[%25, %c0_28, %c0_29] : memref<6x8x128xf32, #tpu.memory_space<vmem>>, vector<1x8x128xf32>
    %27 = vector.shape_cast %26 : vector<1x8x128xf32> to vector<8x128xf32>
    %cst_30 = arith.constant dense<0.000000e+00> : vector<8x128xf32>
    %28 = tpu.matmul %18, %12, %cst_30 {dimension_numbers = #tpu.dot_dimension_numbers<[1], [0], [0], [1], [0, 0, 1, 1], [], []>} : vector<8x32xf32>, vector<32x128xf32>, vector<8x128xf32> -> vector<8x128xf32>
    %29 = arith.addf %27, %28 : vector<8x128xf32>
    %30 = vector.broadcast %13 : vector<1x128xf32> to vector<8x128xf32>
    %31 = arith.addf %29, %30 : vector<8x128xf32>
    %cst_31 = arith.constant 5.000000e-01 : f32
    %32 = vector.broadcast %cst_31 : f32 to vector<8x128xf32>
    %33 = arith.mulf %32, %31 : vector<8x128xf32>
    %34 = arith.select %11, %31, %33 : vector<8x128xi1>, vector<8x128xf32>
    %35 = math.tanh %34 : vector<8x128xf32>
    %cst_32 = arith.constant 5.000000e-01 : f32
    %36 = vector.broadcast %cst_32 : f32 to vector<8x128xf32>
    %37 = arith.mulf %36, %35 : vector<8x128xf32>
    %cst_33 = arith.constant 5.000000e-01 : f32
    %38 = vector.broadcast %cst_33 : f32 to vector<8x128xf32>
    %39 = arith.addf %37, %38 : vector<8x128xf32>
    %40 = arith.select %11, %35, %39 : vector<8x128xi1>, vector<8x128xf32>
    %41 = vector.extract_strided_slice %40 {offsets = [0, 0], sizes = [8, 32], strides = [1, 1]} : vector<8x128xf32> to vector<8x32xf32>
    %42 = vector.extract_strided_slice %40 {offsets = [0, 32], sizes = [8, 32], strides = [1, 1]} : vector<8x128xf32> to vector<8x32xf32>
    %43 = vector.extract_strided_slice %40 {offsets = [0, 64], sizes = [8, 32], strides = [1, 1]} : vector<8x128xf32> to vector<8x32xf32>
    %44 = vector.extract_strided_slice %40 {offsets = [0, 96], sizes = [8, 32], strides = [1, 1]} : vector<8x128xf32> to vector<8x32xf32>
    %45 = arith.mulf %42, %20 : vector<8x32xf32>
    %46 = arith.mulf %41, %43 : vector<8x32xf32>
    %47 = arith.addf %45, %46 : vector<8x32xf32>
    %48 = math.tanh %47 : vector<8x32xf32>
    %49 = arith.mulf %44, %48 : vector<8x32xf32>
    %cst_34 = arith.constant dense<0.000000e+00> : vector<8x128xf32>
    %50 = tpu.matmul %49, %14, %cst_34 {dimension_numbers = #tpu.dot_dimension_numbers<[1], [0], [0], [1], [0, 0, 1, 1], [], []>} : vector<8x32xf32>, vector<32x128xf32>, vector<8x128xf32> -> vector<8x128xf32>
    %cst_35 = arith.constant dense<0.000000e+00> : vector<8x128xf32>
    %51 = tpu.matmul %22, %15, %cst_35 {dimension_numbers = #tpu.dot_dimension_numbers<[1], [0], [0], [1], [0, 0, 1, 1], [], []>} : vector<8x32xf32>, vector<32x128xf32>, vector<8x128xf32> -> vector<8x128xf32>
    %52 = arith.addf %50, %51 : vector<8x128xf32>
    %53 = vector.broadcast %16 : vector<1x128xf32> to vector<8x128xf32>
    %54 = arith.addf %52, %53 : vector<8x128xf32>
    %cst_36 = arith.constant 5.000000e-01 : f32
    %55 = vector.broadcast %cst_36 : f32 to vector<8x128xf32>
    %56 = arith.mulf %55, %54 : vector<8x128xf32>
    %57 = arith.select %11, %54, %56 : vector<8x128xi1>, vector<8x128xf32>
    %58 = math.tanh %57 : vector<8x128xf32>
    %cst_37 = arith.constant 5.000000e-01 : f32
    %59 = vector.broadcast %cst_37 : f32 to vector<8x128xf32>
    %60 = arith.mulf %59, %58 : vector<8x128xf32>
    %cst_38 = arith.constant 5.000000e-01 : f32
    %61 = vector.broadcast %cst_38 : f32 to vector<8x128xf32>
    %62 = arith.addf %60, %61 : vector<8x128xf32>
    %63 = arith.select %11, %58, %62 : vector<8x128xi1>, vector<8x128xf32>
    %64 = vector.extract_strided_slice %63 {offsets = [0, 0], sizes = [8, 32], strides = [1, 1]} : vector<8x128xf32> to vector<8x32xf32>
    %65 = vector.extract_strided_slice %63 {offsets = [0, 32], sizes = [8, 32], strides = [1, 1]} : vector<8x128xf32> to vector<8x32xf32>
    %66 = vector.extract_strided_slice %63 {offsets = [0, 64], sizes = [8, 32], strides = [1, 1]} : vector<8x128xf32> to vector<8x32xf32>
    %67 = vector.extract_strided_slice %63 {offsets = [0, 96], sizes = [8, 32], strides = [1, 1]} : vector<8x128xf32> to vector<8x32xf32>
    %68 = arith.mulf %65, %24 : vector<8x32xf32>
    %69 = arith.mulf %64, %66 : vector<8x32xf32>
    %70 = arith.addf %68, %69 : vector<8x32xf32>
    %71 = math.tanh %70 : vector<8x32xf32>
    %72 = arith.mulf %67, %71 : vector<8x32xf32>
    %c1_i32 = arith.constant 1 : i32
    %73 = arith.index_cast %c1_i32 : i32 to index
    %c0_39 = arith.constant 0 : index
    %c0_40 = arith.constant 0 : index
    %74 = vector.load %arg10[%73, %c0_39, %c0_40] : memref<6x8x128xf32, #tpu.memory_space<vmem>>, vector<1x8x128xf32>
    %75 = vector.shape_cast %74 : vector<1x8x128xf32> to vector<8x128xf32>
    %cst_41 = arith.constant dense<0.000000e+00> : vector<8x128xf32>
    %76 = tpu.matmul %49, %12, %cst_41 {dimension_numbers = #tpu.dot_dimension_numbers<[1], [0], [0], [1], [0, 0, 1, 1], [], []>} : vector<8x32xf32>, vector<32x128xf32>, vector<8x128xf32> -> vector<8x128xf32>
    %77 = arith.addf %75, %76 : vector<8x128xf32>
    %78 = vector.broadcast %13 : vector<1x128xf32> to vector<8x128xf32>
    %79 = arith.addf %77, %78 : vector<8x128xf32>
    %cst_42 = arith.constant 5.000000e-01 : f32
    %80 = vector.broadcast %cst_42 : f32 to vector<8x128xf32>
    %81 = arith.mulf %80, %79 : vector<8x128xf32>
    %82 = arith.select %11, %79, %81 : vector<8x128xi1>, vector<8x128xf32>
    %83 = math.tanh %82 : vector<8x128xf32>
    %cst_43 = arith.constant 5.000000e-01 : f32
    %84 = vector.broadcast %cst_43 : f32 to vector<8x128xf32>
    %85 = arith.mulf %84, %83 : vector<8x128xf32>
    %cst_44 = arith.constant 5.000000e-01 : f32
    %86 = vector.broadcast %cst_44 : f32 to vector<8x128xf32>
    %87 = arith.addf %85, %86 : vector<8x128xf32>
    %88 = arith.select %11, %83, %87 : vector<8x128xi1>, vector<8x128xf32>
    %89 = vector.extract_strided_slice %88 {offsets = [0, 0], sizes = [8, 32], strides = [1, 1]} : vector<8x128xf32> to vector<8x32xf32>
    %90 = vector.extract_strided_slice %88 {offsets = [0, 32], sizes = [8, 32], strides = [1, 1]} : vector<8x128xf32> to vector<8x32xf32>
    %91 = vector.extract_strided_slice %88 {offsets = [0, 64], sizes = [8, 32], strides = [1, 1]} : vector<8x128xf32> to vector<8x32xf32>
    %92 = vector.extract_strided_slice %88 {offsets = [0, 96], sizes = [8, 32], strides = [1, 1]} : vector<8x128xf32> to vector<8x32xf32>
    %93 = arith.mulf %90, %47 : vector<8x32xf32>
    %94 = arith.mulf %89, %91 : vector<8x32xf32>
    %95 = arith.addf %93, %94 : vector<8x32xf32>
    %96 = math.tanh %95 : vector<8x32xf32>
    %97 = arith.mulf %92, %96 : vector<8x32xf32>
    %cst_45 = arith.constant dense<0.000000e+00> : vector<8x128xf32>
    %98 = tpu.matmul %97, %14, %cst_45 {dimension_numbers = #tpu.dot_dimension_numbers<[1], [0], [0], [1], [0, 0, 1, 1], [], []>} : vector<8x32xf32>, vector<32x128xf32>, vector<8x128xf32> -> vector<8x128xf32>
    %cst_46 = arith.constant dense<0.000000e+00> : vector<8x128xf32>
    %99 = tpu.matmul %72, %15, %cst_46 {dimension_numbers = #tpu.dot_dimension_numbers<[1], [0], [0], [1], [0, 0, 1, 1], [], []>} : vector<8x32xf32>, vector<32x128xf32>, vector<8x128xf32> -> vector<8x128xf32>
    %100 = arith.addf %98, %99 : vector<8x128xf32>
    %101 = vector.broadcast %16 : vector<1x128xf32> to vector<8x128xf32>
    %102 = arith.addf %100, %101 : vector<8x128xf32>
    %cst_47 = arith.constant 5.000000e-01 : f32
    %103 = vector.broadcast %cst_47 : f32 to vector<8x128xf32>
    %104 = arith.mulf %103, %102 : vector<8x128xf32>
    %105 = arith.select %11, %102, %104 : vector<8x128xi1>, vector<8x128xf32>
    %106 = math.tanh %105 : vector<8x128xf32>
    %cst_48 = arith.constant 5.000000e-01 : f32
    %107 = vector.broadcast %cst_48 : f32 to vector<8x128xf32>
    %108 = arith.mulf %107, %106 : vector<8x128xf32>
    %cst_49 = arith.constant 5.000000e-01 : f32
    %109 = vector.broadcast %cst_49 : f32 to vector<8x128xf32>
    %110 = arith.addf %108, %109 : vector<8x128xf32>
    %111 = arith.select %11, %106, %110 : vector<8x128xi1>, vector<8x128xf32>
    %112 = vector.extract_strided_slice %111 {offsets = [0, 0], sizes = [8, 32], strides = [1, 1]} : vector<8x128xf32> to vector<8x32xf32>
    %113 = vector.extract_strided_slice %111 {offsets = [0, 32], sizes = [8, 32], strides = [1, 1]} : vector<8x128xf32> to vector<8x32xf32>
    %114 = vector.extract_strided_slice %111 {offsets = [0, 64], sizes = [8, 32], strides = [1, 1]} : vector<8x128xf32> to vector<8x32xf32>
    %115 = vector.extract_strided_slice %111 {offsets = [0, 96], sizes = [8, 32], strides = [1, 1]} : vector<8x128xf32> to vector<8x32xf32>
    %116 = arith.mulf %113, %70 : vector<8x32xf32>
    %117 = arith.mulf %112, %114 : vector<8x32xf32>
    %118 = arith.addf %116, %117 : vector<8x32xf32>
    %119 = math.tanh %118 : vector<8x32xf32>
    %120 = arith.mulf %115, %119 : vector<8x32xf32>
    %c2_i32 = arith.constant 2 : i32
    %121 = arith.index_cast %c2_i32 : i32 to index
    %c0_50 = arith.constant 0 : index
    %c0_51 = arith.constant 0 : index
    %122 = vector.load %arg10[%121, %c0_50, %c0_51] : memref<6x8x128xf32, #tpu.memory_space<vmem>>, vector<1x8x128xf32>
    %123 = vector.shape_cast %122 : vector<1x8x128xf32> to vector<8x128xf32>
    %cst_52 = arith.constant dense<0.000000e+00> : vector<8x128xf32>
    %124 = tpu.matmul %97, %12, %cst_52 {dimension_numbers = #tpu.dot_dimension_numbers<[1], [0], [0], [1], [0, 0, 1, 1], [], []>} : vector<8x32xf32>, vector<32x128xf32>, vector<8x128xf32> -> vector<8x128xf32>
    %125 = arith.addf %123, %124 : vector<8x128xf32>
    %126 = vector.broadcast %13 : vector<1x128xf32> to vector<8x128xf32>
    %127 = arith.addf %125, %126 : vector<8x128xf32>
    %cst_53 = arith.constant 5.000000e-01 : f32
    %128 = vector.broadcast %cst_53 : f32 to vector<8x128xf32>
    %129 = arith.mulf %128, %127 : vector<8x128xf32>
    %130 = arith.select %11, %127, %129 : vector<8x128xi1>, vector<8x128xf32>
    %131 = math.tanh %130 : vector<8x128xf32>
    %cst_54 = arith.constant 5.000000e-01 : f32
    %132 = vector.broadcast %cst_54 : f32 to vector<8x128xf32>
    %133 = arith.mulf %132, %131 : vector<8x128xf32>
    %cst_55 = arith.constant 5.000000e-01 : f32
    %134 = vector.broadcast %cst_55 : f32 to vector<8x128xf32>
    %135 = arith.addf %133, %134 : vector<8x128xf32>
    %136 = arith.select %11, %131, %135 : vector<8x128xi1>, vector<8x128xf32>
    %137 = vector.extract_strided_slice %136 {offsets = [0, 0], sizes = [8, 32], strides = [1, 1]} : vector<8x128xf32> to vector<8x32xf32>
    %138 = vector.extract_strided_slice %136 {offsets = [0, 32], sizes = [8, 32], strides = [1, 1]} : vector<8x128xf32> to vector<8x32xf32>
    %139 = vector.extract_strided_slice %136 {offsets = [0, 64], sizes = [8, 32], strides = [1, 1]} : vector<8x128xf32> to vector<8x32xf32>
    %140 = vector.extract_strided_slice %136 {offsets = [0, 96], sizes = [8, 32], strides = [1, 1]} : vector<8x128xf32> to vector<8x32xf32>
    %141 = arith.mulf %138, %95 : vector<8x32xf32>
    %142 = arith.mulf %137, %139 : vector<8x32xf32>
    %143 = arith.addf %141, %142 : vector<8x32xf32>
    %144 = math.tanh %143 : vector<8x32xf32>
    %145 = arith.mulf %140, %144 : vector<8x32xf32>
    %cst_56 = arith.constant dense<0.000000e+00> : vector<8x128xf32>
    %146 = tpu.matmul %145, %14, %cst_56 {dimension_numbers = #tpu.dot_dimension_numbers<[1], [0], [0], [1], [0, 0, 1, 1], [], []>} : vector<8x32xf32>, vector<32x128xf32>, vector<8x128xf32> -> vector<8x128xf32>
    %cst_57 = arith.constant dense<0.000000e+00> : vector<8x128xf32>
    %147 = tpu.matmul %120, %15, %cst_57 {dimension_numbers = #tpu.dot_dimension_numbers<[1], [0], [0], [1], [0, 0, 1, 1], [], []>} : vector<8x32xf32>, vector<32x128xf32>, vector<8x128xf32> -> vector<8x128xf32>
    %148 = arith.addf %146, %147 : vector<8x128xf32>
    %149 = vector.broadcast %16 : vector<1x128xf32> to vector<8x128xf32>
    %150 = arith.addf %148, %149 : vector<8x128xf32>
    %cst_58 = arith.constant 5.000000e-01 : f32
    %151 = vector.broadcast %cst_58 : f32 to vector<8x128xf32>
    %152 = arith.mulf %151, %150 : vector<8x128xf32>
    %153 = arith.select %11, %150, %152 : vector<8x128xi1>, vector<8x128xf32>
    %154 = math.tanh %153 : vector<8x128xf32>
    %cst_59 = arith.constant 5.000000e-01 : f32
    %155 = vector.broadcast %cst_59 : f32 to vector<8x128xf32>
    %156 = arith.mulf %155, %154 : vector<8x128xf32>
    %cst_60 = arith.constant 5.000000e-01 : f32
    %157 = vector.broadcast %cst_60 : f32 to vector<8x128xf32>
    %158 = arith.addf %156, %157 : vector<8x128xf32>
    %159 = arith.select %11, %154, %158 : vector<8x128xi1>, vector<8x128xf32>
    %160 = vector.extract_strided_slice %159 {offsets = [0, 0], sizes = [8, 32], strides = [1, 1]} : vector<8x128xf32> to vector<8x32xf32>
    %161 = vector.extract_strided_slice %159 {offsets = [0, 32], sizes = [8, 32], strides = [1, 1]} : vector<8x128xf32> to vector<8x32xf32>
    %162 = vector.extract_strided_slice %159 {offsets = [0, 64], sizes = [8, 32], strides = [1, 1]} : vector<8x128xf32> to vector<8x32xf32>
    %163 = vector.extract_strided_slice %159 {offsets = [0, 96], sizes = [8, 32], strides = [1, 1]} : vector<8x128xf32> to vector<8x32xf32>
    %164 = arith.mulf %161, %118 : vector<8x32xf32>
    %165 = arith.mulf %160, %162 : vector<8x32xf32>
    %166 = arith.addf %164, %165 : vector<8x32xf32>
    %167 = math.tanh %166 : vector<8x32xf32>
    %168 = arith.mulf %163, %167 : vector<8x32xf32>
    %c3_i32 = arith.constant 3 : i32
    %169 = arith.index_cast %c3_i32 : i32 to index
    %c0_61 = arith.constant 0 : index
    %c0_62 = arith.constant 0 : index
    %170 = vector.load %arg10[%169, %c0_61, %c0_62] : memref<6x8x128xf32, #tpu.memory_space<vmem>>, vector<1x8x128xf32>
    %171 = vector.shape_cast %170 : vector<1x8x128xf32> to vector<8x128xf32>
    %cst_63 = arith.constant dense<0.000000e+00> : vector<8x128xf32>
    %172 = tpu.matmul %145, %12, %cst_63 {dimension_numbers = #tpu.dot_dimension_numbers<[1], [0], [0], [1], [0, 0, 1, 1], [], []>} : vector<8x32xf32>, vector<32x128xf32>, vector<8x128xf32> -> vector<8x128xf32>
    %173 = arith.addf %171, %172 : vector<8x128xf32>
    %174 = vector.broadcast %13 : vector<1x128xf32> to vector<8x128xf32>
    %175 = arith.addf %173, %174 : vector<8x128xf32>
    %cst_64 = arith.constant 5.000000e-01 : f32
    %176 = vector.broadcast %cst_64 : f32 to vector<8x128xf32>
    %177 = arith.mulf %176, %175 : vector<8x128xf32>
    %178 = arith.select %11, %175, %177 : vector<8x128xi1>, vector<8x128xf32>
    %179 = math.tanh %178 : vector<8x128xf32>
    %cst_65 = arith.constant 5.000000e-01 : f32
    %180 = vector.broadcast %cst_65 : f32 to vector<8x128xf32>
    %181 = arith.mulf %180, %179 : vector<8x128xf32>
    %cst_66 = arith.constant 5.000000e-01 : f32
    %182 = vector.broadcast %cst_66 : f32 to vector<8x128xf32>
    %183 = arith.addf %181, %182 : vector<8x128xf32>
    %184 = arith.select %11, %179, %183 : vector<8x128xi1>, vector<8x128xf32>
    %185 = vector.extract_strided_slice %184 {offsets = [0, 0], sizes = [8, 32], strides = [1, 1]} : vector<8x128xf32> to vector<8x32xf32>
    %186 = vector.extract_strided_slice %184 {offsets = [0, 32], sizes = [8, 32], strides = [1, 1]} : vector<8x128xf32> to vector<8x32xf32>
    %187 = vector.extract_strided_slice %184 {offsets = [0, 64], sizes = [8, 32], strides = [1, 1]} : vector<8x128xf32> to vector<8x32xf32>
    %188 = vector.extract_strided_slice %184 {offsets = [0, 96], sizes = [8, 32], strides = [1, 1]} : vector<8x128xf32> to vector<8x32xf32>
    %189 = arith.mulf %186, %143 : vector<8x32xf32>
    %190 = arith.mulf %185, %187 : vector<8x32xf32>
    %191 = arith.addf %189, %190 : vector<8x32xf32>
    %192 = math.tanh %191 : vector<8x32xf32>
    %193 = arith.mulf %188, %192 : vector<8x32xf32>
    %cst_67 = arith.constant dense<0.000000e+00> : vector<8x128xf32>
    %194 = tpu.matmul %193, %14, %cst_67 {dimension_numbers = #tpu.dot_dimension_numbers<[1], [0], [0], [1], [0, 0, 1, 1], [], []>} : vector<8x32xf32>, vector<32x128xf32>, vector<8x128xf32> -> vector<8x128xf32>
    %cst_68 = arith.constant dense<0.000000e+00> : vector<8x128xf32>
    %195 = tpu.matmul %168, %15, %cst_68 {dimension_numbers = #tpu.dot_dimension_numbers<[1], [0], [0], [1], [0, 0, 1, 1], [], []>} : vector<8x32xf32>, vector<32x128xf32>, vector<8x128xf32> -> vector<8x128xf32>
    %196 = arith.addf %194, %195 : vector<8x128xf32>
    %197 = vector.broadcast %16 : vector<1x128xf32> to vector<8x128xf32>
    %198 = arith.addf %196, %197 : vector<8x128xf32>
    %cst_69 = arith.constant 5.000000e-01 : f32
    %199 = vector.broadcast %cst_69 : f32 to vector<8x128xf32>
    %200 = arith.mulf %199, %198 : vector<8x128xf32>
    %201 = arith.select %11, %198, %200 : vector<8x128xi1>, vector<8x128xf32>
    %202 = math.tanh %201 : vector<8x128xf32>
    %cst_70 = arith.constant 5.000000e-01 : f32
    %203 = vector.broadcast %cst_70 : f32 to vector<8x128xf32>
    %204 = arith.mulf %203, %202 : vector<8x128xf32>
    %cst_71 = arith.constant 5.000000e-01 : f32
    %205 = vector.broadcast %cst_71 : f32 to vector<8x128xf32>
    %206 = arith.addf %204, %205 : vector<8x128xf32>
    %207 = arith.select %11, %202, %206 : vector<8x128xi1>, vector<8x128xf32>
    %208 = vector.extract_strided_slice %207 {offsets = [0, 0], sizes = [8, 32], strides = [1, 1]} : vector<8x128xf32> to vector<8x32xf32>
    %209 = vector.extract_strided_slice %207 {offsets = [0, 32], sizes = [8, 32], strides = [1, 1]} : vector<8x128xf32> to vector<8x32xf32>
    %210 = vector.extract_strided_slice %207 {offsets = [0, 64], sizes = [8, 32], strides = [1, 1]} : vector<8x128xf32> to vector<8x32xf32>
    %211 = vector.extract_strided_slice %207 {offsets = [0, 96], sizes = [8, 32], strides = [1, 1]} : vector<8x128xf32> to vector<8x32xf32>
    %212 = arith.mulf %209, %166 : vector<8x32xf32>
    %213 = arith.mulf %208, %210 : vector<8x32xf32>
    %214 = arith.addf %212, %213 : vector<8x32xf32>
    %215 = math.tanh %214 : vector<8x32xf32>
    %216 = arith.mulf %211, %215 : vector<8x32xf32>
    %c4_i32 = arith.constant 4 : i32
    %217 = arith.index_cast %c4_i32 : i32 to index
    %c0_72 = arith.constant 0 : index
    %c0_73 = arith.constant 0 : index
    %218 = vector.load %arg10[%217, %c0_72, %c0_73] : memref<6x8x128xf32, #tpu.memory_space<vmem>>, vector<1x8x128xf32>
    %219 = vector.shape_cast %218 : vector<1x8x128xf32> to vector<8x128xf32>
    %cst_74 = arith.constant dense<0.000000e+00> : vector<8x128xf32>
    %220 = tpu.matmul %193, %12, %cst_74 {dimension_numbers = #tpu.dot_dimension_numbers<[1], [0], [0], [1], [0, 0, 1, 1], [], []>} : vector<8x32xf32>, vector<32x128xf32>, vector<8x128xf32> -> vector<8x128xf32>
    %221 = arith.addf %219, %220 : vector<8x128xf32>
    %222 = vector.broadcast %13 : vector<1x128xf32> to vector<8x128xf32>
    %223 = arith.addf %221, %222 : vector<8x128xf32>
    %cst_75 = arith.constant 5.000000e-01 : f32
    %224 = vector.broadcast %cst_75 : f32 to vector<8x128xf32>
    %225 = arith.mulf %224, %223 : vector<8x128xf32>
    %226 = arith.select %11, %223, %225 : vector<8x128xi1>, vector<8x128xf32>
    %227 = math.tanh %226 : vector<8x128xf32>
    %cst_76 = arith.constant 5.000000e-01 : f32
    %228 = vector.broadcast %cst_76 : f32 to vector<8x128xf32>
    %229 = arith.mulf %228, %227 : vector<8x128xf32>
    %cst_77 = arith.constant 5.000000e-01 : f32
    %230 = vector.broadcast %cst_77 : f32 to vector<8x128xf32>
    %231 = arith.addf %229, %230 : vector<8x128xf32>
    %232 = arith.select %11, %227, %231 : vector<8x128xi1>, vector<8x128xf32>
    %233 = vector.extract_strided_slice %232 {offsets = [0, 0], sizes = [8, 32], strides = [1, 1]} : vector<8x128xf32> to vector<8x32xf32>
    %234 = vector.extract_strided_slice %232 {offsets = [0, 32], sizes = [8, 32], strides = [1, 1]} : vector<8x128xf32> to vector<8x32xf32>
    %235 = vector.extract_strided_slice %232 {offsets = [0, 64], sizes = [8, 32], strides = [1, 1]} : vector<8x128xf32> to vector<8x32xf32>
    %236 = vector.extract_strided_slice %232 {offsets = [0, 96], sizes = [8, 32], strides = [1, 1]} : vector<8x128xf32> to vector<8x32xf32>
    %237 = arith.mulf %234, %191 : vector<8x32xf32>
    %238 = arith.mulf %233, %235 : vector<8x32xf32>
    %239 = arith.addf %237, %238 : vector<8x32xf32>
    %240 = math.tanh %239 : vector<8x32xf32>
    %241 = arith.mulf %236, %240 : vector<8x32xf32>
    %cst_78 = arith.constant dense<0.000000e+00> : vector<8x128xf32>
    %242 = tpu.matmul %241, %14, %cst_78 {dimension_numbers = #tpu.dot_dimension_numbers<[1], [0], [0], [1], [0, 0, 1, 1], [], []>} : vector<8x32xf32>, vector<32x128xf32>, vector<8x128xf32> -> vector<8x128xf32>
    %cst_79 = arith.constant dense<0.000000e+00> : vector<8x128xf32>
    %243 = tpu.matmul %216, %15, %cst_79 {dimension_numbers = #tpu.dot_dimension_numbers<[1], [0], [0], [1], [0, 0, 1, 1], [], []>} : vector<8x32xf32>, vector<32x128xf32>, vector<8x128xf32> -> vector<8x128xf32>
    %244 = arith.addf %242, %243 : vector<8x128xf32>
    %245 = vector.broadcast %16 : vector<1x128xf32> to vector<8x128xf32>
    %246 = arith.addf %244, %245 : vector<8x128xf32>
    %cst_80 = arith.constant 5.000000e-01 : f32
    %247 = vector.broadcast %cst_80 : f32 to vector<8x128xf32>
    %248 = arith.mulf %247, %246 : vector<8x128xf32>
    %249 = arith.select %11, %246, %248 : vector<8x128xi1>, vector<8x128xf32>
    %250 = math.tanh %249 : vector<8x128xf32>
    %cst_81 = arith.constant 5.000000e-01 : f32
    %251 = vector.broadcast %cst_81 : f32 to vector<8x128xf32>
    %252 = arith.mulf %251, %250 : vector<8x128xf32>
    %cst_82 = arith.constant 5.000000e-01 : f32
    %253 = vector.broadcast %cst_82 : f32 to vector<8x128xf32>
    %254 = arith.addf %252, %253 : vector<8x128xf32>
    %255 = arith.select %11, %250, %254 : vector<8x128xi1>, vector<8x128xf32>
    %256 = vector.extract_strided_slice %255 {offsets = [0, 0], sizes = [8, 32], strides = [1, 1]} : vector<8x128xf32> to vector<8x32xf32>
    %257 = vector.extract_strided_slice %255 {offsets = [0, 32], sizes = [8, 32], strides = [1, 1]} : vector<8x128xf32> to vector<8x32xf32>
    %258 = vector.extract_strided_slice %255 {offsets = [0, 64], sizes = [8, 32], strides = [1, 1]} : vector<8x128xf32> to vector<8x32xf32>
    %259 = vector.extract_strided_slice %255 {offsets = [0, 96], sizes = [8, 32], strides = [1, 1]} : vector<8x128xf32> to vector<8x32xf32>
    %260 = arith.mulf %257, %214 : vector<8x32xf32>
    %261 = arith.mulf %256, %258 : vector<8x32xf32>
    %262 = arith.addf %260, %261 : vector<8x32xf32>
    %263 = math.tanh %262 : vector<8x32xf32>
    %264 = arith.mulf %259, %263 : vector<8x32xf32>
    %c5_i32 = arith.constant 5 : i32
    %265 = arith.index_cast %c5_i32 : i32 to index
    %c0_83 = arith.constant 0 : index
    %c0_84 = arith.constant 0 : index
    %266 = vector.load %arg10[%265, %c0_83, %c0_84] : memref<6x8x128xf32, #tpu.memory_space<vmem>>, vector<1x8x128xf32>
    %267 = vector.shape_cast %266 : vector<1x8x128xf32> to vector<8x128xf32>
    %cst_85 = arith.constant dense<0.000000e+00> : vector<8x128xf32>
    %268 = tpu.matmul %241, %12, %cst_85 {dimension_numbers = #tpu.dot_dimension_numbers<[1], [0], [0], [1], [0, 0, 1, 1], [], []>} : vector<8x32xf32>, vector<32x128xf32>, vector<8x128xf32> -> vector<8x128xf32>
    %269 = arith.addf %267, %268 : vector<8x128xf32>
    %270 = vector.broadcast %13 : vector<1x128xf32> to vector<8x128xf32>
    %271 = arith.addf %269, %270 : vector<8x128xf32>
    %cst_86 = arith.constant 5.000000e-01 : f32
    %272 = vector.broadcast %cst_86 : f32 to vector<8x128xf32>
    %273 = arith.mulf %272, %271 : vector<8x128xf32>
    %274 = arith.select %11, %271, %273 : vector<8x128xi1>, vector<8x128xf32>
    %275 = math.tanh %274 : vector<8x128xf32>
    %cst_87 = arith.constant 5.000000e-01 : f32
    %276 = vector.broadcast %cst_87 : f32 to vector<8x128xf32>
    %277 = arith.mulf %276, %275 : vector<8x128xf32>
    %cst_88 = arith.constant 5.000000e-01 : f32
    %278 = vector.broadcast %cst_88 : f32 to vector<8x128xf32>
    %279 = arith.addf %277, %278 : vector<8x128xf32>
    %280 = arith.select %11, %275, %279 : vector<8x128xi1>, vector<8x128xf32>
    %281 = vector.extract_strided_slice %280 {offsets = [0, 0], sizes = [8, 32], strides = [1, 1]} : vector<8x128xf32> to vector<8x32xf32>
    %282 = vector.extract_strided_slice %280 {offsets = [0, 32], sizes = [8, 32], strides = [1, 1]} : vector<8x128xf32> to vector<8x32xf32>
    %283 = vector.extract_strided_slice %280 {offsets = [0, 64], sizes = [8, 32], strides = [1, 1]} : vector<8x128xf32> to vector<8x32xf32>
    %284 = vector.extract_strided_slice %280 {offsets = [0, 96], sizes = [8, 32], strides = [1, 1]} : vector<8x128xf32> to vector<8x32xf32>
    %285 = arith.mulf %282, %239 : vector<8x32xf32>
    %286 = arith.mulf %281, %283 : vector<8x32xf32>
    %287 = arith.addf %285, %286 : vector<8x32xf32>
    %288 = math.tanh %287 : vector<8x32xf32>
    %289 = arith.mulf %284, %288 : vector<8x32xf32>
    %cst_89 = arith.constant dense<0.000000e+00> : vector<8x128xf32>
    %290 = tpu.matmul %289, %14, %cst_89 {dimension_numbers = #tpu.dot_dimension_numbers<[1], [0], [0], [1], [0, 0, 1, 1], [], []>} : vector<8x32xf32>, vector<32x128xf32>, vector<8x128xf32> -> vector<8x128xf32>
    %cst_90 = arith.constant dense<0.000000e+00> : vector<8x128xf32>
    %291 = tpu.matmul %264, %15, %cst_90 {dimension_numbers = #tpu.dot_dimension_numbers<[1], [0], [0], [1], [0, 0, 1, 1], [], []>} : vector<8x32xf32>, vector<32x128xf32>, vector<8x128xf32> -> vector<8x128xf32>
    %292 = arith.addf %290, %291 : vector<8x128xf32>
    %293 = vector.broadcast %16 : vector<1x128xf32> to vector<8x128xf32>
    %294 = arith.addf %292, %293 : vector<8x128xf32>
    %cst_91 = arith.constant 5.000000e-01 : f32
    %295 = vector.broadcast %cst_91 : f32 to vector<8x128xf32>
    %296 = arith.mulf %295, %294 : vector<8x128xf32>
    %297 = arith.select %11, %294, %296 : vector<8x128xi1>, vector<8x128xf32>
    %298 = math.tanh %297 : vector<8x128xf32>
    %cst_92 = arith.constant 5.000000e-01 : f32
    %299 = vector.broadcast %cst_92 : f32 to vector<8x128xf32>
    %300 = arith.mulf %299, %298 : vector<8x128xf32>
    %cst_93 = arith.constant 5.000000e-01 : f32
    %301 = vector.broadcast %cst_93 : f32 to vector<8x128xf32>
    %302 = arith.addf %300, %301 : vector<8x128xf32>
    %303 = arith.select %11, %298, %302 : vector<8x128xi1>, vector<8x128xf32>
    %304 = vector.extract_strided_slice %303 {offsets = [0, 0], sizes = [8, 32], strides = [1, 1]} : vector<8x128xf32> to vector<8x32xf32>
    %305 = vector.extract_strided_slice %303 {offsets = [0, 32], sizes = [8, 32], strides = [1, 1]} : vector<8x128xf32> to vector<8x32xf32>
    %306 = vector.extract_strided_slice %303 {offsets = [0, 64], sizes = [8, 32], strides = [1, 1]} : vector<8x128xf32> to vector<8x32xf32>
    %307 = vector.extract_strided_slice %303 {offsets = [0, 96], sizes = [8, 32], strides = [1, 1]} : vector<8x128xf32> to vector<8x32xf32>
    %308 = arith.mulf %305, %262 : vector<8x32xf32>
    %309 = arith.mulf %304, %306 : vector<8x32xf32>
    %310 = arith.addf %308, %309 : vector<8x32xf32>
    %311 = math.tanh %310 : vector<8x32xf32>
    %312 = arith.mulf %307, %311 : vector<8x32xf32>
    %c6_i32 = arith.constant 6 : i32
    %c0_94 = arith.constant 0 : index
    %c0_95 = arith.constant 0 : index
    %313 = vector.load %arg9[%c0_94, %c0_95] : memref<8x32xf32, #tpu.memory_space<vmem>>, vector<8x32xf32>
    tpu.vector_store %arg9[%c0_94, %c0_95], %312 {strides = array<i32>} : memref<8x32xf32, #tpu.memory_space<vmem>>, vector<8x32xf32>,
    return
  }
}

</mosaic_0001>

<llo_original>
// kernel: tile.18
$region0: #{tile.18}
  #allocation0 [shape = 's32[1]{0}', space=sflag, size = 0x4, scoped, tag = 'scoped memory for tile.18']
  %s0 = inlined_call_operand.vmem [shape: f32[8], index: 0, kind: input, shape index: {}]
  %s1 = inlined_call_operand.vmem [shape: f32[12,8], index: 1, kind: output, shape index: {}]
  // Predicated region
  $region2: #{tile.18} parent=0 // pred_check
    _
  $region3: #{tile.18} parent=0 // pred_check_branch
    %3 = sbr.rel (0) target = $region5
  $region4: #{tile.18} parent=0 // pred_region
    _
  $region5: #{tile.18} parent=0 // pred_fallthru
    _
  %v4 = vld [vmem:[%s0] ss:$0 sm:$0xff]
  %5 = vst [vmem:[%s1] sm:$0xff] %v4
  %s6 = scalar_lea.vmem %s1, 8
  %7 = vst [vmem:[%s6] sm:$0xff] %v4

// kernel: _lambda_.2
$region0: #{_lambda_.2}
  #allocation0 [shape = 'u32[]', space=smem, size = 0x4, offset = 0x4, fixed_abs, tag = 'smem constant byte address 0x4 - core index']
  #allocation1 [shape = 'u32[144,128]{1,0:T(1,128)}', space=vmem, size = 0x12000, scoped, tag = 'internal scratch']
  #allocation2 [shape = 'f32[1,1]{1,0:T(1,128)S(1)}', space=vmem, size = 0x200, scoped, tag = 'scoped memory for _lambda_.2']
  #allocation3 [shape = 'f32[1,1]{1,0:T(1,128)S(1)}', space=vmem, size = 0x200, scoped, tag = 'scoped memory for _lambda_.2']
  %s0 = inlined_call_operand.vmem [shape: f32[16,128], index: 0, kind: input, shape index: {}]
  %s1 = inlined_call_operand.vmem [shape: f32[10,128], index: 1, kind: input, shape index: {}]
  %s2 = inlined_call_operand.vmem [shape: bf16[20,16], index: 2, kind: input, shape index: {}]
  %s3 = inlined_call_operand.vmem [shape: bf16[10,20], index: 3, kind: input, shape index: {}]
  %s4 = inlined_call_operand.vmem [shape: f32[20,3], index: 4, kind: input, shape index: {}]
  %s5 = inlined_call_operand.vmem [shape: f32[3,1], index: 5, kind: input, shape index: {}]
  %s6 = inlined_call_operand.<no memory space> [shape: f32[1,1], index: 6, kind: input, shape index: {}]
  %s7 = inlined_call_operand.vmem [shape: f32[128,128], index: 7, kind: input, shape index: {}]
  %s8 = inlined_call_operand.vmem [shape: f32[128,128], index: 8, kind: input, shape index: {}, may-alias: {8,16}]
  %s9 = inlined_call_operand.vmem [shape: f32[128,128], index: 9, kind: input, shape index: {}, may-alias: {9,17}]
  %s10 = inlined_call_operand.vmem [shape: bf16[12,10], index: 10, kind: input, shape index: {}]
  %s11 = inlined_call_operand.vmem [shape: bf16[6,12], index: 11, kind: input, shape index: {}]
  %s12 = inlined_call_operand.vmem [shape: f32[12,3], index: 12, kind: input, shape index: {}]
  %s13 = inlined_call_operand.vmem [shape: f32[3,1], index: 13, kind: input, shape index: {}]
  %s14 = inlined_call_operand.<no memory space> [shape: f32[1,1], index: 14, kind: input, shape index: {}]
  %s15 = inlined_call_operand.vmem [shape: f32[128,128], index: 15, kind: input, shape index: {}]
  %s16 = inlined_call_operand.vmem [shape: f32[128,128], index: 16, kind: input, shape index: {}, may-alias: {8,16}]
  %s17 = inlined_call_operand.vmem [shape: f32[128,128], index: 17, kind: input, shape index: {}, may-alias: {9,17}]
  %s18 = inlined_call_operand.vmem [shape: f32[6,128], index: 18, kind: output, shape index: {0}]
  %s19 = inlined_call_operand.vmem [shape: f32[6,128], index: 19, kind: output, shape index: {1}]
  %20 = xla_tuple %s18, %s19
  %s21 = sld [smem:[#allocation0]]
  $region90: #{_lambda_.2} parent=0
    _
  %s23 = ssub.s32 1, %s21
  %s24 = scalar_select 0, %s23, %s21
  %v25 = vstv %s6
  %26 = vst [vmem:[#allocation2] sm:$0x1] %v25
  %v27 = vstv %s14
  %28 = vst [vmem:[#allocation3] sm:$0x1] %v27
  // Predicated region
  $region2: #{_lambda_.2} parent=0 // pred_check
    _
  $region3: #{_lambda_.2} parent=0 // pred_check_branch
    %30 = sbr.rel (0) target = $region5
  $region4: #{_lambda_.2} parent=0 // pred_region
    _
  $region5: #{_lambda_.2} parent=0 // pred_fallthru
    _
  // Predicated region
  $region6: #{_lambda_.2} parent=0 // pred_check
    _
  $region7: #{_lambda_.2} parent=0 // pred_check_branch
    %32 = sbr.rel (0) target = $region9
  $region8: #{_lambda_.2} parent=0 // pred_region
    _
  $region9: #{_lambda_.2} parent=0 // pred_fallthru
    _
  // Predicated region
  $region10: #{_lambda_.2} parent=0 // pred_check
    _
  $region11: #{_lambda_.2} parent=0 // pred_check_branch
    %34 = sbr.rel (0) target = $region13
  $region12: #{_lambda_.2} parent=0 // pred_region
    _
  $region13: #{_lambda_.2} parent=0 // pred_fallthru
    _
  // Predicated region
  $region14: #{_lambda_.2} parent=0 // pred_check
    _
  $region15: #{_lambda_.2} parent=0 // pred_check_branch
    %36 = sbr.rel (0) target = $region17
  $region16: #{_lambda_.2} parent=0 // pred_region
    _
  $region17: #{_lambda_.2} parent=0 // pred_fallthru
    _
  // Predicated region
  $region18: #{_lambda_.2} parent=0 // pred_check
    _
  $region19: #{_lambda_.2} parent=0 // pred_check_branch
    %38 = sbr.rel (0) target = $region21
  $region20: #{_lambda_.2} parent=0 // pred_region
    _
  $region21: #{_lambda_.2} parent=0 // pred_fallthru
    _
  // Predicated region
  $region22: #{_lambda_.2} parent=0 // pred_check
    _
  $region23: #{_lambda_.2} parent=0 // pred_check_branch
    %40 = sbr.rel (0) target = $region25
  $region24: #{_lambda_.2} parent=0 // pred_region
    _
  $region25: #{_lambda_.2} parent=0 // pred_fallthru
    _
  // Predicated region
  $region26: #{_lambda_.2} parent=0 // pred_check
    _
  $region27: #{_lambda_.2} parent=0 // pred_check_branch
    %42 = sbr.rel (0) target = $region29
  $region28: #{_lambda_.2} parent=0 // pred_region
    _
  $region29: #{_lambda_.2} parent=0 // pred_fallthru
    _
  // Predicated region
  $region30: #{_lambda_.2} parent=0 // pred_check
    _
  $region31: #{_lambda_.2} parent=0 // pred_check_branch
    %44 = sbr.rel (0) target = $region33
  $region32: #{_lambda_.2} parent=0 // pred_region
    _
  $region33: #{_lambda_.2} parent=0 // pred_fallthru
    _
  // Predicated region
  $region34: #{_lambda_.2} parent=0 // pred_check
    _
  $region35: #{_lambda_.2} parent=0 // pred_check_branch
    %46 = sbr.rel (0) target = $region37
  $region36: #{_lambda_.2} parent=0 // pred_region
    _
  $region37: #{_lambda_.2} parent=0 // pred_fallthru
    _
  // Predicated region
  $region38: #{_lambda_.2} parent=0 // pred_check
    _
  $region39: #{_lambda_.2} parent=0 // pred_check_branch
    %48 = sbr.rel (0) target = $region41
  $region40: #{_lambda_.2} parent=0 // pred_region
    _
  $region41: #{_lambda_.2} parent=0 // pred_fallthru
    _
  // Predicated region
  $region42: #{_lambda_.2} parent=0 // pred_check
    _
  $region43: #{_lambda_.2} parent=0 // pred_check_branch
    %50 = sbr.rel (0) target = $region45
  $region44: #{_lambda_.2} parent=0 // pred_region
    _
  $region45: #{_lambda_.2} parent=0 // pred_fallthru
    _
  // Predicated region
  $region46: #{_lambda_.2} parent=0 // pred_check
    _
  $region47: #{_lambda_.2} parent=0 // pred_check_branch
    %52 = sbr.rel (0) target = $region49
  $region48: #{_lambda_.2} parent=0 // pred_region
    _
  $region49: #{_lambda_.2} parent=0 // pred_fallthru
    _
  // Predicated region
  $region50: #{_lambda_.2} parent=0 // pred_check
    _
  $region51: #{_lambda_.2} parent=0 // pred_check_branch
    %54 = sbr.rel (0) target = $region53
  $region52: #{_lambda_.2} parent=0 // pred_region
    _
  $region53: #{_lambda_.2} parent=0 // pred_fallthru
    _
  // Predicated region
  $region54: #{_lambda_.2} parent=0 // pred_check
    _
  $region55: #{_lambda_.2} parent=0 // pred_check_branch
    %56 = sbr.rel (0) target = $region57
  $region56: #{_lambda_.2} parent=0 // pred_region
    _
  $region57: #{_lambda_.2} parent=0 // pred_fallthru
    _
  // Predicated region
  $region58: #{_lambda_.2} parent=0 // pred_check
    _
  $region59: #{_lambda_.2} parent=0 // pred_check_branch
    %58 = sbr.rel (0) target = $region61
  $region60: #{_lambda_.2} parent=0 // pred_region
    _
  $region61: #{_lambda_.2} parent=0 // pred_fallthru
    _
  // Predicated region
  $region62: #{_lambda_.2} parent=0 // pred_check
    _
  $region63: #{_lambda_.2} parent=0 // pred_check_branch
    %60 = sbr.rel (0) target = $region65
  $region64: #{_lambda_.2} parent=0 // pred_region
    _
  $region65: #{_lambda_.2} parent=0 // pred_fallthru
    _
  // Predicated region
  $region66: #{_lambda_.2} parent=0 // pred_check
    _
  $region67: #{_lambda_.2} parent=0 // pred_check_branch
    %62 = sbr.rel (0) target = $region69
  $region68: #{_lambda_.2} parent=0 // pred_region
    _
  $region69: #{_lambda_.2} parent=0 // pred_fallthru
    _
  // Predicated region
  $region70: #{_lambda_.2} parent=0 // pred_check
    _
  $region71: #{_lambda_.2} parent=0 // pred_check_branch
    %64 = sbr.rel (0) target = $region73
  $region72: #{_lambda_.2} parent=0 // pred_region
    _
  $region73: #{_lambda_.2} parent=0 // pred_fallthru
    _
  %v65 = vld [vmem:[%s0] sm:$0xff]
  %v66 = vld [vmem:[%s0 + $0x8] sm:$0xff]
  %v67 = vld [vmem:[%s2] sm:$0xf]
  %v68 = vld [vmem:[%s2 + $0x4] sm:$0xf]
  %v69 = vld [vmem:[%s2 + $0x8] sm:$0x3]
  %v70 = vunpack.c.l.bf16 %v67
  %v71 = vunpack.c.l.bf16 %v68
  %v72 = vunpack.c.l.bf16 %v69
  %v73 = vld [vmem:[%s3] sm:$0xf]
  %v74 = vld [vmem:[%s3 + $0x4] sm:$0x1]
  %v75 = vunpack.c.l.bf16 %v73
  %v76 = vunpack.c.l.bf16 %v74
  %v77 = vld [vmem:[%s4] sm:$0xff]
  %v78 = vld [vmem:[%s4 + $0x8] sm:$0xff]
  %v79 = vld [vmem:[%s4 + $0x10] sm:$0xf]
  %v80 = vmax.f32 %v77, 0.0
  %v81 = vmax.f32 %v78, 0.0
  %v82 = vmax.f32 %v79, 0.0
  %v83 = vld [vmem:[%s5] sm:$0x7]
  %v84 = vld [vmem:[#allocation2] sm:$0x1]
  %v86 = vlaneseq
  %v87 = vshrl.u32 %v86, 7
  %v88 = vsub.s32 0, %v87
  %v89 = vrot.slane %v84, %v88
  %vm91 = vcmask 23552
  %v93 = vsel %vm91, %v80, 0
  %v96 = vsel %vm91, %v81, 0
  %v99 = vsel %vm91, %v82, 0
  %vm101 = vcmask 1042432
  %v103 = vsel %vm101, %v83, 0
  %105 = vmatprep.subr.mxu0 0.0
  %106 = vmatpush1.msra.mxu0 0.0
  %107 = vmatprep.subr.mxu0 0.0
  %108 = vmatpush1.msra.mxu0 0.0
  %109 = vmatprep.subr.mxu0 0.0
  %110 = vmatpush1.msra.mxu0 0.0
  %111 = vmatprep.subr.mxu0 0.0
  %112 = vmatpush1.msra.mxu0 0.0
  %113 = vmatprep.subr.mxu0 0.0
  %114 = vmatpush1.msra.mxu0 0.0
  %115 = vmatprep.subr.mxu0 0.0
  %116 = vmatpush1.msra.mxu0 0.0
  %117 = vmatprep.subr.mxu0 0.0
  %118 = vmatpush1.msra.mxu0 0.0
  %119 = vmatprep.subr.mxu0 0.0
  %120 = vmatpush1.msra.mxu0 0.0
  %121 = vmatprep.subr.mxu0 0.0
  %122 = vmatpush1.msra.mxu0 0.0
  %123 = vmatprep.subr.mxu0 0.0
  %124 = vmatpush1.msra.mxu0 0.0
  %125 = vmatprep.subr.mxu0 0.0
  %126 = vmatpush1.msra.mxu0 0.0
  %127 = vmatprep.subr.mxu0 0.0
  %128 = vmatpush1.msra.mxu0 0.0
  %129 = vmatprep.subr.mxu0 0.0
  %130 = vmatpush1.msra.mxu0 0.0
  %131 = vmatprep.subr.mxu0 0.0
  %132 = vmatpush1.msra.mxu0 0.0
  %133 = vmatprep.subr.mxu0 0.0
  %134 = vmatpush1.msra.mxu0 0.0
  %135 = vmatprep.subr.mxu0 0.0
  %136 = vmatpush1.msra.mxu0 %v103
  %137 = vmatprep.subr.mxu0 0.0
  %138 = vmatpush2.msra.mxu0 0.0
  %139 = vmatprep.subr.mxu0 0.0
  %140 = vmatpush2.msra.mxu0 0.0
  %141 = vmatprep.subr.mxu0 0.0
  %142 = vmatpush2.msra.mxu0 0.0
  %143 = vmatprep.subr.mxu0 0.0
  %144 = vmatpush2.msra.mxu0 0.0
  %145 = vmatprep.subr.mxu0 0.0
  %146 = vmatpush2.msra.mxu0 0.0
  %147 = vmatprep.subr.mxu0 0.0
  %148 = vmatpush2.msra.mxu0 0.0
  %149 = vmatprep.subr.mxu0 0.0
  %150 = vmatpush2.msra.mxu0 0.0
  %151 = vmatprep.subr.mxu0 0.0
  %152 = vmatpush2.msra.mxu0 0.0
  %153 = vmatprep.subr.mxu0 0.0
  %154 = vmatpush2.msra.mxu0 0.0
  %155 = vmatprep.subr.mxu0 0.0
  %156 = vmatpush2.msra.mxu0 0.0
  %157 = vmatprep.subr.mxu0 0.0
  %158 = vmatpush2.msra.mxu0 0.0
  %159 = vmatprep.subr.mxu0 0.0
  %160 = vmatpush2.msra.mxu0 0.0
  %161 = vmatprep.subr.mxu0 0.0
  %162 = vmatpush2.msra.mxu0 0.0
  %163 = vmatprep.subr.mxu0 0.0
  %164 = vmatpush2.msra.mxu0 0.0
  %165 = vmatprep.subr.mxu0 0.0
  %166 = vmatpush2.msra.mxu0 0.0
  %167 = vmatprep.subr.mxu0 0.0
  %168 = vmatpush2.msra.mxu0 0.0
  %169 = vmatprep.mubr.f32.mxu0 0.0
  %170 = vmatmul.mubr.f32.gmra.mxu0 %v93
  %v171 = vpop.f32.mrf.mxu0
  %v172 = vadd.f32 %v89, %v171
  %v173 = vpop.f32.mrf.mxu0
  %174 = vmatprep.mubr.f32.mxu0 0.0
  %175 = vmatmul.mubr.f32.gmra.mxu0 %v96
  %v176 = vpop.f32.mrf.mxu0
  %v177 = vadd.f32 %v89, %v176
  %v178 = vpop.f32.mrf.mxu0
  %179 = vmatprep.mubr.f32.mxu0 0.0
  %180 = vmatmul.mubr.f32.gmra.mxu0 %v99
  %v181 = vpop.f32.mrf.mxu0
  %v182 = vadd.f32 %v89, %v181
  %v183 = vpop.f32.mrf.mxu0
  %184 = vdwg.mxu0
  %v185 = vxor.u32 %v172, 2147483648
  %v186 = vxor.u32 %v177, 2147483648
  %v187 = vxor.u32 %v182, 2147483648
  %v188 = vmul.f32 %v185, 1.442695
  %v189 = vpow.pop %v188
  %v190 = vmul.f32 %v186, 1.442695
  %v191 = vpow.pop %v190
  %v192 = vmul.f32 %v187, 1.442695
  %v193 = vpow.pop %v192
  %v194 = vadd.f32 %v189, 1.0
  %v195 = vadd.f32 %v191, 1.0
  %v196 = vadd.f32 %v193, 1.0
  %v197 = vrcp.pop %v194
  %v198 = vmul.f32 1.0, %v197
  %v199 = vrcp.pop %v195
  %v200 = vmul.f32 1.0, %v199
  %v201 = vrcp.pop %v196
  %v202 = vmul.f32 1.0, %v201
  %vm203 = vcmask 130048
  %v205 = vsel %vm203, %v70, 0
  %v208 = vsel %vm203, %v71, 0
  %v211 = vsel %vm203, %v72, 0
  %213 = vmatprep.subr.mxu0 0.0
  %214 = vmatpush1.msra.mxu0 0.0
  %215 = vmatprep.subr.mxu0 0.0
  %216 = vmatpush1.msra.mxu0 0.0
  %217 = vmatprep.subr.mxu0 0.0
  %218 = vmatpush1.msra.mxu0 0.0
  %219 = vmatprep.subr.mxu0 0.0
  %220 = vmatpush1.msra.mxu0 0.0
  %221 = vmatprep.subr.mxu0 0.0
  %222 = vmatpush1.msra.mxu0 0.0
  %223 = vmatprep.subr.mxu0 0.0
  %224 = vmatpush1.msra.mxu0 0.0
  %225 = vmatprep.subr.mxu0 0.0
  %226 = vmatpush1.msra.mxu0 0.0
  %227 = vmatprep.subr.mxu0 0.0
  %228 = vmatpush1.msra.mxu0 0.0
  %229 = vmatprep.subr.mxu0 0.0
  %230 = vmatpush1.msra.mxu0 0.0
  %231 = vmatprep.subr.mxu0 0.0
  %232 = vmatpush1.msra.mxu0 0.0
  %233 = vmatprep.subr.mxu0 0.0
  %234 = vmatpush1.msra.mxu0 0.0
  %235 = vmatprep.subr.mxu0 0.0
  %236 = vmatpush1.msra.mxu0 0.0
  %237 = vmatprep.subr.mxu0 0.0
  %238 = vmatpush1.msra.mxu0 0.0
  %239 = vmatprep.subr.mxu0 0.0
  %240 = vmatpush1.msra.mxu0 0.0
  %241 = vmatprep.subr.mxu0 0.0
  %242 = vmatpush1.msra.mxu0 %v66
  %243 = vmatprep.subr.mxu0 0.0
  %244 = vmatpush1.msra.mxu0 %v65
  %245 = vmatprep.subr.mxu0 0.0
  %246 = vmatpush2.msra.mxu0 0.0
  %247 = vmatprep.subr.mxu0 0.0
  %248 = vmatpush2.msra.mxu0 0.0
  %249 = vmatprep.subr.mxu0 0.0
  %250 = vmatpush2.msra.mxu0 0.0
  %251 = vmatprep.subr.mxu0 0.0
  %252 = vmatpush2.msra.mxu0 0.0
  %253 = vmatprep.subr.mxu0 0.0
  %254 = vmatpush2.msra.mxu0 0.0
  %255 = vmatprep.subr.mxu0 0.0
  %256 = vmatpush2.msra.mxu0 0.0
  %257 = vmatprep.subr.mxu0 0.0
  %258 = vmatpush2.msra.mxu0 0.0
  %259 = vmatprep.subr.mxu0 0.0
  %260 = vmatpush2.msra.mxu0 0.0
  %261 = vmatprep.subr.mxu0 0.0
  %262 = vmatpush2.msra.mxu0 0.0
  %263 = vmatprep.subr.mxu0 0.0
  %264 = vmatpush2.msra.mxu0 0.0
  %265 = vmatprep.subr.mxu0 0.0
  %266 = vmatpush2.msra.mxu0 0.0
  %267 = vmatprep.subr.mxu0 0.0
  %268 = vmatpush2.msra.mxu0 0.0
  %269 = vmatprep.subr.mxu0 0.0
  %270 = vmatpush2.msra.mxu0 0.0
  %271 = vmatprep.subr.mxu0 0.0
  %272 = vmatpush2.msra.mxu0 0.0
  %273 = vmatprep.subr.mxu0 0.0
  %274 = vmatpush2.msra.mxu0 0.0
  %275 = vmatprep.subr.mxu0 0.0
  %276 = vmatpush2.msra.mxu0 0.0
  %277 = vmatprep.mubr.f32.mxu0 0.0
  %278 = vmatmul.mubr.f32.gmra.mxu0 %v205
  %v279 = vpop.f32.mrf.mxu0
  %v280 = vadd.f32 0.0, %v279
  %v281 = vpop.f32.mrf.mxu0
  %282 = vmatprep.mubr.f32.mxu0 0.0
  %283 = vmatmul.mubr.f32.gmra.mxu0 %v208
  %v284 = vpop.f32.mrf.mxu0
  %v285 = vadd.f32 0.0, %v284
  %v286 = vpop.f32.mrf.mxu0
  %287 = vmatprep.mubr.f32.mxu0 0.0
  %288 = vmatmul.mubr.f32.gmra.mxu0 %v211
  %v289 = vpop.f32.mrf.mxu0
  %v290 = vadd.f32 0.0, %v289
  %v291 = vpop.f32.mrf.mxu0
  %292 = vdwg.mxu0
  %294 = vset.pattern.permute.xlu0 0
  %295 = vperm.xlu0 %294, %v198
  %v296 = vpop.permute.xlu0 %295
  %299 = vset.pattern.permute.xlu0 0
  %300 = vperm.xlu0 %299, %v200
  %v301 = vpop.permute.xlu0 %300
  %304 = vset.pattern.permute.xlu0 0
  %305 = vperm.xlu0 %304, %v202
  %v306 = vpop.permute.xlu0 %305
  %v308 = vmul.f32 %v280, %v296
  %v309 = vmul.f32 %v285, %v301
  %v310 = vmul.f32 %v290, %v306
  %vm311 = vcmask 162816
  %v313 = vsel %vm311, %v75, 0
  %v316 = vsel %vm311, %v76, 0
  %vm318 = vcmask 1043456
  %v320 = vsel %vm318, %v310, 0
  %322 = vmatprep.subr.mxu0 0.0
  %323 = vmatpush1.msra.mxu0 0.0
  %324 = vmatprep.subr.mxu0 0.0
  %325 = vmatpush1.msra.mxu0 0.0
  %326 = vmatprep.subr.mxu0 0.0
  %327 = vmatpush1.msra.mxu0 0.0
  %328 = vmatprep.subr.mxu0 0.0
  %329 = vmatpush1.msra.mxu0 0.0
  %330 = vmatprep.subr.mxu0 0.0
  %331 = vmatpush1.msra.mxu0 0.0
  %332 = vmatprep.subr.mxu0 0.0
  %333 = vmatpush1.msra.mxu0 0.0
  %334 = vmatprep.subr.mxu0 0.0
  %335 = vmatpush1.msra.mxu0 0.0
  %336 = vmatprep.subr.mxu0 0.0
  %337 = vmatpush1.msra.mxu0 0.0
  %338 = vmatprep.subr.mxu0 0.0
  %339 = vmatpush1.msra.mxu0 0.0
  %340 = vmatprep.subr.mxu0 0.0
  %341 = vmatpush1.msra.mxu0 0.0
  %342 = vmatprep.subr.mxu0 0.0
  %343 = vmatpush1.msra.mxu0 0.0
  %344 = vmatprep.subr.mxu0 0.0
  %345 = vmatpush1.msra.mxu0 0.0
  %346 = vmatprep.subr.mxu0 0.0
  %347 = vmatpush1.msra.mxu0 0.0
  %348 = vmatprep.subr.mxu0 0.0
  %349 = vmatpush1.msra.mxu0 %v320
  %350 = vmatprep.subr.mxu0 0.0
  %351 = vmatpush1.msra.mxu0 %v309
  %352 = vmatprep.subr.mxu0 0.0
  %353 = vmatpush1.msra.mxu0 %v308
  %354 = vmatprep.subr.mxu0 0.0
  %355 = vmatpush2.msra.mxu0 0.0
  %356 = vmatprep.subr.mxu0 0.0
  %357 = vmatpush2.msra.mxu0 0.0
  %358 = vmatprep.subr.mxu0 0.0
  %359 = vmatpush2.msra.mxu0 0.0
  %360 = vmatprep.subr.mxu0 0.0
  %361 = vmatpush2.msra.mxu0 0.0
  %362 = vmatprep.subr.mxu0 0.0
  %363 = vmatpush2.msra.mxu0 0.0
  %364 = vmatprep.subr.mxu0 0.0
  %365 = vmatpush2.msra.mxu0 0.0
  %366 = vmatprep.subr.mxu0 0.0
  %367 = vmatpush2.msra.mxu0 0.0
  %368 = vmatprep.subr.mxu0 0.0
  %369 = vmatpush2.msra.mxu0 0.0
  %370 = vmatprep.subr.mxu0 0.0
  %371 = vmatpush2.msra.mxu0 0.0
  %372 = vmatprep.subr.mxu0 0.0
  %373 = vmatpush2.msra.mxu0 0.0
  %374 = vmatprep.subr.mxu0 0.0
  %375 = vmatpush2.msra.mxu0 0.0
  %376 = vmatprep.subr.mxu0 0.0
  %377 = vmatpush2.msra.mxu0 0.0
  %378 = vmatprep.subr.mxu0 0.0
  %379 = vmatpush2.msra.mxu0 0.0
  %380 = vmatprep.subr.mxu0 0.0
  %381 = vmatpush2.msra.mxu0 0.0
  %382 = vmatprep.subr.mxu0 0.0
  %383 = vmatpush2.msra.mxu0 0.0
  %384 = vmatprep.subr.mxu0 0.0
  %385 = vmatpush2.msra.mxu0 0.0
  %386 = vmatprep.mubr.f32.mxu0 0.0
  %387 = vmatmul.mubr.f32.gmra.mxu0 %v313
  %v388 = vpop.f32.mrf.mxu0
  %v389 = vadd.f32 0.0, %v388
  %v390 = vpop.f32.mrf.mxu0
  %391 = vmatprep.mubr.f32.mxu0 0.0
  %392 = vmatmul.mubr.f32.gmra.mxu0 %v316
  %v393 = vpop.f32.mrf.mxu0
  %v394 = vadd.f32 0.0, %v393
  %v395 = vpop.f32.mrf.mxu0
  %396 = vdwg.mxu0
  %v397 = vld [vmem:[%s7] sm:$0xff]
  %v398 = vld [vmem:[%s7 + $0x8] sm:$0xff]
  %v399 = vld [vmem:[%s7 + $0x10] sm:$0xff]
  %v400 = vld [vmem:[%s7 + $0x18] sm:$0xff]
  %v401 = vld [vmem:[%s7 + $0x20] sm:$0xff]
  %v402 = vld [vmem:[%s7 + $0x28] sm:$0xff]
  %v403 = vld [vmem:[%s7 + $0x30] sm:$0xff]
  %v404 = vld [vmem:[%s7 + $0x38] sm:$0xff]
  %v405 = vld [vmem:[%s7 + $0x40] sm:$0xff]
  %v406 = vld [vmem:[%s7 + $0x48] sm:$0xff]
  %v407 = vld [vmem:[%s7 + $0x50] sm:$0xff]
  %v408 = vld [vmem:[%s7 + $0x58] sm:$0xff]
  %v409 = vld [vmem:[%s7 + $0x60] sm:$0xff]
  %v410 = vld [vmem:[%s7 + $0x68] sm:$0xff]
  %v411 = vld [vmem:[%s7 + $0x70] sm:$0xff]
  %v412 = vld [vmem:[%s7 + $0x78] sm:$0xff]
  %413 = vmatprep.subr.mxu0 0.0
  %414 = vmatpush1.msra.mxu0 %v412
  %415 = vmatprep.subr.mxu0 0.0
  %416 = vmatpush1.msra.mxu0 %v411
  %417 = vmatprep.subr.mxu0 0.0
  %418 = vmatpush1.msra.mxu0 %v410
  %419 = vmatprep.subr.mxu0 0.0
  %420 = vmatpush1.msra.mxu0 %v409
  %421 = vmatprep.subr.mxu0 0.0
  %422 = vmatpush1.msra.mxu0 %v408
  %423 = vmatprep.subr.mxu0 0.0
  %424 = vmatpush1.msra.mxu0 %v407
  %425 = vmatprep.subr.mxu0 0.0
  %426 = vmatpush1.msra.mxu0 %v406
  %427 = vmatprep.subr.mxu0 0.0
  %428 = vmatpush1.msra.mxu0 %v405
  %429 = vmatprep.subr.mxu0 0.0
  %430 = vmatpush1.msra.mxu0 %v404
  %431 = vmatprep.subr.mxu0 0.0
  %432 = vmatpush1.msra.mxu0 %v403
  %433 = vmatprep.subr.mxu0 0.0
  %434 = vmatpush1.msra.mxu0 %v402
  %435 = vmatprep.subr.mxu0 0.0
  %436 = vmatpush1.msra.mxu0 %v401
  %437 = vmatprep.subr.mxu0 0.0
  %438 = vmatpush1.msra.mxu0 %v400
  %439 = vmatprep.subr.mxu0 0.0
  %440 = vmatpush1.msra.mxu0 %v399
  %441 = vmatprep.subr.mxu0 0.0
  %442 = vmatpush1.msra.mxu0 %v398
  %443 = vmatprep.subr.mxu0 0.0
  %444 = vmatpush1.msra.mxu0 %v397
  %445 = vmatprep.subr.mxu0 0.0
  %446 = vmatpush2.msra.mxu0 0.0
  %447 = vmatprep.subr.mxu0 0.0
  %448 = vmatpush2.msra.mxu0 0.0
  %449 = vmatprep.subr.mxu0 0.0
  %450 = vmatpush2.msra.mxu0 0.0
  %451 = vmatprep.subr.mxu0 0.0
  %452 = vmatpush2.msra.mxu0 0.0
  %453 = vmatprep.subr.mxu0 0.0
  %454 = vmatpush2.msra.mxu0 0.0
  %455 = vmatprep.subr.mxu0 0.0
  %456 = vmatpush2.msra.mxu0 0.0
  %457 = vmatprep.subr.mxu0 0.0
  %458 = vmatpush2.msra.mxu0 0.0
  %459 = vmatprep.subr.mxu0 0.0
  %460 = vmatpush2.msra.mxu0 0.0
  %461 = vmatprep.subr.mxu0 0.0
  %462 = vmatpush2.msra.mxu0 0.0
  %463 = vmatprep.subr.mxu0 0.0
  %464 = vmatpush2.msra.mxu0 0.0
  %465 = vmatprep.subr.mxu0 0.0
  %466 = vmatpush2.msra.mxu0 0.0
  %467 = vmatprep.subr.mxu0 0.0
  %468 = vmatpush2.msra.mxu0 0.0
  %469 = vmatprep.subr.mxu0 0.0
  %470 = vmatpush2.msra.mxu0 0.0
  %471 = vmatprep.subr.mxu0 0.0
  %472 = vmatpush2.msra.mxu0 0.0
  %473 = vmatprep.subr.mxu0 0.0
  %474 = vmatpush2.msra.mxu0 0.0
  %475 = vmatprep.subr.mxu0 0.0
  %476 = vmatpush2.msra.mxu0 0.0
  %477 = vmatprep.mubr.f32.mxu0 0.0
  %478 = vmatmul.mubr.f32.gmra.mxu0 %v389
  %v479 = vpop.f32.mrf.mxu0
  %v480 = vadd.f32 0.0, %v479
  %v481 = vpop.f32.mrf.mxu0
  %482 = vmatprep.mubr.f32.mxu0 0.0
  %483 = vmatmul.mubr.f32.gmra.mxu0 %v394
  %v484 = vpop.f32.mrf.mxu0
  %v485 = vadd.f32 0.0, %v484
  %v486 = vpop.f32.mrf.mxu0
  %487 = vdwg.mxu0
  %v488 = vmul.f32 %v480, %v480
  %v489 = vmul.f32 %v485, %v485
  %v490 = vld [vmem:[%s8] sm:$0xff]
  %v491 = vld [vmem:[%s8 + $0x8] sm:$0xff]
  %v492 = vld [vmem:[%s8 + $0x10] sm:$0xff]
  %v493 = vld [vmem:[%s8 + $0x18] sm:$0xff]
  %v494 = vld [vmem:[%s8 + $0x20] sm:$0xff]
  %v495 = vld [vmem:[%s8 + $0x28] sm:$0xff]
  %v496 = vld [vmem:[%s8 + $0x30] sm:$0xff]
  %v497 = vld [vmem:[%s8 + $0x38] sm:$0xff]
  %v498 = vld [vmem:[%s8 + $0x40] sm:$0xff]
  %v499 = vld [vmem:[%s8 + $0x48] sm:$0xff]
  %v500 = vld [vmem:[%s8 + $0x50] sm:$0xff]
  %v501 = vld [vmem:[%s8 + $0x58] sm:$0xff]
  %v502 = vld [vmem:[%s8 + $0x60] sm:$0xff]
  %v503 = vld [vmem:[%s8 + $0x68] sm:$0xff]
  %v504 = vld [vmem:[%s8 + $0x70] sm:$0xff]
  %v505 = vld [vmem:[%s8 + $0x78] sm:$0xff]
  %506 = vmatprep.subr.mxu0 0.0
  %507 = vmatpush1.msra.mxu0 %v505
  %508 = vmatprep.subr.mxu0 0.0
  %509 = vmatpush1.msra.mxu0 %v504
  %510 = vmatprep.subr.mxu0 0.0
  %511 = vmatpush1.msra.mxu0 %v503
  %512 = vmatprep.subr.mxu0 0.0
  %513 = vmatpush1.msra.mxu0 %v502
  %514 = vmatprep.subr.mxu0 0.0
  %515 = vmatpush1.msra.mxu0 %v501
  %516 = vmatprep.subr.mxu0 0.0
  %517 = vmatpush1.msra.mxu0 %v500
  %518 = vmatprep.subr.mxu0 0.0
  %519 = vmatpush1.msra.mxu0 %v499
  %520 = vmatprep.subr.mxu0 0.0
  %521 = vmatpush1.msra.mxu0 %v498
  %522 = vmatprep.subr.mxu0 0.0
  %523 = vmatpush1.msra.mxu0 %v497
  %524 = vmatprep.subr.mxu0 0.0
  %525 = vmatpush1.msra.mxu0 %v496
  %526 = vmatprep.subr.mxu0 0.0
  %527 = vmatpush1.msra.mxu0 %v495
  %528 = vmatprep.subr.mxu0 0.0
  %529 = vmatpush1.msra.mxu0 %v494
  %530 = vmatprep.subr.mxu0 0.0
  %531 = vmatpush1.msra.mxu0 %v493
  %532 = vmatprep.subr.mxu0 0.0
  %533 = vmatpush1.msra.mxu0 %v492
  %534 = vmatprep.subr.mxu0 0.0
  %535 = vmatpush1.msra.mxu0 %v491
  %536 = vmatprep.subr.mxu0 0.0
  %537 = vmatpush1.msra.mxu0 %v490
  %538 = vmatprep.subr.mxu0 0.0
  %539 = vmatpush2.msra.mxu0 0.0
  %540 = vmatprep.subr.mxu0 0.0
  %541 = vmatpush2.msra.mxu0 0.0
  %542 = vmatprep.subr.mxu0 0.0
  %543 = vmatpush2.msra.mxu0 0.0
  %544 = vmatprep.subr.mxu0 0.0
  %545 = vmatpush2.msra.mxu0 0.0
  %546 = vmatprep.subr.mxu0 0.0
  %547 = vmatpush2.msra.mxu0 0.0
  %548 = vmatprep.subr.mxu0 0.0
  %549 = vmatpush2.msra.mxu0 0.0
  %550 = vmatprep.subr.mxu0 0.0
  %551 = vmatpush2.msra.mxu0 0.0
  %552 = vmatprep.subr.mxu0 0.0
  %553 = vmatpush2.msra.mxu0 0.0
  %554 = vmatprep.subr.mxu0 0.0
  %555 = vmatpush2.msra.mxu0 0.0
  %556 = vmatprep.subr.mxu0 0.0
  %557 = vmatpush2.msra.mxu0 0.0
  %558 = vmatprep.subr.mxu0 0.0
  %559 = vmatpush2.msra.mxu0 0.0
  %560 = vmatprep.subr.mxu0 0.0
  %561 = vmatpush2.msra.mxu0 0.0
  %562 = vmatprep.subr.mxu0 0.0
  %563 = vmatpush2.msra.mxu0 0.0
  %564 = vmatprep.subr.mxu0 0.0
  %565 = vmatpush2.msra.mxu0 0.0
  %566 = vmatprep.subr.mxu0 0.0
  %567 = vmatpush2.msra.mxu0 0.0
  %568 = vmatprep.subr.mxu0 0.0
  %569 = vmatpush2.msra.mxu0 0.0
  %570 = vmatprep.mubr.f32.mxu0 0.0
  %571 = vmatmul.mubr.f32.gmra.mxu0 %v488
  %v572 = vpop.f32.mrf.mxu0
  %v573 = vadd.f32 0.0, %v572
  %v574 = vpop.f32.mrf.mxu0
  %575 = vmatprep.mubr.f32.mxu0 0.0
  %576 = vmatmul.mubr.f32.gmra.mxu0 %v489
  %v577 = vpop.f32.mrf.mxu0
  %v578 = vadd.f32 0.0, %v577
  %v579 = vpop.f32.mrf.mxu0
  %580 = vdwg.mxu0
  %v581 = vld [vmem:[%s9] sm:$0xff]
  %v582 = vld [vmem:[%s9 + $0x8] sm:$0xff]
  %v583 = vld [vmem:[%s9 + $0x10] sm:$0xff]
  %v584 = vld [vmem:[%s9 + $0x18] sm:$0xff]
  %v585 = vld [vmem:[%s9 + $0x20] sm:$0xff]
  %v586 = vld [vmem:[%s9 + $0x28] sm:$0xff]
  %v587 = vld [vmem:[%s9 + $0x30] sm:$0xff]
  %v588 = vld [vmem:[%s9 + $0x38] sm:$0xff]
  %v589 = vld [vmem:[%s9 + $0x40] sm:$0xff]
  %v590 = vld [vmem:[%s9 + $0x48] sm:$0xff]
  %v591 = vld [vmem:[%s9 + $0x50] sm:$0xff]
  %v592 = vld [vmem:[%s9 + $0x58] sm:$0xff]
  %v593 = vld [vmem:[%s9 + $0x60] sm:$0xff]
  %v594 = vld [vmem:[%s9 + $0x68] sm:$0xff]
  %v595 = vld [vmem:[%s9 + $0x70] sm:$0xff]
  %v596 = vld [vmem:[%s9 + $0x78] sm:$0xff]
  %597 = vmatprep.subr.mxu0 0.0
  %598 = vmatpush1.msra.mxu0 %v596
  %599 = vmatprep.subr.mxu0 0.0
  %600 = vmatpush1.msra.mxu0 %v595
  %601 = vmatprep.subr.mxu0 0.0
  %602 = vmatpush1.msra.mxu0 %v594
  %603 = vmatprep.subr.mxu0 0.0
  %604 = vmatpush1.msra.mxu0 %v593
  %605 = vmatprep.subr.mxu0 0.0
  %606 = vmatpush1.msra.mxu0 %v592
  %607 = vmatprep.subr.mxu0 0.0
  %608 = vmatpush1.msra.mxu0 %v591
  %609 = vmatprep.subr.mxu0 0.0
  %610 = vmatpush1.msra.mxu0 %v590
  %611 = vmatprep.subr.mxu0 0.0
  %612 = vmatpush1.msra.mxu0 %v589
  %613 = vmatprep.subr.mxu0 0.0
  %614 = vmatpush1.msra.mxu0 %v588
  %615 = vmatprep.subr.mxu0 0.0
  %616 = vmatpush1.msra.mxu0 %v587
  %617 = vmatprep.subr.mxu0 0.0
  %618 = vmatpush1.msra.mxu0 %v586
  %619 = vmatprep.subr.mxu0 0.0
  %620 = vmatpush1.msra.mxu0 %v585
  %621 = vmatprep.subr.mxu0 0.0
  %622 = vmatpush1.msra.mxu0 %v584
  %623 = vmatprep.subr.mxu0 0.0
  %624 = vmatpush1.msra.mxu0 %v583
  %625 = vmatprep.subr.mxu0 0.0
  %626 = vmatpush1.msra.mxu0 %v582
  %627 = vmatprep.subr.mxu0 0.0
  %628 = vmatpush1.msra.mxu0 %v581
  %629 = vmatprep.subr.mxu0 0.0
  %630 = vmatpush2.msra.mxu0 0.0
  %631 = vmatprep.subr.mxu0 0.0
  %632 = vmatpush2.msra.mxu0 0.0
  %633 = vmatprep.subr.mxu0 0.0
  %634 = vmatpush2.msra.mxu0 0.0
  %635 = vmatprep.subr.mxu0 0.0
  %636 = vmatpush2.msra.mxu0 0.0
  %637 = vmatprep.subr.mxu0 0.0
  %638 = vmatpush2.msra.mxu0 0.0
  %639 = vmatprep.subr.mxu0 0.0
  %640 = vmatpush2.msra.mxu0 0.0
  %641 = vmatprep.subr.mxu0 0.0
  %642 = vmatpush2.msra.mxu0 0.0
  %643 = vmatprep.subr.mxu0 0.0
  %644 = vmatpush2.msra.mxu0 0.0
  %645 = vmatprep.subr.mxu0 0.0
  %646 = vmatpush2.msra.mxu0 0.0
  %647 = vmatprep.subr.mxu0 0.0
  %648 = vmatpush2.msra.mxu0 0.0
  %649 = vmatprep.subr.mxu0 0.0
  %650 = vmatpush2.msra.mxu0 0.0
  %651 = vmatprep.subr.mxu0 0.0
  %652 = vmatpush2.msra.mxu0 0.0
  %653 = vmatprep.subr.mxu0 0.0
  %654 = vmatpush2.msra.mxu0 0.0
  %655 = vmatprep.subr.mxu0 0.0
  %656 = vmatpush2.msra.mxu0 0.0
  %657 = vmatprep.subr.mxu0 0.0
  %658 = vmatpush2.msra.mxu0 0.0
  %659 = vmatprep.subr.mxu0 0.0
  %660 = vmatpush2.msra.mxu0 0.0
  %661 = vmatprep.mubr.f32.mxu0 0.0
  %662 = vmatmul.mubr.f32.gmra.mxu0 %v573
  %v663 = vpop.f32.mrf.mxu0
  %v664 = vadd.f32 0.0, %v663
  %v665 = vpop.f32.mrf.mxu0
  %666 = vmatprep.mubr.f32.mxu0 0.0
  %667 = vmatmul.mubr.f32.gmra.mxu0 %v578
  %v668 = vpop.f32.mrf.mxu0
  %v669 = vadd.f32 0.0, %v668
  %v670 = vpop.f32.mrf.mxu0
  %671 = vdwg.mxu0
  %v672 = vmax.f32 %v664, 1e-24
  %v673 = vmax.f32 %v669, 1e-24
  %v674 = vrsqrt.pop %v672
  %v675 = vrsqrt.pop %v673
  %v676 = vmul.f32 %v480, %v674
  %v677 = vmul.f32 %v485, %v675
  %v678 = vmax.f32 %v676, 0.0
  %v679 = vmax.f32 %v677, 0.0
  %v680 = vlaneseq
  %v681 = vand.u32 %v680, 127
  %vm682 = vcmp.eq.s32.totalorder %v681, 96
  %v683 = vsel %vm682, 1.0, %v678
  %v684 = vsel %vm682, 1.0, %v679
  %v685 = vld [vmem:[%s10] sm:$0xf]
  %v686 = vld [vmem:[%s10 + $0x4] sm:$0x3]
  %v687 = vunpack.c.l.bf16 %v685
  %v688 = vunpack.c.l.bf16 %v686
  %v689 = vld [vmem:[%s11] sm:$0x7]
  %v690 = vunpack.c.l.bf16 %v689
  %v691 = vld [vmem:[%s12] sm:$0xff]
  %v692 = vld [vmem:[%s12 + $0x8] sm:$0xf]
  %v693 = vmax.f32 %v691, 0.0
  %v694 = vmax.f32 %v692, 0.0
  %v695 = vld [vmem:[%s13] sm:$0x7]
  %v696 = vld [vmem:[#allocation3] sm:$0x1]
  %v698 = vlaneseq
  %v699 = vshrl.u32 %v698, 7
  %v700 = vsub.s32 0, %v699
  %v701 = vrot.slane %v696, %v700
  %v704 = vsel %vm91, %v693, 0
  %v707 = vsel %vm91, %v694, 0
  %v710 = vsel %vm101, %v695, 0
  %712 = vmatprep.subr.mxu0 0.0
  %713 = vmatpush1.msra.mxu0 0.0
  %714 = vmatprep.subr.mxu0 0.0
  %715 = vmatpush1.msra.mxu0 0.0
  %716 = vmatprep.subr.mxu0 0.0
  %717 = vmatpush1.msra.mxu0 0.0
  %718 = vmatprep.subr.mxu0 0.0
  %719 = vmatpush1.msra.mxu0 0.0
  %720 = vmatprep.subr.mxu0 0.0
  %721 = vmatpush1.msra.mxu0 0.0
  %722 = vmatprep.subr.mxu0 0.0
  %723 = vmatpush1.msra.mxu0 0.0
  %724 = vmatprep.subr.mxu0 0.0
  %725 = vmatpush1.msra.mxu0 0.0
  %726 = vmatprep.subr.mxu0 0.0
  %727 = vmatpush1.msra.mxu0 0.0
  %728 = vmatprep.subr.mxu0 0.0
  %729 = vmatpush1.msra.mxu0 0.0
  %730 = vmatprep.subr.mxu0 0.0
  %731 = vmatpush1.msra.mxu0 0.0
  %732 = vmatprep.subr.mxu0 0.0
  %733 = vmatpush1.msra.mxu0 0.0
  %734 = vmatprep.subr.mxu0 0.0
  %735 = vmatpush1.msra.mxu0 0.0
  %736 = vmatprep.subr.mxu0 0.0
  %737 = vmatpush1.msra.mxu0 0.0
  %738 = vmatprep.subr.mxu0 0.0
  %739 = vmatpush1.msra.mxu0 0.0
  %740 = vmatprep.subr.mxu0 0.0
  %741 = vmatpush1.msra.mxu0 0.0
  %742 = vmatprep.subr.mxu0 0.0
  %743 = vmatpush1.msra.mxu0 %v710
  %744 = vmatprep.subr.mxu0 0.0
  %745 = vmatpush2.msra.mxu0 0.0
  %746 = vmatprep.subr.mxu0 0.0
  %747 = vmatpush2.msra.mxu0 0.0
  %748 = vmatprep.subr.mxu0 0.0
  %749 = vmatpush2.msra.mxu0 0.0
  %750 = vmatprep.subr.mxu0 0.0
  %751 = vmatpush2.msra.mxu0 0.0
  %752 = vmatprep.subr.mxu0 0.0
  %753 = vmatpush2.msra.mxu0 0.0
  %754 = vmatprep.subr.mxu0 0.0
  %755 = vmatpush2.msra.mxu0 0.0
  %756 = vmatprep.subr.mxu0 0.0
  %757 = vmatpush2.msra.mxu0 0.0
  %758 = vmatprep.subr.mxu0 0.0
  %759 = vmatpush2.msra.mxu0 0.0
  %760 = vmatprep.subr.mxu0 0.0
  %761 = vmatpush2.msra.mxu0 0.0
  %762 = vmatprep.subr.mxu0 0.0
  %763 = vmatpush2.msra.mxu0 0.0
  %764 = vmatprep.subr.mxu0 0.0
  %765 = vmatpush2.msra.mxu0 0.0
  %766 = vmatprep.subr.mxu0 0.0
  %767 = vmatpush2.msra.mxu0 0.0
  %768 = vmatprep.subr.mxu0 0.0
  %769 = vmatpush2.msra.mxu0 0.0
  %770 = vmatprep.subr.mxu0 0.0
  %771 = vmatpush2.msra.mxu0 0.0
  %772 = vmatprep.subr.mxu0 0.0
  %773 = vmatpush2.msra.mxu0 0.0
  %774 = vmatprep.subr.mxu0 0.0
  %775 = vmatpush2.msra.mxu0 0.0
  %776 = vmatprep.mubr.f32.mxu0 0.0
  %777 = vmatmul.mubr.f32.gmra.mxu0 %v704
  %v778 = vpop.f32.mrf.mxu0
  %v779 = vadd.f32 %v701, %v778
  %v780 = vpop.f32.mrf.mxu0
  %781 = vmatprep.mubr.f32.mxu0 0.0
  %782 = vmatmul.mubr.f32.gmra.mxu0 %v707
  %v783 = vpop.f32.mrf.mxu0
  %v784 = vadd.f32 %v701, %v783
  %v785 = vpop.f32.mrf.mxu0
  %786 = vdwg.mxu0
  %v787 = vxor.u32 %v779, 2147483648
  %v788 = vxor.u32 %v784, 2147483648
  %v789 = vmul.f32 %v787, 1.442695
  %v790 = vpow.pop %v789
  %v791 = vmul.f32 %v788, 1.442695
  %v792 = vpow.pop %v791
  %v793 = vadd.f32 %v790, 1.0
  %v794 = vadd.f32 %v792, 1.0
  %v795 = vrcp.pop %v793
  %v796 = vmul.f32 1.0, %v795
  %v797 = vrcp.pop %v794
  %v798 = vmul.f32 1.0, %v797
  %vm799 = vcmask 80896
  %v801 = vsel %vm799, %v687, 0
  %v804 = vsel %vm799, %v688, 0
  %vm806 = vcmask 1041408
  %v808 = vsel %vm806, %v684, 0
  %810 = vmatprep.subr.mxu0 0.0
  %811 = vmatpush1.msra.mxu0 0.0
  %812 = vmatprep.subr.mxu0 0.0
  %813 = vmatpush1.msra.mxu0 0.0
  %814 = vmatprep.subr.mxu0 0.0
  %815 = vmatpush1.msra.mxu0 0.0
  %816 = vmatprep.subr.mxu0 0.0
  %817 = vmatpush1.msra.mxu0 0.0
  %818 = vmatprep.subr.mxu0 0.0
  %819 = vmatpush1.msra.mxu0 0.0
  %820 = vmatprep.subr.mxu0 0.0
  %821 = vmatpush1.msra.mxu0 0.0
  %822 = vmatprep.subr.mxu0 0.0
  %823 = vmatpush1.msra.mxu0 0.0
  %824 = vmatprep.subr.mxu0 0.0
  %825 = vmatpush1.msra.mxu0 0.0
  %826 = vmatprep.subr.mxu0 0.0
  %827 = vmatpush1.msra.mxu0 0.0
  %828 = vmatprep.subr.mxu0 0.0
  %829 = vmatpush1.msra.mxu0 0.0
  %830 = vmatprep.subr.mxu0 0.0
  %831 = vmatpush1.msra.mxu0 0.0
  %832 = vmatprep.subr.mxu0 0.0
  %833 = vmatpush1.msra.mxu0 0.0
  %834 = vmatprep.subr.mxu0 0.0
  %835 = vmatpush1.msra.mxu0 0.0
  %836 = vmatprep.subr.mxu0 0.0
  %837 = vmatpush1.msra.mxu0 0.0
  %838 = vmatprep.subr.mxu0 0.0
  %839 = vmatpush1.msra.mxu0 %v808
  %840 = vmatprep.subr.mxu0 0.0
  %841 = vmatpush1.msra.mxu0 %v683
  %842 = vmatprep.subr.mxu0 0.0
  %843 = vmatpush2.msra.mxu0 0.0
  %844 = vmatprep.subr.mxu0 0.0
  %845 = vmatpush2.msra.mxu0 0.0
  %846 = vmatprep.subr.mxu0 0.0
  %847 = vmatpush2.msra.mxu0 0.0
  %848 = vmatprep.subr.mxu0 0.0
  %849 = vmatpush2.msra.mxu0 0.0
  %850 = vmatprep.subr.mxu0 0.0
  %851 = vmatpush2.msra.mxu0 0.0
  %852 = vmatprep.subr.mxu0 0.0
  %853 = vmatpush2.msra.mxu0 0.0
  %854 = vmatprep.subr.mxu0 0.0
  %855 = vmatpush2.msra.mxu0 0.0
  %856 = vmatprep.subr.mxu0 0.0
  %857 = vmatpush2.msra.mxu0 0.0
  %858 = vmatprep.subr.mxu0 0.0
  %859 = vmatpush2.msra.mxu0 0.0
  %860 = vmatprep.subr.mxu0 0.0
  %861 = vmatpush2.msra.mxu0 0.0
  %862 = vmatprep.subr.mxu0 0.0
  %863 = vmatpush2.msra.mxu0 0.0
  %864 = vmatprep.subr.mxu0 0.0
  %865 = vmatpush2.msra.mxu0 0.0
  %866 = vmatprep.subr.mxu0 0.0
  %867 = vmatpush2.msra.mxu0 0.0
  %868 = vmatprep.subr.mxu0 0.0
  %869 = vmatpush2.msra.mxu0 0.0
  %870 = vmatprep.subr.mxu0 0.0
  %871 = vmatpush2.msra.mxu0 0.0
  %872 = vmatprep.subr.mxu0 0.0
  %873 = vmatpush2.msra.mxu0 0.0
  %874 = vmatprep.mubr.f32.mxu0 0.0
  %875 = vmatmul.mubr.f32.gmra.mxu0 %v801
  %v876 = vpop.f32.mrf.mxu0
  %v877 = vadd.f32 0.0, %v876
  %v878 = vpop.f32.mrf.mxu0
  %879 = vmatprep.mubr.f32.mxu0 0.0
  %880 = vmatmul.mubr.f32.gmra.mxu0 %v804
  %v881 = vpop.f32.mrf.mxu0
  %v882 = vadd.f32 0.0, %v881
  %v883 = vpop.f32.mrf.mxu0
  %884 = vdwg.mxu0
  %886 = vset.pattern.permute.xlu0 0
  %887 = vperm.xlu0 %886, %v796
  %v888 = vpop.permute.xlu0 %887
  %891 = vset.pattern.permute.xlu0 0
  %892 = vperm.xlu0 %891, %v798
  %v893 = vpop.permute.xlu0 %892
  %v895 = vmul.f32 %v877, %v888
  %v896 = vmul.f32 %v882, %v893
  %vm897 = vcmask 97280
  %v899 = vsel %vm897, %v690, 0
  %v902 = vsel %vm318, %v896, 0
  %904 = vmatprep.subr.mxu0 0.0
  %905 = vmatpush1.msra.mxu0 0.0
  %906 = vmatprep.subr.mxu0 0.0
  %907 = vmatpush1.msra.mxu0 0.0
  %908 = vmatprep.subr.mxu0 0.0
  %909 = vmatpush1.msra.mxu0 0.0
  %910 = vmatprep.subr.mxu0 0.0
  %911 = vmatpush1.msra.mxu0 0.0
  %912 = vmatprep.subr.mxu0 0.0
  %913 = vmatpush1.msra.mxu0 0.0
  %914 = vmatprep.subr.mxu0 0.0
  %915 = vmatpush1.msra.mxu0 0.0
  %916 = vmatprep.subr.mxu0 0.0
  %917 = vmatpush1.msra.mxu0 0.0
  %918 = vmatprep.subr.mxu0 0.0
  %919 = vmatpush1.msra.mxu0 0.0
  %920 = vmatprep.subr.mxu0 0.0
  %921 = vmatpush1.msra.mxu0 0.0
  %922 = vmatprep.subr.mxu0 0.0
  %923 = vmatpush1.msra.mxu0 0.0
  %924 = vmatprep.subr.mxu0 0.0
  %925 = vmatpush1.msra.mxu0 0.0
  %926 = vmatprep.subr.mxu0 0.0
  %927 = vmatpush1.msra.mxu0 0.0
  %928 = vmatprep.subr.mxu0 0.0
  %929 = vmatpush1.msra.mxu0 0.0
  %930 = vmatprep.subr.mxu0 0.0
  %931 = vmatpush1.msra.mxu0 0.0
  %932 = vmatprep.subr.mxu0 0.0
  %933 = vmatpush1.msra.mxu0 %v902
  %934 = vmatprep.subr.mxu0 0.0
  %935 = vmatpush1.msra.mxu0 %v895
  %936 = vmatprep.subr.mxu0 0.0
  %937 = vmatpush2.msra.mxu0 0.0
  %938 = vmatprep.subr.mxu0 0.0
  %939 = vmatpush2.msra.mxu0 0.0
  %940 = vmatprep.subr.mxu0 0.0
  %941 = vmatpush2.msra.mxu0 0.0
  %942 = vmatprep.subr.mxu0 0.0
  %943 = vmatpush2.msra.mxu0 0.0
  %944 = vmatprep.subr.mxu0 0.0
  %945 = vmatpush2.msra.mxu0 0.0
  %946 = vmatprep.subr.mxu0 0.0
  %947 = vmatpush2.msra.mxu0 0.0
  %948 = vmatprep.subr.mxu0 0.0
  %949 = vmatpush2.msra.mxu0 0.0
  %950 = vmatprep.subr.mxu0 0.0
  %951 = vmatpush2.msra.mxu0 0.0
  %952 = vmatprep.subr.mxu0 0.0
  %953 = vmatpush2.msra.mxu0 0.0
  %954 = vmatprep.subr.mxu0 0.0
  %955 = vmatpush2.msra.mxu0 0.0
  %956 = vmatprep.subr.mxu0 0.0
  %957 = vmatpush2.msra.mxu0 0.0
  %958 = vmatprep.subr.mxu0 0.0
  %959 = vmatpush2.msra.mxu0 0.0
  %960 = vmatprep.subr.mxu0 0.0
  %961 = vmatpush2.msra.mxu0 0.0
  %962 = vmatprep.subr.mxu0 0.0
  %963 = vmatpush2.msra.mxu0 0.0
  %964 = vmatprep.subr.mxu0 0.0
  %965 = vmatpush2.msra.mxu0 0.0
  %966 = vmatprep.subr.mxu0 0.0
  %967 = vmatpush2.msra.mxu0 0.0
  %968 = vmatprep.mubr.f32.mxu0 0.0
  %969 = vmatmul.mubr.f32.gmra.mxu0 %v899
  %v970 = vpop.f32.mrf.mxu0
  %v971 = vadd.f32 0.0, %v970
  %v972 = vpop.f32.mrf.mxu0
  %973 = vdwg.mxu0
  %v974 = vld [vmem:[%s15] sm:$0xff]
  %v975 = vld [vmem:[%s15 + $0x8] sm:$0xff]
  %v976 = vld [vmem:[%s15 + $0x10] sm:$0xff]
  %v977 = vld [vmem:[%s15 + $0x18] sm:$0xff]
  %v978 = vld [vmem:[%s15 + $0x20] sm:$0xff]
  %v979 = vld [vmem:[%s15 + $0x28] sm:$0xff]
  %v980 = vld [vmem:[%s15 + $0x30] sm:$0xff]
  %v981 = vld [vmem:[%s15 + $0x38] sm:$0xff]
  %v982 = vld [vmem:[%s15 + $0x40] sm:$0xff]
  %v983 = vld [vmem:[%s15 + $0x48] sm:$0xff]
  %v984 = vld [vmem:[%s15 + $0x50] sm:$0xff]
  %v985 = vld [vmem:[%s15 + $0x58] sm:$0xff]
  %v986 = vld [vmem:[%s15 + $0x60] sm:$0xff]
  %v987 = vld [vmem:[%s15 + $0x68] sm:$0xff]
  %v988 = vld [vmem:[%s15 + $0x70] sm:$0xff]
  %v989 = vld [vmem:[%s15 + $0x78] sm:$0xff]
  %990 = vmatprep.subr.mxu0 0.0
  %991 = vmatpush1.msra.mxu0 %v989
  %992 = vmatprep.subr.mxu0 0.0
  %993 = vmatpush1.msra.mxu0 %v988
  %994 = vmatprep.subr.mxu0 0.0
  %995 = vmatpush1.msra.mxu0 %v987
  %996 = vmatprep.subr.mxu0 0.0
  %997 = vmatpush1.msra.mxu0 %v986
  %998 = vmatprep.subr.mxu0 0.0
  %999 = vmatpush1.msra.mxu0 %v985
  %1000 = vmatprep.subr.mxu0 0.0
  %1001 = vmatpush1.msra.mxu0 %v984
  %1002 = vmatprep.subr.mxu0 0.0
  %1003 = vmatpush1.msra.mxu0 %v983
  %1004 = vmatprep.subr.mxu0 0.0
  %1005 = vmatpush1.msra.mxu0 %v982
  %1006 = vmatprep.subr.mxu0 0.0
  %1007 = vmatpush1.msra.mxu0 %v981
  %1008 = vmatprep.subr.mxu0 0.0
  %1009 = vmatpush1.msra.mxu0 %v980
  %1010 = vmatprep.subr.mxu0 0.0
  %1011 = vmatpush1.msra.mxu0 %v979
  %1012 = vmatprep.subr.mxu0 0.0
  %1013 = vmatpush1.msra.mxu0 %v978
  %1014 = vmatprep.subr.mxu0 0.0
  %1015 = vmatpush1.msra.mxu0 %v977
  %1016 = vmatprep.subr.mxu0 0.0
  %1017 = vmatpush1.msra.mxu0 %v976
  %1018 = vmatprep.subr.mxu0 0.0
  %1019 = vmatpush1.msra.mxu0 %v975
  %1020 = vmatprep.subr.mxu0 0.0
  %1021 = vmatpush1.msra.mxu0 %v974
  %1022 = vmatprep.subr.mxu0 0.0
  %1023 = vmatpush2.msra.mxu0 0.0
  %1024 = vmatprep.subr.mxu0 0.0
  %1025 = vmatpush2.msra.mxu0 0.0
  %1026 = vmatprep.subr.mxu0 0.0
  %1027 = vmatpush2.msra.mxu0 0.0
  %1028 = vmatprep.subr.mxu0 0.0
  %1029 = vmatpush2.msra.mxu0 0.0
  %1030 = vmatprep.subr.mxu0 0.0
  %1031 = vmatpush2.msra.mxu0 0.0
  %1032 = vmatprep.subr.mxu0 0.0
  %1033 = vmatpush2.msra.mxu0 0.0
  %1034 = vmatprep.subr.mxu0 0.0
  %1035 = vmatpush2.msra.mxu0 0.0
  %1036 = vmatprep.subr.mxu0 0.0
  %1037 = vmatpush2.msra.mxu0 0.0
  %1038 = vmatprep.subr.mxu0 0.0
  %1039 = vmatpush2.msra.mxu0 0.0
  %1040 = vmatprep.subr.mxu0 0.0
  %1041 = vmatpush2.msra.mxu0 0.0
  %1042 = vmatprep.subr.mxu0 0.0
  %1043 = vmatpush2.msra.mxu0 0.0
  %1044 = vmatprep.subr.mxu0 0.0
  %1045 = vmatpush2.msra.mxu0 0.0
  %1046 = vmatprep.subr.mxu0 0.0
  %1047 = vmatpush2.msra.mxu0 0.0
  %1048 = vmatprep.subr.mxu0 0.0
  %1049 = vmatpush2.msra.mxu0 0.0
  %1050 = vmatprep.subr.mxu0 0.0
  %1051 = vmatpush2.msra.mxu0 0.0
  %1052 = vmatprep.subr.mxu0 0.0
  %1053 = vmatpush2.msra.mxu0 0.0
  %1054 = vmatprep.mubr.f32.mxu0 0.0
  %1055 = vmatmul.mubr.f32.gmra.mxu0 %v971
  %v1056 = vpop.f32.mrf.mxu0
  %v1057 = vadd.f32 0.0, %v1056
  %v1058 = vpop.f32.mrf.mxu0
  %1059 = vdwg.mxu0
  %v1060 = vmul.f32 %v1057, %v1057
  %v1061 = vld [vmem:[%s16] sm:$0xff]
  %v1062 = vld [vmem:[%s16 + $0x8] sm:$0xff]
  %v1063 = vld [vmem:[%s16 + $0x10] sm:$0xff]
  %v1064 = vld [vmem:[%s16 + $0x18] sm:$0xff]
  %v1065 = vld [vmem:[%s16 + $0x20] sm:$0xff]
  %v1066 = vld [vmem:[%s16 + $0x28] sm:$0xff]
  %v1067 = vld [vmem:[%s16 + $0x30] sm:$0xff]
  %v1068 = vld [vmem:[%s16 + $0x38] sm:$0xff]
  %v1069 = vld [vmem:[%s16 + $0x40] sm:$0xff]
  %v1070 = vld [vmem:[%s16 + $0x48] sm:$0xff]
  %v1071 = vld [vmem:[%s16 + $0x50] sm:$0xff]
  %v1072 = vld [vmem:[%s16 + $0x58] sm:$0xff]
  %v1073 = vld [vmem:[%s16 + $0x60] sm:$0xff]
  %v1074 = vld [vmem:[%s16 + $0x68] sm:$0xff]
  %v1075 = vld [vmem:[%s16 + $0x70] sm:$0xff]
  %v1076 = vld [vmem:[%s16 + $0x78] sm:$0xff]
  %1077 = vmatprep.subr.mxu0 0.0
  %1078 = vmatpush1.msra.mxu0 %v1076
  %1079 = vmatprep.subr.mxu0 0.0
  %1080 = vmatpush1.msra.mxu0 %v1075
  %1081 = vmatprep.subr.mxu0 0.0
  %1082 = vmatpush1.msra.mxu0 %v1074
  %1083 = vmatprep.subr.mxu0 0.0
  %1084 = vmatpush1.msra.mxu0 %v1073
  %1085 = vmatprep.subr.mxu0 0.0
  %1086 = vmatpush1.msra.mxu0 %v1072
  %1087 = vmatprep.subr.mxu0 0.0
  %1088 = vmatpush1.msra.mxu0 %v1071
  %1089 = vmatprep.subr.mxu0 0.0
  %1090 = vmatpush1.msra.mxu0 %v1070
  %1091 = vmatprep.subr.mxu0 0.0
  %1092 = vmatpush1.msra.mxu0 %v1069
  %1093 = vmatprep.subr.mxu0 0.0
  %1094 = vmatpush1.msra.mxu0 %v1068
  %1095 = vmatprep.subr.mxu0 0.0
  %1096 = vmatpush1.msra.mxu0 %v1067
  %1097 = vmatprep.subr.mxu0 0.0
  %1098 = vmatpush1.msra.mxu0 %v1066
  %1099 = vmatprep.subr.mxu0 0.0
  %1100 = vmatpush1.msra.mxu0 %v1065
  %1101 = vmatprep.subr.mxu0 0.0
  %1102 = vmatpush1.msra.mxu0 %v1064
  %1103 = vmatprep.subr.mxu0 0.0
  %1104 = vmatpush1.msra.mxu0 %v1063
  %1105 = vmatprep.subr.mxu0 0.0
  %1106 = vmatpush1.msra.mxu0 %v1062
  %1107 = vmatprep.subr.mxu0 0.0
  %1108 = vmatpush1.msra.mxu0 %v1061
  %1109 = vmatprep.subr.mxu0 0.0
  %1110 = vmatpush2.msra.mxu0 0.0
  %1111 = vmatprep.subr.mxu0 0.0
  %1112 = vmatpush2.msra.mxu0 0.0
  %1113 = vmatprep.subr.mxu0 0.0
  %1114 = vmatpush2.msra.mxu0 0.0
  %1115 = vmatprep.subr.mxu0 0.0
  %1116 = vmatpush2.msra.mxu0 0.0
  %1117 = vmatprep.subr.mxu0 0.0
  %1118 = vmatpush2.msra.mxu0 0.0
  %1119 = vmatprep.subr.mxu0 0.0
  %1120 = vmatpush2.msra.mxu0 0.0
  %1121 = vmatprep.subr.mxu0 0.0
  %1122 = vmatpush2.msra.mxu0 0.0
  %1123 = vmatprep.subr.mxu0 0.0
  %1124 = vmatpush2.msra.mxu0 0.0
  %1125 = vmatprep.subr.mxu0 0.0
  %1126 = vmatpush2.msra.mxu0 0.0
  %1127 = vmatprep.subr.mxu0 0.0
  %1128 = vmatpush2.msra.mxu0 0.0
  %1129 = vmatprep.subr.mxu0 0.0
  %1130 = vmatpush2.msra.mxu0 0.0
  %1131 = vmatprep.subr.mxu0 0.0
  %1132 = vmatpush2.msra.mxu0 0.0
  %1133 = vmatprep.subr.mxu0 0.0
  %1134 = vmatpush2.msra.mxu0 0.0
  %1135 = vmatprep.subr.mxu0 0.0
  %1136 = vmatpush2.msra.mxu0 0.0
  %1137 = vmatprep.subr.mxu0 0.0
  %1138 = vmatpush2.msra.mxu0 0.0
  %1139 = vmatprep.subr.mxu0 0.0
  %1140 = vmatpush2.msra.mxu0 0.0
  %1141 = vmatprep.mubr.f32.mxu0 0.0
  %1142 = vmatmul.mubr.f32.gmra.mxu0 %v1060
  %v1143 = vpop.f32.mrf.mxu0
  %v1144 = vadd.f32 0.0, %v1143
  %v1145 = vpop.f32.mrf.mxu0
  %1146 = vdwg.mxu0
  %v1147 = vld [vmem:[%s17] sm:$0xff]
  %v1148 = vld [vmem:[%s17 + $0x8] sm:$0xff]
  %v1149 = vld [vmem:[%s17 + $0x10] sm:$0xff]
  %v1150 = vld [vmem:[%s17 + $0x18] sm:$0xff]
  %v1151 = vld [vmem:[%s17 + $0x20] sm:$0xff]
  %v1152 = vld [vmem:[%s17 + $0x28] sm:$0xff]
  %v1153 = vld [vmem:[%s17 + $0x30] sm:$0xff]
  %v1154 = vld [vmem:[%s17 + $0x38] sm:$0xff]
  %v1155 = vld [vmem:[%s17 + $0x40] sm:$0xff]
  %v1156 = vld [vmem:[%s17 + $0x48] sm:$0xff]
  %v1157 = vld [vmem:[%s17 + $0x50] sm:$0xff]
  %v1158 = vld [vmem:[%s17 + $0x58] sm:$0xff]
  %v1159 = vld [vmem:[%s17 + $0x60] sm:$0xff]
  %v1160 = vld [vmem:[%s17 + $0x68] sm:$0xff]
  %v1161 = vld [vmem:[%s17 + $0x70] sm:$0xff]
  %v1162 = vld [vmem:[%s17 + $0x78] sm:$0xff]
  %1163 = vmatprep.subr.mxu0 0.0
  %1164 = vmatpush1.msra.mxu0 %v1162
  %1165 = vmatprep.subr.mxu0 0.0
  %1166 = vmatpush1.msra.mxu0 %v1161
  %1167 = vmatprep.subr.mxu0 0.0
  %1168 = vmatpush1.msra.mxu0 %v1160
  %1169 = vmatprep.subr.mxu0 0.0
  %1170 = vmatpush1.msra.mxu0 %v1159
  %1171 = vmatprep.subr.mxu0 0.0
  %1172 = vmatpush1.msra.mxu0 %v1158
  %1173 = vmatprep.subr.mxu0 0.0
  %1174 = vmatpush1.msra.mxu0 %v1157
  %1175 = vmatprep.subr.mxu0 0.0
  %1176 = vmatpush1.msra.mxu0 %v1156
  %1177 = vmatprep.subr.mxu0 0.0
  %1178 = vmatpush1.msra.mxu0 %v1155
  %1179 = vmatprep.subr.mxu0 0.0
  %1180 = vmatpush1.msra.mxu0 %v1154
  %1181 = vmatprep.subr.mxu0 0.0
  %1182 = vmatpush1.msra.mxu0 %v1153
  %1183 = vmatprep.subr.mxu0 0.0
  %1184 = vmatpush1.msra.mxu0 %v1152
  %1185 = vmatprep.subr.mxu0 0.0
  %1186 = vmatpush1.msra.mxu0 %v1151
  %1187 = vmatprep.subr.mxu0 0.0
  %1188 = vmatpush1.msra.mxu0 %v1150
  %1189 = vmatprep.subr.mxu0 0.0
  %1190 = vmatpush1.msra.mxu0 %v1149
  %1191 = vmatprep.subr.mxu0 0.0
  %1192 = vmatpush1.msra.mxu0 %v1148
  %1193 = vmatprep.subr.mxu0 0.0
  %1194 = vmatpush1.msra.mxu0 %v1147
  %1195 = vmatprep.subr.mxu0 0.0
  %1196 = vmatpush2.msra.mxu0 0.0
  %1197 = vmatprep.subr.mxu0 0.0
  %1198 = vmatpush2.msra.mxu0 0.0
  %1199 = vmatprep.subr.mxu0 0.0
  %1200 = vmatpush2.msra.mxu0 0.0
  %1201 = vmatprep.subr.mxu0 0.0
  %1202 = vmatpush2.msra.mxu0 0.0
  %1203 = vmatprep.subr.mxu0 0.0
  %1204 = vmatpush2.msra.mxu0 0.0
  %1205 = vmatprep.subr.mxu0 0.0
  %1206 = vmatpush2.msra.mxu0 0.0
  %1207 = vmatprep.subr.mxu0 0.0
  %1208 = vmatpush2.msra.mxu0 0.0
  %1209 = vmatprep.subr.mxu0 0.0
  %1210 = vmatpush2.msra.mxu0 0.0
  %1211 = vmatprep.subr.mxu0 0.0
  %1212 = vmatpush2.msra.mxu0 0.0
  %1213 = vmatprep.subr.mxu0 0.0
  %1214 = vmatpush2.msra.mxu0 0.0
  %1215 = vmatprep.subr.mxu0 0.0
  %1216 = vmatpush2.msra.mxu0 0.0
  %1217 = vmatprep.subr.mxu0 0.0
  %1218 = vmatpush2.msra.mxu0 0.0
  %1219 = vmatprep.subr.mxu0 0.0
  %1220 = vmatpush2.msra.mxu0 0.0
  %1221 = vmatprep.subr.mxu0 0.0
  %1222 = vmatpush2.msra.mxu0 0.0
  %1223 = vmatprep.subr.mxu0 0.0
  %1224 = vmatpush2.msra.mxu0 0.0
  %1225 = vmatprep.subr.mxu0 0.0
  %1226 = vmatpush2.msra.mxu0 0.0
  %1227 = vmatprep.mubr.f32.mxu0 0.0
  %1228 = vmatmul.mubr.f32.gmra.mxu0 %v1144
  %v1229 = vpop.f32.mrf.mxu0
  %v1230 = vadd.f32 0.0, %v1229
  %v1231 = vpop.f32.mrf.mxu0
  %1232 = vdwg.mxu0
  %v1233 = vmax.f32 %v1230, 1e-24
  %v1234 = vrsqrt.pop %v1233
  %v1235 = vmul.f32 %v1057, %v1234
  %v1236 = vmax.f32 %v1235, 0.0
  %1237 = vst [vmem:[%s18] sm:$0x3f] %v1236
  %v1238 = vld [vmem:[%s1] sm:$0xff]
  %v1239 = vld [vmem:[%s1 + $0x8] sm:$0x3]
  %v1241 = vsel %vm806, %v1239, 0
  %1243 = vmatprep.subr.mxu0 0.0
  %1244 = vmatpush1.msra.mxu0 0.0
  %1245 = vmatprep.subr.mxu0 0.0
  %1246 = vmatpush1.msra.mxu0 0.0
  %1247 = vmatprep.subr.mxu0 0.0
  %1248 = vmatpush1.msra.mxu0 0.0
  %1249 = vmatprep.subr.mxu0 0.0
  %1250 = vmatpush1.msra.mxu0 0.0
  %1251 = vmatprep.subr.mxu0 0.0
  %1252 = vmatpush1.msra.mxu0 0.0
  %1253 = vmatprep.subr.mxu0 0.0
  %1254 = vmatpush1.msra.mxu0 0.0
  %1255 = vmatprep.subr.mxu0 0.0
  %1256 = vmatpush1.msra.mxu0 0.0
  %1257 = vmatprep.subr.mxu0 0.0
  %1258 = vmatpush1.msra.mxu0 0.0
  %1259 = vmatprep.subr.mxu0 0.0
  %1260 = vmatpush1.msra.mxu0 0.0
  %1261 = vmatprep.subr.mxu0 0.0
  %1262 = vmatpush1.msra.mxu0 0.0
  %1263 = vmatprep.subr.mxu0 0.0
  %1264 = vmatpush1.msra.mxu0 0.0
  %1265 = vmatprep.subr.mxu0 0.0
  %1266 = vmatpush1.msra.mxu0 0.0
  %1267 = vmatprep.subr.mxu0 0.0
  %1268 = vmatpush1.msra.mxu0 0.0
  %1269 = vmatprep.subr.mxu0 0.0
  %1270 = vmatpush1.msra.mxu0 0.0
  %1271 = vmatprep.subr.mxu0 0.0
  %1272 = vmatpush1.msra.mxu0 %v1241
  %1273 = vmatprep.subr.mxu0 0.0
  %1274 = vmatpush1.msra.mxu0 %v1238
  %1275 = vmatprep.subr.mxu0 0.0
  %1276 = vmatpush2.msra.mxu0 0.0
  %1277 = vmatprep.subr.mxu0 0.0
  %1278 = vmatpush2.msra.mxu0 0.0
  %1279 = vmatprep.subr.mxu0 0.0
  %1280 = vmatpush2.msra.mxu0 0.0
  %1281 = vmatprep.subr.mxu0 0.0
  %1282 = vmatpush2.msra.mxu0 0.0
  %1283 = vmatprep.subr.mxu0 0.0
  %1284 = vmatpush2.msra.mxu0 0.0
  %1285 = vmatprep.subr.mxu0 0.0
  %1286 = vmatpush2.msra.mxu0 0.0
  %1287 = vmatprep.subr.mxu0 0.0
  %1288 = vmatpush2.msra.mxu0 0.0
  %1289 = vmatprep.subr.mxu0 0.0
  %1290 = vmatpush2.msra.mxu0 0.0
  %1291 = vmatprep.subr.mxu0 0.0
  %1292 = vmatpush2.msra.mxu0 0.0
  %1293 = vmatprep.subr.mxu0 0.0
  %1294 = vmatpush2.msra.mxu0 0.0
  %1295 = vmatprep.subr.mxu0 0.0
  %1296 = vmatpush2.msra.mxu0 0.0
  %1297 = vmatprep.subr.mxu0 0.0
  %1298 = vmatpush2.msra.mxu0 0.0
  %1299 = vmatprep.subr.mxu0 0.0
  %1300 = vmatpush2.msra.mxu0 0.0
  %1301 = vmatprep.subr.mxu0 0.0
  %1302 = vmatpush2.msra.mxu0 0.0
  %1303 = vmatprep.subr.mxu0 0.0
  %1304 = vmatpush2.msra.mxu0 0.0
  %1305 = vmatprep.subr.mxu0 0.0
  %1306 = vmatpush2.msra.mxu0 0.0
  %1307 = vmatprep.mubr.f32.mxu0 0.0
  %1308 = vmatmul.mubr.f32.gmra.mxu0 %v801
  %v1309 = vpop.f32.mrf.mxu0
  %v1310 = vadd.f32 0.0, %v1309
  %v1311 = vpop.f32.mrf.mxu0
  %1312 = vmatprep.mubr.f32.mxu0 0.0
  %1313 = vmatmul.mubr.f32.gmra.mxu0 %v804
  %v1314 = vpop.f32.mrf.mxu0
  %v1315 = vadd.f32 0.0, %v1314
  %v1316 = vpop.f32.mrf.mxu0
  %1317 = vdwg.mxu0
  %v1319 = vsel %vm318, %v1315, 0
  %1321 = vmatprep.subr.mxu0 0.0
  %1322 = vmatpush1.msra.mxu0 0.0
  %1323 = vmatprep.subr.mxu0 0.0
  %1324 = vmatpush1.msra.mxu0 0.0
  %1325 = vmatprep.subr.mxu0 0.0
  %1326 = vmatpush1.msra.mxu0 0.0
  %1327 = vmatprep.subr.mxu0 0.0
  %1328 = vmatpush1.msra.mxu0 0.0
  %1329 = vmatprep.subr.mxu0 0.0
  %1330 = vmatpush1.msra.mxu0 0.0
  %1331 = vmatprep.subr.mxu0 0.0
  %1332 = vmatpush1.msra.mxu0 0.0
  %1333 = vmatprep.subr.mxu0 0.0
  %1334 = vmatpush1.msra.mxu0 0.0
  %1335 = vmatprep.subr.mxu0 0.0
  %1336 = vmatpush1.msra.mxu0 0.0
  %1337 = vmatprep.subr.mxu0 0.0
  %1338 = vmatpush1.msra.mxu0 0.0
  %1339 = vmatprep.subr.mxu0 0.0
  %1340 = vmatpush1.msra.mxu0 0.0
  %1341 = vmatprep.subr.mxu0 0.0
  %1342 = vmatpush1.msra.mxu0 0.0
  %1343 = vmatprep.subr.mxu0 0.0
  %1344 = vmatpush1.msra.mxu0 0.0
  %1345 = vmatprep.subr.mxu0 0.0
  %1346 = vmatpush1.msra.mxu0 0.0
  %1347 = vmatprep.subr.mxu0 0.0
  %1348 = vmatpush1.msra.mxu0 0.0
  %1349 = vmatprep.subr.mxu0 0.0
  %1350 = vmatpush1.msra.mxu0 %v1319
  %1351 = vmatprep.subr.mxu0 0.0
  %1352 = vmatpush1.msra.mxu0 %v1310
  %1353 = vmatprep.subr.mxu0 0.0
  %1354 = vmatpush2.msra.mxu0 0.0
  %1355 = vmatprep.subr.mxu0 0.0
  %1356 = vmatpush2.msra.mxu0 0.0
  %1357 = vmatprep.subr.mxu0 0.0
  %1358 = vmatpush2.msra.mxu0 0.0
  %1359 = vmatprep.subr.mxu0 0.0
  %1360 = vmatpush2.msra.mxu0 0.0
  %1361 = vmatprep.subr.mxu0 0.0
  %1362 = vmatpush2.msra.mxu0 0.0
  %1363 = vmatprep.subr.mxu0 0.0
  %1364 = vmatpush2.msra.mxu0 0.0
  %1365 = vmatprep.subr.mxu0 0.0
  %1366 = vmatpush2.msra.mxu0 0.0
  %1367 = vmatprep.subr.mxu0 0.0
  %1368 = vmatpush2.msra.mxu0 0.0
  %1369 = vmatprep.subr.mxu0 0.0
  %1370 = vmatpush2.msra.mxu0 0.0
  %1371 = vmatprep.subr.mxu0 0.0
  %1372 = vmatpush2.msra.mxu0 0.0
  %1373 = vmatprep.subr.mxu0 0.0
  %1374 = vmatpush2.msra.mxu0 0.0
  %1375 = vmatprep.subr.mxu0 0.0
  %1376 = vmatpush2.msra.mxu0 0.0
  %1377 = vmatprep.subr.mxu0 0.0
  %1378 = vmatpush2.msra.mxu0 0.0
  %1379 = vmatprep.subr.mxu0 0.0
  %1380 = vmatpush2.msra.mxu0 0.0
  %1381 = vmatprep.subr.mxu0 0.0
  %1382 = vmatpush2.msra.mxu0 0.0
  %1383 = vmatprep.subr.mxu0 0.0
  %1384 = vmatpush2.msra.mxu0 0.0
  %1385 = vmatprep.mubr.f32.mxu0 0.0
  %1386 = vmatmul.mubr.f32.gmra.mxu0 %v899
  %v1387 = vpop.f32.mrf.mxu0
  %v1388 = vadd.f32 0.0, %v1387
  %v1389 = vpop.f32.mrf.mxu0
  %1390 = vdwg.mxu0
  %1391 = vst [vmem:[%s19] sm:$0x3f] %v1388
  // Predicated region
  $region74: #{_lambda_.2} parent=0 // pred_check
    _
  $region75: #{_lambda_.2} parent=0 // pred_check_branch
    %1393 = sbr.rel (0) target = $region77
  $region76: #{_lambda_.2} parent=0 // pred_region
    _
  $region77: #{_lambda_.2} parent=0 // pred_fallthru
    _
  // Predicated region
  $region78: #{_lambda_.2} parent=0 // pred_check
    _
  $region79: #{_lambda_.2} parent=0 // pred_check_branch
    %1395 = sbr.rel (0) target = $region81
  $region80: #{_lambda_.2} parent=0 // pred_region
    _
  $region81: #{_lambda_.2} parent=0 // pred_fallthru
    _
  // Predicated region
  $region82: #{_lambda_.2} parent=0 // pred_check
    _
  $region83: #{_lambda_.2} parent=0 // pred_check_branch
    %1397 = sbr.rel (0) target = $region85
  $region84: #{_lambda_.2} parent=0 // pred_region
    _
  $region85: #{_lambda_.2} parent=0 // pred_fallthru
    _
  // Predicated region
  $region86: #{_lambda_.2} parent=0 // pred_check
    _
  $region87: #{_lambda_.2} parent=0 // pred_check_branch
    %1399 = sbr.rel (0) target = $region89
  $region88: #{_lambda_.2} parent=0 // pred_region
    _
  $region89: #{_lambda_.2} parent=0 // pred_fallthru
    _

// kernel: _lambda_.3
$region0: #{_lambda_.3}
  #allocation0 [shape = 'u32[]', space=smem, size = 0x4, offset = 0x4, fixed_abs, tag = 'smem constant byte address 0x4 - core index']
  #allocation1 [shape = 'u32[144,128]{1,0:T(1,128)}', space=vmem, size = 0x12000, scoped, tag = 'internal scratch']
  #allocation2 [shape = 'f32[6,8,128]{2,1,0:T(8,128)}', space=vmem, size = 0x6000, scoped, tag = 'scratch operand']
  %s0 = inlined_call_operand.vmem [shape: f32[6,8,16], index: 0, kind: input, shape index: {}]
  %s1 = inlined_call_operand.vmem [shape: f32[16,128], index: 1, kind: input, shape index: {}]
  %s2 = inlined_call_operand.vmem [shape: f32[32,128], index: 2, kind: input, shape index: {}]
  %s3 = inlined_call_operand.vmem [shape: f32[1,128], index: 3, kind: input, shape index: {}]
  %s4 = inlined_call_operand.vmem [shape: f32[32,128], index: 4, kind: input, shape index: {}]
  %s5 = inlined_call_operand.vmem [shape: f32[32,128], index: 5, kind: input, shape index: {}]
  %s6 = inlined_call_operand.vmem [shape: f32[1,128], index: 6, kind: input, shape index: {}]
  %s7 = inlined_call_operand.vmem [shape: f32[2,8,32], index: 7, kind: input, shape index: {}]
  %s8 = inlined_call_operand.vmem [shape: f32[2,8,32], index: 8, kind: input, shape index: {}]
  %s9 = inlined_call_operand.vmem [shape: f32[8,32], index: 9, kind: output, shape index: {}]
  %s10 = sld [smem:[#allocation0]]
  $region46: #{_lambda_.3} parent=0
    _
  %s12 = ssub.s32 1, %s10
  %s13 = scalar_select 0, %s12, %s10
  // Predicated region
  $region2: #{_lambda_.3} parent=0 // pred_check
    _
  $region3: #{_lambda_.3} parent=0 // pred_check_branch
    %15 = sbr.rel (0) target = $region5
  $region4: #{_lambda_.3} parent=0 // pred_region
    _
  $region5: #{_lambda_.3} parent=0 // pred_fallthru
    _
  // Predicated region
  $region6: #{_lambda_.3} parent=0 // pred_check
    _
  $region7: #{_lambda_.3} parent=0 // pred_check_branch
    %17 = sbr.rel (0) target = $region9
  $region8: #{_lambda_.3} parent=0 // pred_region
    _
  $region9: #{_lambda_.3} parent=0 // pred_fallthru
    _
  // Predicated region
  $region10: #{_lambda_.3} parent=0 // pred_check
    _
  $region11: #{_lambda_.3} parent=0 // pred_check_branch
    %19 = sbr.rel (0) target = $region13
  $region12: #{_lambda_.3} parent=0 // pred_region
    _
  $region13: #{_lambda_.3} parent=0 // pred_fallthru
    _
  // Predicated region
  $region14: #{_lambda_.3} parent=0 // pred_check
    _
  $region15: #{_lambda_.3} parent=0 // pred_check_branch
    %21 = sbr.rel (0) target = $region17
  $region16: #{_lambda_.3} parent=0 // pred_region
    _
  $region17: #{_lambda_.3} parent=0 // pred_fallthru
    _
  // Predicated region
  $region18: #{_lambda_.3} parent=0 // pred_check
    _
  $region19: #{_lambda_.3} parent=0 // pred_check_branch
    %23 = sbr.rel (0) target = $region21
  $region20: #{_lambda_.3} parent=0 // pred_region
    _
  $region21: #{_lambda_.3} parent=0 // pred_fallthru
    _
  // Predicated region
  $region22: #{_lambda_.3} parent=0 // pred_check
    _
  $region23: #{_lambda_.3} parent=0 // pred_check_branch
    %25 = sbr.rel (0) target = $region25
  $region24: #{_lambda_.3} parent=0 // pred_region
    _
  $region25: #{_lambda_.3} parent=0 // pred_fallthru
    _
  // Predicated region
  $region26: #{_lambda_.3} parent=0 // pred_check
    _
  $region27: #{_lambda_.3} parent=0 // pred_check_branch
    %27 = sbr.rel (0) target = $region29
  $region28: #{_lambda_.3} parent=0 // pred_region
    _
  $region29: #{_lambda_.3} parent=0 // pred_fallthru
    _
  // Predicated region
  $region30: #{_lambda_.3} parent=0 // pred_check
    _
  $region31: #{_lambda_.3} parent=0 // pred_check_branch
    %29 = sbr.rel (0) target = $region33
  $region32: #{_lambda_.3} parent=0 // pred_region
    _
  $region33: #{_lambda_.3} parent=0 // pred_fallthru
    _
  // Predicated region
  $region34: #{_lambda_.3} parent=0 // pred_check
    _
  $region35: #{_lambda_.3} parent=0 // pred_check_branch
    %31 = sbr.rel (0) target = $region37
  $region36: #{_lambda_.3} parent=0 // pred_region
    _
  $region37: #{_lambda_.3} parent=0 // pred_fallthru
    _
  %v32 = vld [vmem:[%s0] sm:$0xff]
  %v33 = vld [vmem:[%s0 + $0x8] sm:$0xff]
  %v34 = vld [vmem:[%s0 + $0x10] sm:$0xff]
  %v35 = vld [vmem:[%s0 + $0x18] sm:$0xff]
  %v36 = vld [vmem:[%s0 + $0x20] sm:$0xff]
  %v37 = vld [vmem:[%s0 + $0x28] sm:$0xff]
  %v38 = vld [vmem:[%s1] sm:$0xff]
  %v39 = vld [vmem:[%s1 + $0x8] sm:$0xff]
  %vm40 = vcmask 130048
  %v42 = vsel %vm40, %v32, 0
  %v45 = vsel %vm40, %v33, 0
  %v48 = vsel %vm40, %v34, 0
  %v51 = vsel %vm40, %v35, 0
  %v54 = vsel %vm40, %v36, 0
  %v57 = vsel %vm40, %v37, 0
  %59 = vmatprep.subr.mxu0 0.0
  %60 = vmatpush1.msra.mxu0 0.0
  %61 = vmatprep.subr.mxu0 0.0
  %62 = vmatpush1.msra.mxu0 0.0
  %63 = vmatprep.subr.mxu0 0.0
  %64 = vmatpush1.msra.mxu0 0.0
  %65 = vmatprep.subr.mxu0 0.0
  %66 = vmatpush1.msra.mxu0 0.0
  %67 = vmatprep.subr.mxu0 0.0
  %68 = vmatpush1.msra.mxu0 0.0
  %69 = vmatprep.subr.mxu0 0.0
  %70 = vmatpush1.msra.mxu0 0.0
  %71 = vmatprep.subr.mxu0 0.0
  %72 = vmatpush1.msra.mxu0 0.0
  %73 = vmatprep.subr.mxu0 0.0
  %74 = vmatpush1.msra.mxu0 0.0
  %75 = vmatprep.subr.mxu0 0.0
  %76 = vmatpush1.msra.mxu0 0.0
  %77 = vmatprep.subr.mxu0 0.0
  %78 = vmatpush1.msra.mxu0 0.0
  %79 = vmatprep.subr.mxu0 0.0
  %80 = vmatpush1.msra.mxu0 0.0
  %81 = vmatprep.subr.mxu0 0.0
  %82 = vmatpush1.msra.mxu0 0.0
  %83 = vmatprep.subr.mxu0 0.0
  %84 = vmatpush1.msra.mxu0 0.0
  %85 = vmatprep.subr.mxu0 0.0
  %86 = vmatpush1.msra.mxu0 0.0
  %87 = vmatprep.subr.mxu0 0.0
  %88 = vmatpush1.msra.mxu0 %v39
  %89 = vmatprep.subr.mxu0 0.0
  %90 = vmatpush1.msra.mxu0 %v38
  %91 = vmatprep.subr.mxu0 0.0
  %92 = vmatpush2.msra.mxu0 0.0
  %93 = vmatprep.subr.mxu0 0.0
  %94 = vmatpush2.msra.mxu0 0.0
  %95 = vmatprep.subr.mxu0 0.0
  %96 = vmatpush2.msra.mxu0 0.0
  %97 = vmatprep.subr.mxu0 0.0
  %98 = vmatpush2.msra.mxu0 0.0
  %99 = vmatprep.subr.mxu0 0.0
  %100 = vmatpush2.msra.mxu0 0.0
  %101 = vmatprep.subr.mxu0 0.0
  %102 = vmatpush2.msra.mxu0 0.0
  %103 = vmatprep.subr.mxu0 0.0
  %104 = vmatpush2.msra.mxu0 0.0
  %105 = vmatprep.subr.mxu0 0.0
  %106 = vmatpush2.msra.mxu0 0.0
  %107 = vmatprep.subr.mxu0 0.0
  %108 = vmatpush2.msra.mxu0 0.0
  %109 = vmatprep.subr.mxu0 0.0
  %110 = vmatpush2.msra.mxu0 0.0
  %111 = vmatprep.subr.mxu0 0.0
  %112 = vmatpush2.msra.mxu0 0.0
  %113 = vmatprep.subr.mxu0 0.0
  %114 = vmatpush2.msra.mxu0 0.0
  %115 = vmatprep.subr.mxu0 0.0
  %116 = vmatpush2.msra.mxu0 0.0
  %117 = vmatprep.subr.mxu0 0.0
  %118 = vmatpush2.msra.mxu0 0.0
  %119 = vmatprep.subr.mxu0 0.0
  %120 = vmatpush2.msra.mxu0 0.0
  %121 = vmatprep.subr.mxu0 0.0
  %122 = vmatpush2.msra.mxu0 0.0
  %123 = vmatprep.mubr.f32.mxu0 0.0
  %124 = vmatmul.mubr.f32.gmra.mxu0 %v42
  %v125 = vpop.f32.mrf.mxu0
  %v126 = vadd.f32 0.0, %v125
  %v127 = vpop.f32.mrf.mxu0
  %128 = vmatprep.mubr.f32.mxu0 0.0
  %129 = vmatmul.mubr.f32.gmra.mxu0 %v45
  %v130 = vpop.f32.mrf.mxu0
  %v131 = vadd.f32 0.0, %v130
  %v132 = vpop.f32.mrf.mxu0
  %133 = vmatprep.mubr.f32.mxu0 0.0
  %134 = vmatmul.mubr.f32.gmra.mxu0 %v48
  %v135 = vpop.f32.mrf.mxu0
  %v136 = vadd.f32 0.0, %v135
  %v137 = vpop.f32.mrf.mxu0
  %138 = vmatprep.mubr.f32.mxu0 0.0
  %139 = vmatmul.mubr.f32.gmra.mxu0 %v51
  %v140 = vpop.f32.mrf.mxu0
  %v141 = vadd.f32 0.0, %v140
  %v142 = vpop.f32.mrf.mxu0
  %143 = vmatprep.mubr.f32.mxu0 0.0
  %144 = vmatmul.mubr.f32.gmra.mxu0 %v54
  %v145 = vpop.f32.mrf.mxu0
  %v146 = vadd.f32 0.0, %v145
  %v147 = vpop.f32.mrf.mxu0
  %148 = vmatprep.mubr.f32.mxu0 0.0
  %149 = vmatmul.mubr.f32.gmra.mxu0 %v57
  %v150 = vpop.f32.mrf.mxu0
  %v151 = vadd.f32 0.0, %v150
  %v152 = vpop.f32.mrf.mxu0
  %153 = vdwg.mxu0
  %154 = vst [vmem:[#allocation2] sm:$0xff] %v126
  %155 = vst [vmem:[#allocation2 + $0x8] sm:$0xff] %v131
  %156 = vst [vmem:[#allocation2 + $0x10] sm:$0xff] %v136
  %157 = vst [vmem:[#allocation2 + $0x18] sm:$0xff] %v141
  %158 = vst [vmem:[#allocation2 + $0x20] sm:$0xff] %v146
  %159 = vst [vmem:[#allocation2 + $0x28] sm:$0xff] %v151
  %v160 = vlaneseq
  %v161 = vand.u32 %v160, 127
  %vm162 = vcmp.ge.s32.totalorder %v161, 64
  %vm163 = vcmp.lt.s32.totalorder %v161, 96
  %vm164 = vmand %vm162, %vm163
  %v165 = vld [vmem:[%s2] sm:$0xff]
  %v166 = vld [vmem:[%s2 + $0x8] sm:$0xff]
  %v167 = vld [vmem:[%s2 + $0x10] sm:$0xff]
  %v168 = vld [vmem:[%s2 + $0x18] sm:$0xff]
  %v169 = vld [vmem:[%s3] sm:$0x1]
  %v170 = vld [vmem:[%s4] sm:$0xff]
  %v171 = vld [vmem:[%s4 + $0x8] sm:$0xff]
  %v172 = vld [vmem:[%s4 + $0x10] sm:$0xff]
  %v173 = vld [vmem:[%s4 + $0x18] sm:$0xff]
  %v174 = vld [vmem:[%s5] sm:$0xff]
  %v175 = vld [vmem:[%s5 + $0x8] sm:$0xff]
  %v176 = vld [vmem:[%s5 + $0x10] sm:$0xff]
  %v177 = vld [vmem:[%s5 + $0x18] sm:$0xff]
  %v178 = vld [vmem:[%s6] sm:$0x1]
  %v179 = vld [vmem:[%s7] sm:$0xff]
  %v180 = vld [vmem:[%s8] sm:$0xff]
  %s181 = scalar_lea.vmem %s7, 8
  %v182 = vld [vmem:[%s181] sm:$0xff]
  %s183 = scalar_lea.vmem %s8, 8
  %v184 = vld [vmem:[%s183] sm:$0xff]
  %v185 = vld [vmem:[#allocation2] sm:$0xff]
  %vm186 = vcmask 261120
  %v188 = vsel %vm186, %v179, 0
  %190 = vmatprep.subr.mxu0 0.0
  %191 = vmatpush1.msra.mxu0 0.0
  %192 = vmatprep.subr.mxu0 0.0
  %193 = vmatpush1.msra.mxu0 0.0
  %194 = vmatprep.subr.mxu0 0.0
  %195 = vmatpush1.msra.mxu0 0.0
  %196 = vmatprep.subr.mxu0 0.0
  %197 = vmatpush1.msra.mxu0 0.0
  %198 = vmatprep.subr.mxu0 0.0
  %199 = vmatpush1.msra.mxu0 0.0
  %200 = vmatprep.subr.mxu0 0.0
  %201 = vmatpush1.msra.mxu0 0.0
  %202 = vmatprep.subr.mxu0 0.0
  %203 = vmatpush1.msra.mxu0 0.0
  %204 = vmatprep.subr.mxu0 0.0
  %205 = vmatpush1.msra.mxu0 0.0
  %206 = vmatprep.subr.mxu0 0.0
  %207 = vmatpush1.msra.mxu0 0.0
  %208 = vmatprep.subr.mxu0 0.0
  %209 = vmatpush1.msra.mxu0 0.0
  %210 = vmatprep.subr.mxu0 0.0
  %211 = vmatpush1.msra.mxu0 0.0
  %212 = vmatprep.subr.mxu0 0.0
  %213 = vmatpush1.msra.mxu0 0.0
  %214 = vmatprep.subr.mxu0 0.0
  %215 = vmatpush1.msra.mxu0 %v168
  %216 = vmatprep.subr.mxu0 0.0
  %217 = vmatpush1.msra.mxu0 %v167
  %218 = vmatprep.subr.mxu0 0.0
  %219 = vmatpush1.msra.mxu0 %v166
  %220 = vmatprep.subr.mxu0 0.0
  %221 = vmatpush1.msra.mxu0 %v165
  %222 = vmatprep.subr.mxu0 0.0
  %223 = vmatpush2.msra.mxu0 0.0
  %224 = vmatprep.subr.mxu0 0.0
  %225 = vmatpush2.msra.mxu0 0.0
  %226 = vmatprep.subr.mxu0 0.0
  %227 = vmatpush2.msra.mxu0 0.0
  %228 = vmatprep.subr.mxu0 0.0
  %229 = vmatpush2.msra.mxu0 0.0
  %230 = vmatprep.subr.mxu0 0.0
  %231 = vmatpush2.msra.mxu0 0.0
  %232 = vmatprep.subr.mxu0 0.0
  %233 = vmatpush2.msra.mxu0 0.0
  %234 = vmatprep.subr.mxu0 0.0
  %235 = vmatpush2.msra.mxu0 0.0
  %236 = vmatprep.subr.mxu0 0.0
  %237 = vmatpush2.msra.mxu0 0.0
  %238 = vmatprep.subr.mxu0 0.0
  %239 = vmatpush2.msra.mxu0 0.0
  %240 = vmatprep.subr.mxu0 0.0
  %241 = vmatpush2.msra.mxu0 0.0
  %242 = vmatprep.subr.mxu0 0.0
  %243 = vmatpush2.msra.mxu0 0.0
  %244 = vmatprep.subr.mxu0 0.0
  %245 = vmatpush2.msra.mxu0 0.0
  %246 = vmatprep.subr.mxu0 0.0
  %247 = vmatpush2.msra.mxu0 0.0
  %248 = vmatprep.subr.mxu0 0.0
  %249 = vmatpush2.msra.mxu0 0.0
  %250 = vmatprep.subr.mxu0 0.0
  %251 = vmatpush2.msra.mxu0 0.0
  %252 = vmatprep.subr.mxu0 0.0
  %253 = vmatpush2.msra.mxu0 0.0
  %254 = vmatprep.mubr.f32.mxu0 0.0
  %255 = vmatmul.mubr.f32.gmra.mxu0 %v188
  %v256 = vpop.f32.mrf.mxu0
  %v257 = vadd.f32 0.0, %v256
  %v258 = vpop.f32.mrf.mxu0
  %259 = vdwg.mxu0
  %v260 = vadd.f32 %v185, %v257
  %v262 = vlaneseq
  %v263 = vshrl.u32 %v262, 7
  %v264 = vsub.s32 0, %v263
  %v265 = vrot.slane %v169, %v264
  %v267 = vadd.f32 %v260, %v265
  %v268 = vmul.f32 %v267, 0.5
  %v269 = vsel %vm164, %v267, %v268
  %v270 = vtanh.pop %v269
  %v271 = vmul.f32 %v270, 0.5
  %v272 = vadd.f32 %v271, 0.5
  %v273 = vsel %vm164, %v270, %v272
  %275 = vrot.lane.b32.xlu0 %v180, 32
  %v276 = vpop.permute.xlu0 %275
  %v278 = vmul.f32 %v273, %v276
  %280 = vrot.lane.b32.xlu0 %v273, 64
  %v281 = vpop.permute.xlu0 %280
  %v283 = vmul.f32 %v273, %v281
  %285 = vrot.lane.b32.xlu0 %v283, 32
  %v286 = vpop.permute.xlu0 %285
  %v288 = vadd.f32 %v278, %v286
  %v289 = vtanh.pop %v288
  %291 = vrot.lane.b32.xlu0 %v289, 64
  %v292 = vpop.permute.xlu0 %291
  %v294 = vmul.f32 %v273, %v292
  %v296 = vsel %vm186, %v182, 0
  %298 = vmatprep.subr.mxu0 0.0
  %299 = vmatpush1.msra.mxu0 0.0
  %300 = vmatprep.subr.mxu0 0.0
  %301 = vmatpush1.msra.mxu0 0.0
  %302 = vmatprep.subr.mxu0 0.0
  %303 = vmatpush1.msra.mxu0 0.0
  %304 = vmatprep.subr.mxu0 0.0
  %305 = vmatpush1.msra.mxu0 0.0
  %306 = vmatprep.subr.mxu0 0.0
  %307 = vmatpush1.msra.mxu0 0.0
  %308 = vmatprep.subr.mxu0 0.0
  %309 = vmatpush1.msra.mxu0 0.0
  %310 = vmatprep.subr.mxu0 0.0
  %311 = vmatpush1.msra.mxu0 0.0
  %312 = vmatprep.subr.mxu0 0.0
  %313 = vmatpush1.msra.mxu0 0.0
  %314 = vmatprep.subr.mxu0 0.0
  %315 = vmatpush1.msra.mxu0 0.0
  %316 = vmatprep.subr.mxu0 0.0
  %317 = vmatpush1.msra.mxu0 0.0
  %318 = vmatprep.subr.mxu0 0.0
  %319 = vmatpush1.msra.mxu0 0.0
  %320 = vmatprep.subr.mxu0 0.0
  %321 = vmatpush1.msra.mxu0 0.0
  %322 = vmatprep.subr.mxu0 0.0
  %323 = vmatpush1.msra.mxu0 %v177
  %324 = vmatprep.subr.mxu0 0.0
  %325 = vmatpush1.msra.mxu0 %v176
  %326 = vmatprep.subr.mxu0 0.0
  %327 = vmatpush1.msra.mxu0 %v175
  %328 = vmatprep.subr.mxu0 0.0
  %329 = vmatpush1.msra.mxu0 %v174
  %330 = vmatprep.subr.mxu0 0.0
  %331 = vmatpush2.msra.mxu0 0.0
  %332 = vmatprep.subr.mxu0 0.0
  %333 = vmatpush2.msra.mxu0 0.0
  %334 = vmatprep.subr.mxu0 0.0
  %335 = vmatpush2.msra.mxu0 0.0
  %336 = vmatprep.subr.mxu0 0.0
  %337 = vmatpush2.msra.mxu0 0.0
  %338 = vmatprep.subr.mxu0 0.0
  %339 = vmatpush2.msra.mxu0 0.0
  %340 = vmatprep.subr.mxu0 0.0
  %341 = vmatpush2.msra.mxu0 0.0
  %342 = vmatprep.subr.mxu0 0.0
  %343 = vmatpush2.msra.mxu0 0.0
  %344 = vmatprep.subr.mxu0 0.0
  %345 = vmatpush2.msra.mxu0 0.0
  %346 = vmatprep.subr.mxu0 0.0
  %347 = vmatpush2.msra.mxu0 0.0
  %348 = vmatprep.subr.mxu0 0.0
  %349 = vmatpush2.msra.mxu0 0.0
  %350 = vmatprep.subr.mxu0 0.0
  %351 = vmatpush2.msra.mxu0 0.0
  %352 = vmatprep.subr.mxu0 0.0
  %353 = vmatpush2.msra.mxu0 0.0
  %354 = vmatprep.subr.mxu0 0.0
  %355 = vmatpush2.msra.mxu0 0.0
  %356 = vmatprep.subr.mxu0 0.0
  %357 = vmatpush2.msra.mxu0 0.0
  %358 = vmatprep.subr.mxu0 0.0
  %359 = vmatpush2.msra.mxu0 0.0
  %360 = vmatprep.subr.mxu0 0.0
  %361 = vmatpush2.msra.mxu0 0.0
  %362 = vmatprep.mubr.f32.mxu0 0.0
  %363 = vmatmul.mubr.f32.gmra.mxu0 %v296
  %v364 = vpop.f32.mrf.mxu0
  %v365 = vadd.f32 0.0, %v364
  %v366 = vpop.f32.mrf.mxu0
  %367 = vdwg.mxu0
  %369 = vrot.lane.b32.xlu0 %v294, 32
  %v370 = vpop.permute.xlu0 %369
  %v371 = vsel %vm186, %v370, 0
  %373 = vmatprep.subr.mxu0 0.0
  %374 = vmatpush1.msra.mxu0 0.0
  %375 = vmatprep.subr.mxu0 0.0
  %376 = vmatpush1.msra.mxu0 0.0
  %377 = vmatprep.subr.mxu0 0.0
  %378 = vmatpush1.msra.mxu0 0.0
  %379 = vmatprep.subr.mxu0 0.0
  %380 = vmatpush1.msra.mxu0 0.0
  %381 = vmatprep.subr.mxu0 0.0
  %382 = vmatpush1.msra.mxu0 0.0
  %383 = vmatprep.subr.mxu0 0.0
  %384 = vmatpush1.msra.mxu0 0.0
  %385 = vmatprep.subr.mxu0 0.0
  %386 = vmatpush1.msra.mxu0 0.0
  %387 = vmatprep.subr.mxu0 0.0
  %388 = vmatpush1.msra.mxu0 0.0
  %389 = vmatprep.subr.mxu0 0.0
  %390 = vmatpush1.msra.mxu0 0.0
  %391 = vmatprep.subr.mxu0 0.0
  %392 = vmatpush1.msra.mxu0 0.0
  %393 = vmatprep.subr.mxu0 0.0
  %394 = vmatpush1.msra.mxu0 0.0
  %395 = vmatprep.subr.mxu0 0.0
  %396 = vmatpush1.msra.mxu0 0.0
  %397 = vmatprep.subr.mxu0 0.0
  %398 = vmatpush1.msra.mxu0 %v173
  %399 = vmatprep.subr.mxu0 0.0
  %400 = vmatpush1.msra.mxu0 %v172
  %401 = vmatprep.subr.mxu0 0.0
  %402 = vmatpush1.msra.mxu0 %v171
  %403 = vmatprep.subr.mxu0 0.0
  %404 = vmatpush1.msra.mxu0 %v170
  %405 = vmatprep.subr.mxu0 0.0
  %406 = vmatpush2.msra.mxu0 0.0
  %407 = vmatprep.subr.mxu0 0.0
  %408 = vmatpush2.msra.mxu0 0.0
  %409 = vmatprep.subr.mxu0 0.0
  %410 = vmatpush2.msra.mxu0 0.0
  %411 = vmatprep.subr.mxu0 0.0
  %412 = vmatpush2.msra.mxu0 0.0
  %413 = vmatprep.subr.mxu0 0.0
  %414 = vmatpush2.msra.mxu0 0.0
  %415 = vmatprep.subr.mxu0 0.0
  %416 = vmatpush2.msra.mxu0 0.0
  %417 = vmatprep.subr.mxu0 0.0
  %418 = vmatpush2.msra.mxu0 0.0
  %419 = vmatprep.subr.mxu0 0.0
  %420 = vmatpush2.msra.mxu0 0.0
  %421 = vmatprep.subr.mxu0 0.0
  %422 = vmatpush2.msra.mxu0 0.0
  %423 = vmatprep.subr.mxu0 0.0
  %424 = vmatpush2.msra.mxu0 0.0
  %425 = vmatprep.subr.mxu0 0.0
  %426 = vmatpush2.msra.mxu0 0.0
  %427 = vmatprep.subr.mxu0 0.0
  %428 = vmatpush2.msra.mxu0 0.0
  %429 = vmatprep.subr.mxu0 0.0
  %430 = vmatpush2.msra.mxu0 0.0
  %431 = vmatprep.subr.mxu0 0.0
  %432 = vmatpush2.msra.mxu0 0.0
  %433 = vmatprep.subr.mxu0 0.0
  %434 = vmatpush2.msra.mxu0 0.0
  %435 = vmatprep.subr.mxu0 0.0
  %436 = vmatpush2.msra.mxu0 0.0
  %437 = vmatprep.mubr.f32.mxu0 0.0
  %438 = vmatmul.mubr.f32.gmra.mxu0 %v371
  %v439 = vpop.f32.mrf.mxu0
  %v440 = vadd.f32 %v365, %v439
  %v441 = vpop.f32.mrf.mxu0
  %442 = vdwg.mxu0
  %v444 = vlaneseq
  %v445 = vshrl.u32 %v444, 7
  %v446 = vsub.s32 0, %v445
  %v447 = vrot.slane %v178, %v446
  %v449 = vadd.f32 %v440, %v447
  %v450 = vmul.f32 %v449, 0.5
  %v451 = vsel %vm164, %v449, %v450
  %v452 = vtanh.pop %v451
  %v453 = vmul.f32 %v452, 0.5
  %v454 = vadd.f32 %v453, 0.5
  %v455 = vsel %vm164, %v452, %v454
  %457 = vrot.lane.b32.xlu0 %v184, 32
  %v458 = vpop.permute.xlu0 %457
  %v460 = vmul.f32 %v455, %v458
  %462 = vrot.lane.b32.xlu0 %v455, 64
  %v463 = vpop.permute.xlu0 %462
  %v465 = vmul.f32 %v455, %v463
  %467 = vrot.lane.b32.xlu0 %v465, 32
  %v468 = vpop.permute.xlu0 %467
  %v470 = vadd.f32 %v460, %v468
  %v471 = vtanh.pop %v470
  %473 = vrot.lane.b32.xlu0 %v471, 64
  %v474 = vpop.permute.xlu0 %473
  %v476 = vmul.f32 %v455, %v474
  %s477 = scalar_lea.vmem [#allocation2], 8
  %v478 = vld [vmem:[%s477] sm:$0xff]
  %479 = vmatprep.subr.mxu0 0.0
  %480 = vmatpush1.msra.mxu0 0.0
  %481 = vmatprep.subr.mxu0 0.0
  %482 = vmatpush1.msra.mxu0 0.0
  %483 = vmatprep.subr.mxu0 0.0
  %484 = vmatpush1.msra.mxu0 0.0
  %485 = vmatprep.subr.mxu0 0.0
  %486 = vmatpush1.msra.mxu0 0.0
  %487 = vmatprep.subr.mxu0 0.0
  %488 = vmatpush1.msra.mxu0 0.0
  %489 = vmatprep.subr.mxu0 0.0
  %490 = vmatpush1.msra.mxu0 0.0
  %491 = vmatprep.subr.mxu0 0.0
  %492 = vmatpush1.msra.mxu0 0.0
  %493 = vmatprep.subr.mxu0 0.0
  %494 = vmatpush1.msra.mxu0 0.0
  %495 = vmatprep.subr.mxu0 0.0
  %496 = vmatpush1.msra.mxu0 0.0
  %497 = vmatprep.subr.mxu0 0.0
  %498 = vmatpush1.msra.mxu0 0.0
  %499 = vmatprep.subr.mxu0 0.0
  %500 = vmatpush1.msra.mxu0 0.0
  %501 = vmatprep.subr.mxu0 0.0
  %502 = vmatpush1.msra.mxu0 0.0
  %503 = vmatprep.subr.mxu0 0.0
  %504 = vmatpush1.msra.mxu0 %v168
  %505 = vmatprep.subr.mxu0 0.0
  %506 = vmatpush1.msra.mxu0 %v167
  %507 = vmatprep.subr.mxu0 0.0
  %508 = vmatpush1.msra.mxu0 %v166
  %509 = vmatprep.subr.mxu0 0.0
  %510 = vmatpush1.msra.mxu0 %v165
  %511 = vmatprep.subr.mxu0 0.0
  %512 = vmatpush2.msra.mxu0 0.0
  %513 = vmatprep.subr.mxu0 0.0
  %514 = vmatpush2.msra.mxu0 0.0
  %515 = vmatprep.subr.mxu0 0.0
  %516 = vmatpush2.msra.mxu0 0.0
  %517 = vmatprep.subr.mxu0 0.0
  %518 = vmatpush2.msra.mxu0 0.0
  %519 = vmatprep.subr.mxu0 0.0
  %520 = vmatpush2.msra.mxu0 0.0
  %521 = vmatprep.subr.mxu0 0.0
  %522 = vmatpush2.msra.mxu0 0.0
  %523 = vmatprep.subr.mxu0 0.0
  %524 = vmatpush2.msra.mxu0 0.0
  %525 = vmatprep.subr.mxu0 0.0
  %526 = vmatpush2.msra.mxu0 0.0
  %527 = vmatprep.subr.mxu0 0.0
  %528 = vmatpush2.msra.mxu0 0.0
  %529 = vmatprep.subr.mxu0 0.0
  %530 = vmatpush2.msra.mxu0 0.0
  %531 = vmatprep.subr.mxu0 0.0
  %532 = vmatpush2.msra.mxu0 0.0
  %533 = vmatprep.subr.mxu0 0.0
  %534 = vmatpush2.msra.mxu0 0.0
  %535 = vmatprep.subr.mxu0 0.0
  %536 = vmatpush2.msra.mxu0 0.0
  %537 = vmatprep.subr.mxu0 0.0
  %538 = vmatpush2.msra.mxu0 0.0
  %539 = vmatprep.subr.mxu0 0.0
  %540 = vmatpush2.msra.mxu0 0.0
  %541 = vmatprep.subr.mxu0 0.0
  %542 = vmatpush2.msra.mxu0 0.0
  %543 = vmatprep.mubr.f32.mxu0 0.0
  %544 = vmatmul.mubr.f32.gmra.mxu0 %v371
  %v545 = vpop.f32.mrf.mxu0
  %v546 = vadd.f32 0.0, %v545
  %v547 = vpop.f32.mrf.mxu0
  %548 = vdwg.mxu0
  %v549 = vadd.f32 %v478, %v546
  %v550 = vadd.f32 %v549, %v265
  %v551 = vmul.f32 %v550, 0.5
  %v552 = vsel %vm164, %v550, %v551
  %v553 = vtanh.pop %v552
  %v554 = vmul.f32 %v553, 0.5
  %v555 = vadd.f32 %v554, 0.5
  %v556 = vsel %vm164, %v553, %v555
  %v557 = vmul.f32 %v556, %v288
  %559 = vrot.lane.b32.xlu0 %v556, 64
  %v560 = vpop.permute.xlu0 %559
  %v562 = vmul.f32 %v556, %v560
  %564 = vrot.lane.b32.xlu0 %v562, 32
  %v565 = vpop.permute.xlu0 %564
  %v567 = vadd.f32 %v557, %v565
  %v568 = vtanh.pop %v567
  %570 = vrot.lane.b32.xlu0 %v568, 64
  %v571 = vpop.permute.xlu0 %570
  %v573 = vmul.f32 %v556, %v571
  %575 = vrot.lane.b32.xlu0 %v476, 32
  %v576 = vpop.permute.xlu0 %575
  %v577 = vsel %vm186, %v576, 0
  %579 = vmatprep.subr.mxu0 0.0
  %580 = vmatpush1.msra.mxu0 0.0
  %581 = vmatprep.subr.mxu0 0.0
  %582 = vmatpush1.msra.mxu0 0.0
  %583 = vmatprep.subr.mxu0 0.0
  %584 = vmatpush1.msra.mxu0 0.0
  %585 = vmatprep.subr.mxu0 0.0
  %586 = vmatpush1.msra.mxu0 0.0
  %587 = vmatprep.subr.mxu0 0.0
  %588 = vmatpush1.msra.mxu0 0.0
  %589 = vmatprep.subr.mxu0 0.0
  %590 = vmatpush1.msra.mxu0 0.0
  %591 = vmatprep.subr.mxu0 0.0
  %592 = vmatpush1.msra.mxu0 0.0
  %593 = vmatprep.subr.mxu0 0.0
  %594 = vmatpush1.msra.mxu0 0.0
  %595 = vmatprep.subr.mxu0 0.0
  %596 = vmatpush1.msra.mxu0 0.0
  %597 = vmatprep.subr.mxu0 0.0
  %598 = vmatpush1.msra.mxu0 0.0
  %599 = vmatprep.subr.mxu0 0.0
  %600 = vmatpush1.msra.mxu0 0.0
  %601 = vmatprep.subr.mxu0 0.0
  %602 = vmatpush1.msra.mxu0 0.0
  %603 = vmatprep.subr.mxu0 0.0
  %604 = vmatpush1.msra.mxu0 %v177
  %605 = vmatprep.subr.mxu0 0.0
  %606 = vmatpush1.msra.mxu0 %v176
  %607 = vmatprep.subr.mxu0 0.0
  %608 = vmatpush1.msra.mxu0 %v175
  %609 = vmatprep.subr.mxu0 0.0
  %610 = vmatpush1.msra.mxu0 %v174
  %611 = vmatprep.subr.mxu0 0.0
  %612 = vmatpush2.msra.mxu0 0.0
  %613 = vmatprep.subr.mxu0 0.0
  %614 = vmatpush2.msra.mxu0 0.0
  %615 = vmatprep.subr.mxu0 0.0
  %616 = vmatpush2.msra.mxu0 0.0
  %617 = vmatprep.subr.mxu0 0.0
  %618 = vmatpush2.msra.mxu0 0.0
  %619 = vmatprep.subr.mxu0 0.0
  %620 = vmatpush2.msra.mxu0 0.0
  %621 = vmatprep.subr.mxu0 0.0
  %622 = vmatpush2.msra.mxu0 0.0
  %623 = vmatprep.subr.mxu0 0.0
  %624 = vmatpush2.msra.mxu0 0.0
  %625 = vmatprep.subr.mxu0 0.0
  %626 = vmatpush2.msra.mxu0 0.0
  %627 = vmatprep.subr.mxu0 0.0
  %628 = vmatpush2.msra.mxu0 0.0
  %629 = vmatprep.subr.mxu0 0.0
  %630 = vmatpush2.msra.mxu0 0.0
  %631 = vmatprep.subr.mxu0 0.0
  %632 = vmatpush2.msra.mxu0 0.0
  %633 = vmatprep.subr.mxu0 0.0
  %634 = vmatpush2.msra.mxu0 0.0
  %635 = vmatprep.subr.mxu0 0.0
  %636 = vmatpush2.msra.mxu0 0.0
  %637 = vmatprep.subr.mxu0 0.0
  %638 = vmatpush2.msra.mxu0 0.0
  %639 = vmatprep.subr.mxu0 0.0
  %640 = vmatpush2.msra.mxu0 0.0
  %641 = vmatprep.subr.mxu0 0.0
  %642 = vmatpush2.msra.mxu0 0.0
  %643 = vmatprep.mubr.f32.mxu0 0.0
  %644 = vmatmul.mubr.f32.gmra.mxu0 %v577
  %v645 = vpop.f32.mrf.mxu0
  %v646 = vadd.f32 0.0, %v645
  %v647 = vpop.f32.mrf.mxu0
  %648 = vdwg.mxu0
  %650 = vrot.lane.b32.xlu0 %v573, 32
  %v651 = vpop.permute.xlu0 %650
  %v652 = vsel %vm186, %v651, 0
  %654 = vmatprep.subr.mxu0 0.0
  %655 = vmatpush1.msra.mxu0 0.0
  %656 = vmatprep.subr.mxu0 0.0
  %657 = vmatpush1.msra.mxu0 0.0
  %658 = vmatprep.subr.mxu0 0.0
  %659 = vmatpush1.msra.mxu0 0.0
  %660 = vmatprep.subr.mxu0 0.0
  %661 = vmatpush1.msra.mxu0 0.0
  %662 = vmatprep.subr.mxu0 0.0
  %663 = vmatpush1.msra.mxu0 0.0
  %664 = vmatprep.subr.mxu0 0.0
  %665 = vmatpush1.msra.mxu0 0.0
  %666 = vmatprep.subr.mxu0 0.0
  %667 = vmatpush1.msra.mxu0 0.0
  %668 = vmatprep.subr.mxu0 0.0
  %669 = vmatpush1.msra.mxu0 0.0
  %670 = vmatprep.subr.mxu0 0.0
  %671 = vmatpush1.msra.mxu0 0.0
  %672 = vmatprep.subr.mxu0 0.0
  %673 = vmatpush1.msra.mxu0 0.0
  %674 = vmatprep.subr.mxu0 0.0
  %675 = vmatpush1.msra.mxu0 0.0
  %676 = vmatprep.subr.mxu0 0.0
  %677 = vmatpush1.msra.mxu0 0.0
  %678 = vmatprep.subr.mxu0 0.0
  %679 = vmatpush1.msra.mxu0 %v173
  %680 = vmatprep.subr.mxu0 0.0
  %681 = vmatpush1.msra.mxu0 %v172
  %682 = vmatprep.subr.mxu0 0.0
  %683 = vmatpush1.msra.mxu0 %v171
  %684 = vmatprep.subr.mxu0 0.0
  %685 = vmatpush1.msra.mxu0 %v170
  %686 = vmatprep.subr.mxu0 0.0
  %687 = vmatpush2.msra.mxu0 0.0
  %688 = vmatprep.subr.mxu0 0.0
  %689 = vmatpush2.msra.mxu0 0.0
  %690 = vmatprep.subr.mxu0 0.0
  %691 = vmatpush2.msra.mxu0 0.0
  %692 = vmatprep.subr.mxu0 0.0
  %693 = vmatpush2.msra.mxu0 0.0
  %694 = vmatprep.subr.mxu0 0.0
  %695 = vmatpush2.msra.mxu0 0.0
  %696 = vmatprep.subr.mxu0 0.0
  %697 = vmatpush2.msra.mxu0 0.0
  %698 = vmatprep.subr.mxu0 0.0
  %699 = vmatpush2.msra.mxu0 0.0
  %700 = vmatprep.subr.mxu0 0.0
  %701 = vmatpush2.msra.mxu0 0.0
  %702 = vmatprep.subr.mxu0 0.0
  %703 = vmatpush2.msra.mxu0 0.0
  %704 = vmatprep.subr.mxu0 0.0
  %705 = vmatpush2.msra.mxu0 0.0
  %706 = vmatprep.subr.mxu0 0.0
  %707 = vmatpush2.msra.mxu0 0.0
  %708 = vmatprep.subr.mxu0 0.0
  %709 = vmatpush2.msra.mxu0 0.0
  %710 = vmatprep.subr.mxu0 0.0
  %711 = vmatpush2.msra.mxu0 0.0
  %712 = vmatprep.subr.mxu0 0.0
  %713 = vmatpush2.msra.mxu0 0.0
  %714 = vmatprep.subr.mxu0 0.0
  %715 = vmatpush2.msra.mxu0 0.0
  %716 = vmatprep.subr.mxu0 0.0
  %717 = vmatpush2.msra.mxu0 0.0
  %718 = vmatprep.mubr.f32.mxu0 0.0
  %719 = vmatmul.mubr.f32.gmra.mxu0 %v652
  %v720 = vpop.f32.mrf.mxu0
  %v721 = vadd.f32 %v646, %v720
  %v722 = vpop.f32.mrf.mxu0
  %723 = vdwg.mxu0
  %v724 = vadd.f32 %v721, %v447
  %v725 = vmul.f32 %v724, 0.5
  %v726 = vsel %vm164, %v724, %v725
  %v727 = vtanh.pop %v726
  %v728 = vmul.f32 %v727, 0.5
  %v729 = vadd.f32 %v728, 0.5
  %v730 = vsel %vm164, %v727, %v729
  %v731 = vmul.f32 %v730, %v470
  %733 = vrot.lane.b32.xlu0 %v730, 64
  %v734 = vpop.permute.xlu0 %733
  %v736 = vmul.f32 %v730, %v734
  %738 = vrot.lane.b32.xlu0 %v736, 32
  %v739 = vpop.permute.xlu0 %738
  %v741 = vadd.f32 %v731, %v739
  %v742 = vtanh.pop %v741
  %744 = vrot.lane.b32.xlu0 %v742, 64
  %v745 = vpop.permute.xlu0 %744
  %v747 = vmul.f32 %v730, %v745
  %s748 = scalar_lea.vmem [#allocation2], 16
  %v749 = vld [vmem:[%s748] sm:$0xff]
  %750 = vmatprep.subr.mxu0 0.0
  %751 = vmatpush1.msra.mxu0 0.0
  %752 = vmatprep.subr.mxu0 0.0
  %753 = vmatpush1.msra.mxu0 0.0
  %754 = vmatprep.subr.mxu0 0.0
  %755 = vmatpush1.msra.mxu0 0.0
  %756 = vmatprep.subr.mxu0 0.0
  %757 = vmatpush1.msra.mxu0 0.0
  %758 = vmatprep.subr.mxu0 0.0
  %759 = vmatpush1.msra.mxu0 0.0
  %760 = vmatprep.subr.mxu0 0.0
  %761 = vmatpush1.msra.mxu0 0.0
  %762 = vmatprep.subr.mxu0 0.0
  %763 = vmatpush1.msra.mxu0 0.0
  %764 = vmatprep.subr.mxu0 0.0
  %765 = vmatpush1.msra.mxu0 0.0
  %766 = vmatprep.subr.mxu0 0.0
  %767 = vmatpush1.msra.mxu0 0.0
  %768 = vmatprep.subr.mxu0 0.0
  %769 = vmatpush1.msra.mxu0 0.0
  %770 = vmatprep.subr.mxu0 0.0
  %771 = vmatpush1.msra.mxu0 0.0
  %772 = vmatprep.subr.mxu0 0.0
  %773 = vmatpush1.msra.mxu0 0.0
  %774 = vmatprep.subr.mxu0 0.0
  %775 = vmatpush1.msra.mxu0 %v168
  %776 = vmatprep.subr.mxu0 0.0
  %777 = vmatpush1.msra.mxu0 %v167
  %778 = vmatprep.subr.mxu0 0.0
  %779 = vmatpush1.msra.mxu0 %v166
  %780 = vmatprep.subr.mxu0 0.0
  %781 = vmatpush1.msra.mxu0 %v165
  %782 = vmatprep.subr.mxu0 0.0
  %783 = vmatpush2.msra.mxu0 0.0
  %784 = vmatprep.subr.mxu0 0.0
  %785 = vmatpush2.msra.mxu0 0.0
  %786 = vmatprep.subr.mxu0 0.0
  %787 = vmatpush2.msra.mxu0 0.0
  %788 = vmatprep.subr.mxu0 0.0
  %789 = vmatpush2.msra.mxu0 0.0
  %790 = vmatprep.subr.mxu0 0.0
  %791 = vmatpush2.msra.mxu0 0.0
  %792 = vmatprep.subr.mxu0 0.0
  %793 = vmatpush2.msra.mxu0 0.0
  %794 = vmatprep.subr.mxu0 0.0
  %795 = vmatpush2.msra.mxu0 0.0
  %796 = vmatprep.subr.mxu0 0.0
  %797 = vmatpush2.msra.mxu0 0.0
  %798 = vmatprep.subr.mxu0 0.0
  %799 = vmatpush2.msra.mxu0 0.0
  %800 = vmatprep.subr.mxu0 0.0
  %801 = vmatpush2.msra.mxu0 0.0
  %802 = vmatprep.subr.mxu0 0.0
  %803 = vmatpush2.msra.mxu0 0.0
  %804 = vmatprep.subr.mxu0 0.0
  %805 = vmatpush2.msra.mxu0 0.0
  %806 = vmatprep.subr.mxu0 0.0
  %807 = vmatpush2.msra.mxu0 0.0
  %808 = vmatprep.subr.mxu0 0.0
  %809 = vmatpush2.msra.mxu0 0.0
  %810 = vmatprep.subr.mxu0 0.0
  %811 = vmatpush2.msra.mxu0 0.0
  %812 = vmatprep.subr.mxu0 0.0
  %813 = vmatpush2.msra.mxu0 0.0
  %814 = vmatprep.mubr.f32.mxu0 0.0
  %815 = vmatmul.mubr.f32.gmra.mxu0 %v652
  %v816 = vpop.f32.mrf.mxu0
  %v817 = vadd.f32 0.0, %v816
  %v818 = vpop.f32.mrf.mxu0
  %819 = vdwg.mxu0
  %v820 = vadd.f32 %v749, %v817
  %v821 = vadd.f32 %v820, %v265
  %v822 = vmul.f32 %v821, 0.5
  %v823 = vsel %vm164, %v821, %v822
  %v824 = vtanh.pop %v823
  %v825 = vmul.f32 %v824, 0.5
  %v826 = vadd.f32 %v825, 0.5
  %v827 = vsel %vm164, %v824, %v826
  %v828 = vmul.f32 %v827, %v567
  %830 = vrot.lane.b32.xlu0 %v827, 64
  %v831 = vpop.permute.xlu0 %830
  %v833 = vmul.f32 %v827, %v831
  %835 = vrot.lane.b32.xlu0 %v833, 32
  %v836 = vpop.permute.xlu0 %835
  %v838 = vadd.f32 %v828, %v836
  %v839 = vtanh.pop %v838
  %841 = vrot.lane.b32.xlu0 %v839, 64
  %v842 = vpop.permute.xlu0 %841
  %v844 = vmul.f32 %v827, %v842
  %846 = vrot.lane.b32.xlu0 %v747, 32
  %v847 = vpop.permute.xlu0 %846
  %v848 = vsel %vm186, %v847, 0
  %850 = vmatprep.subr.mxu0 0.0
  %851 = vmatpush1.msra.mxu0 0.0
  %852 = vmatprep.subr.mxu0 0.0
  %853 = vmatpush1.msra.mxu0 0.0
  %854 = vmatprep.subr.mxu0 0.0
  %855 = vmatpush1.msra.mxu0 0.0
  %856 = vmatprep.subr.mxu0 0.0
  %857 = vmatpush1.msra.mxu0 0.0
  %858 = vmatprep.subr.mxu0 0.0
  %859 = vmatpush1.msra.mxu0 0.0
  %860 = vmatprep.subr.mxu0 0.0
  %861 = vmatpush1.msra.mxu0 0.0
  %862 = vmatprep.subr.mxu0 0.0
  %863 = vmatpush1.msra.mxu0 0.0
  %864 = vmatprep.subr.mxu0 0.0
  %865 = vmatpush1.msra.mxu0 0.0
  %866 = vmatprep.subr.mxu0 0.0
  %867 = vmatpush1.msra.mxu0 0.0
  %868 = vmatprep.subr.mxu0 0.0
  %869 = vmatpush1.msra.mxu0 0.0
  %870 = vmatprep.subr.mxu0 0.0
  %871 = vmatpush1.msra.mxu0 0.0
  %872 = vmatprep.subr.mxu0 0.0
  %873 = vmatpush1.msra.mxu0 0.0
  %874 = vmatprep.subr.mxu0 0.0
  %875 = vmatpush1.msra.mxu0 %v177
  %876 = vmatprep.subr.mxu0 0.0
  %877 = vmatpush1.msra.mxu0 %v176
  %878 = vmatprep.subr.mxu0 0.0
  %879 = vmatpush1.msra.mxu0 %v175
  %880 = vmatprep.subr.mxu0 0.0
  %881 = vmatpush1.msra.mxu0 %v174
  %882 = vmatprep.subr.mxu0 0.0
  %883 = vmatpush2.msra.mxu0 0.0
  %884 = vmatprep.subr.mxu0 0.0
  %885 = vmatpush2.msra.mxu0 0.0
  %886 = vmatprep.subr.mxu0 0.0
  %887 = vmatpush2.msra.mxu0 0.0
  %888 = vmatprep.subr.mxu0 0.0
  %889 = vmatpush2.msra.mxu0 0.0
  %890 = vmatprep.subr.mxu0 0.0
  %891 = vmatpush2.msra.mxu0 0.0
  %892 = vmatprep.subr.mxu0 0.0
  %893 = vmatpush2.msra.mxu0 0.0
  %894 = vmatprep.subr.mxu0 0.0
  %895 = vmatpush2.msra.mxu0 0.0
  %896 = vmatprep.subr.mxu0 0.0
  %897 = vmatpush2.msra.mxu0 0.0
  %898 = vmatprep.subr.mxu0 0.0
  %899 = vmatpush2.msra.mxu0 0.0
  %900 = vmatprep.subr.mxu0 0.0
  %901 = vmatpush2.msra.mxu0 0.0
  %902 = vmatprep.subr.mxu0 0.0
  %903 = vmatpush2.msra.mxu0 0.0
  %904 = vmatprep.subr.mxu0 0.0
  %905 = vmatpush2.msra.mxu0 0.0
  %906 = vmatprep.subr.mxu0 0.0
  %907 = vmatpush2.msra.mxu0 0.0
  %908 = vmatprep.subr.mxu0 0.0
  %909 = vmatpush2.msra.mxu0 0.0
  %910 = vmatprep.subr.mxu0 0.0
  %911 = vmatpush2.msra.mxu0 0.0
  %912 = vmatprep.subr.mxu0 0.0
  %913 = vmatpush2.msra.mxu0 0.0
  %914 = vmatprep.mubr.f32.mxu0 0.0
  %915 = vmatmul.mubr.f32.gmra.mxu0 %v848
  %v916 = vpop.f32.mrf.mxu0
  %v917 = vadd.f32 0.0, %v916
  %v918 = vpop.f32.mrf.mxu0
  %919 = vdwg.mxu0
  %921 = vrot.lane.b32.xlu0 %v844, 32
  %v922 = vpop.permute.xlu0 %921
  %v923 = vsel %vm186, %v922, 0
  %925 = vmatprep.subr.mxu0 0.0
  %926 = vmatpush1.msra.mxu0 0.0
  %927 = vmatprep.subr.mxu0 0.0
  %928 = vmatpush1.msra.mxu0 0.0
  %929 = vmatprep.subr.mxu0 0.0
  %930 = vmatpush1.msra.mxu0 0.0
  %931 = vmatprep.subr.mxu0 0.0
  %932 = vmatpush1.msra.mxu0 0.0
  %933 = vmatprep.subr.mxu0 0.0
  %934 = vmatpush1.msra.mxu0 0.0
  %935 = vmatprep.subr.mxu0 0.0
  %936 = vmatpush1.msra.mxu0 0.0
  %937 = vmatprep.subr.mxu0 0.0
  %938 = vmatpush1.msra.mxu0 0.0
  %939 = vmatprep.subr.mxu0 0.0
  %940 = vmatpush1.msra.mxu0 0.0
  %941 = vmatprep.subr.mxu0 0.0
  %942 = vmatpush1.msra.mxu0 0.0
  %943 = vmatprep.subr.mxu0 0.0
  %944 = vmatpush1.msra.mxu0 0.0
  %945 = vmatprep.subr.mxu0 0.0
  %946 = vmatpush1.msra.mxu0 0.0
  %947 = vmatprep.subr.mxu0 0.0
  %948 = vmatpush1.msra.mxu0 0.0
  %949 = vmatprep.subr.mxu0 0.0
  %950 = vmatpush1.msra.mxu0 %v173
  %951 = vmatprep.subr.mxu0 0.0
  %952 = vmatpush1.msra.mxu0 %v172
  %953 = vmatprep.subr.mxu0 0.0
  %954 = vmatpush1.msra.mxu0 %v171
  %955 = vmatprep.subr.mxu0 0.0
  %956 = vmatpush1.msra.mxu0 %v170
  %957 = vmatprep.subr.mxu0 0.0
  %958 = vmatpush2.msra.mxu0 0.0
  %959 = vmatprep.subr.mxu0 0.0
  %960 = vmatpush2.msra.mxu0 0.0
  %961 = vmatprep.subr.mxu0 0.0
  %962 = vmatpush2.msra.mxu0 0.0
  %963 = vmatprep.subr.mxu0 0.0
  %964 = vmatpush2.msra.mxu0 0.0
  %965 = vmatprep.subr.mxu0 0.0
  %966 = vmatpush2.msra.mxu0 0.0
  %967 = vmatprep.subr.mxu0 0.0
  %968 = vmatpush2.msra.mxu0 0.0
  %969 = vmatprep.subr.mxu0 0.0
  %970 = vmatpush2.msra.mxu0 0.0
  %971 = vmatprep.subr.mxu0 0.0
  %972 = vmatpush2.msra.mxu0 0.0
  %973 = vmatprep.subr.mxu0 0.0
  %974 = vmatpush2.msra.mxu0 0.0
  %975 = vmatprep.subr.mxu0 0.0
  %976 = vmatpush2.msra.mxu0 0.0
  %977 = vmatprep.subr.mxu0 0.0
  %978 = vmatpush2.msra.mxu0 0.0
  %979 = vmatprep.subr.mxu0 0.0
  %980 = vmatpush2.msra.mxu0 0.0
  %981 = vmatprep.subr.mxu0 0.0
  %982 = vmatpush2.msra.mxu0 0.0
  %983 = vmatprep.subr.mxu0 0.0
  %984 = vmatpush2.msra.mxu0 0.0
  %985 = vmatprep.subr.mxu0 0.0
  %986 = vmatpush2.msra.mxu0 0.0
  %987 = vmatprep.subr.mxu0 0.0
  %988 = vmatpush2.msra.mxu0 0.0
  %989 = vmatprep.mubr.f32.mxu0 0.0
  %990 = vmatmul.mubr.f32.gmra.mxu0 %v923
  %v991 = vpop.f32.mrf.mxu0
  %v992 = vadd.f32 %v917, %v991
  %v993 = vpop.f32.mrf.mxu0
  %994 = vdwg.mxu0
  %v995 = vadd.f32 %v992, %v447
  %v996 = vmul.f32 %v995, 0.5
  %v997 = vsel %vm164, %v995, %v996
  %v998 = vtanh.pop %v997
  %v999 = vmul.f32 %v998, 0.5
  %v1000 = vadd.f32 %v999, 0.5
  %v1001 = vsel %vm164, %v998, %v1000
  %v1002 = vmul.f32 %v1001, %v741
  %1004 = vrot.lane.b32.xlu0 %v1001, 64
  %v1005 = vpop.permute.xlu0 %1004
  %v1007 = vmul.f32 %v1001, %v1005
  %1009 = vrot.lane.b32.xlu0 %v1007, 32
  %v1010 = vpop.permute.xlu0 %1009
  %v1012 = vadd.f32 %v1002, %v1010
  %v1013 = vtanh.pop %v1012
  %1015 = vrot.lane.b32.xlu0 %v1013, 64
  %v1016 = vpop.permute.xlu0 %1015
  %v1018 = vmul.f32 %v1001, %v1016
  %s1019 = scalar_lea.vmem [#allocation2], 24
  %v1020 = vld [vmem:[%s1019] sm:$0xff]
  %1021 = vmatprep.subr.mxu0 0.0
  %1022 = vmatpush1.msra.mxu0 0.0
  %1023 = vmatprep.subr.mxu0 0.0
  %1024 = vmatpush1.msra.mxu0 0.0
  %1025 = vmatprep.subr.mxu0 0.0
  %1026 = vmatpush1.msra.mxu0 0.0
  %1027 = vmatprep.subr.mxu0 0.0
  %1028 = vmatpush1.msra.mxu0 0.0
  %1029 = vmatprep.subr.mxu0 0.0
  %1030 = vmatpush1.msra.mxu0 0.0
  %1031 = vmatprep.subr.mxu0 0.0
  %1032 = vmatpush1.msra.mxu0 0.0
  %1033 = vmatprep.subr.mxu0 0.0
  %1034 = vmatpush1.msra.mxu0 0.0
  %1035 = vmatprep.subr.mxu0 0.0
  %1036 = vmatpush1.msra.mxu0 0.0
  %1037 = vmatprep.subr.mxu0 0.0
  %1038 = vmatpush1.msra.mxu0 0.0
  %1039 = vmatprep.subr.mxu0 0.0
  %1040 = vmatpush1.msra.mxu0 0.0
  %1041 = vmatprep.subr.mxu0 0.0
  %1042 = vmatpush1.msra.mxu0 0.0
  %1043 = vmatprep.subr.mxu0 0.0
  %1044 = vmatpush1.msra.mxu0 0.0
  %1045 = vmatprep.subr.mxu0 0.0
  %1046 = vmatpush1.msra.mxu0 %v168
  %1047 = vmatprep.subr.mxu0 0.0
  %1048 = vmatpush1.msra.mxu0 %v167
  %1049 = vmatprep.subr.mxu0 0.0
  %1050 = vmatpush1.msra.mxu0 %v166
  %1051 = vmatprep.subr.mxu0 0.0
  %1052 = vmatpush1.msra.mxu0 %v165
  %1053 = vmatprep.subr.mxu0 0.0
  %1054 = vmatpush2.msra.mxu0 0.0
  %1055 = vmatprep.subr.mxu0 0.0
  %1056 = vmatpush2.msra.mxu0 0.0
  %1057 = vmatprep.subr.mxu0 0.0
  %1058 = vmatpush2.msra.mxu0 0.0
  %1059 = vmatprep.subr.mxu0 0.0
  %1060 = vmatpush2.msra.mxu0 0.0
  %1061 = vmatprep.subr.mxu0 0.0
  %1062 = vmatpush2.msra.mxu0 0.0
  %1063 = vmatprep.subr.mxu0 0.0
  %1064 = vmatpush2.msra.mxu0 0.0
  %1065 = vmatprep.subr.mxu0 0.0
  %1066 = vmatpush2.msra.mxu0 0.0
  %1067 = vmatprep.subr.mxu0 0.0
  %1068 = vmatpush2.msra.mxu0 0.0
  %1069 = vmatprep.subr.mxu0 0.0
  %1070 = vmatpush2.msra.mxu0 0.0
  %1071 = vmatprep.subr.mxu0 0.0
  %1072 = vmatpush2.msra.mxu0 0.0
  %1073 = vmatprep.subr.mxu0 0.0
  %1074 = vmatpush2.msra.mxu0 0.0
  %1075 = vmatprep.subr.mxu0 0.0
  %1076 = vmatpush2.msra.mxu0 0.0
  %1077 = vmatprep.subr.mxu0 0.0
  %1078 = vmatpush2.msra.mxu0 0.0
  %1079 = vmatprep.subr.mxu0 0.0
  %1080 = vmatpush2.msra.mxu0 0.0
  %1081 = vmatprep.subr.mxu0 0.0
  %1082 = vmatpush2.msra.mxu0 0.0
  %1083 = vmatprep.subr.mxu0 0.0
  %1084 = vmatpush2.msra.mxu0 0.0
  %1085 = vmatprep.mubr.f32.mxu0 0.0
  %1086 = vmatmul.mubr.f32.gmra.mxu0 %v923
  %v1087 = vpop.f32.mrf.mxu0
  %v1088 = vadd.f32 0.0, %v1087
  %v1089 = vpop.f32.mrf.mxu0
  %1090 = vdwg.mxu0
  %v1091 = vadd.f32 %v1020, %v1088
  %v1092 = vadd.f32 %v1091, %v265
  %v1093 = vmul.f32 %v1092, 0.5
  %v1094 = vsel %vm164, %v1092, %v1093
  %v1095 = vtanh.pop %v1094
  %v1096 = vmul.f32 %v1095, 0.5
  %v1097 = vadd.f32 %v1096, 0.5
  %v1098 = vsel %vm164, %v1095, %v1097
  %v1099 = vmul.f32 %v1098, %v838
  %1101 = vrot.lane.b32.xlu0 %v1098, 64
  %v1102 = vpop.permute.xlu0 %1101
  %v1104 = vmul.f32 %v1098, %v1102
  %1106 = vrot.lane.b32.xlu0 %v1104, 32
  %v1107 = vpop.permute.xlu0 %1106
  %v1109 = vadd.f32 %v1099, %v1107
  %v1110 = vtanh.pop %v1109
  %1112 = vrot.lane.b32.xlu0 %v1110, 64
  %v1113 = vpop.permute.xlu0 %1112
  %v1115 = vmul.f32 %v1098, %v1113
  %1117 = vrot.lane.b32.xlu0 %v1018, 32
  %v1118 = vpop.permute.xlu0 %1117
  %v1119 = vsel %vm186, %v1118, 0
  %1121 = vmatprep.subr.mxu0 0.0
  %1122 = vmatpush1.msra.mxu0 0.0
  %1123 = vmatprep.subr.mxu0 0.0
  %1124 = vmatpush1.msra.mxu0 0.0
  %1125 = vmatprep.subr.mxu0 0.0
  %1126 = vmatpush1.msra.mxu0 0.0
  %1127 = vmatprep.subr.mxu0 0.0
  %1128 = vmatpush1.msra.mxu0 0.0
  %1129 = vmatprep.subr.mxu0 0.0
  %1130 = vmatpush1.msra.mxu0 0.0
  %1131 = vmatprep.subr.mxu0 0.0
  %1132 = vmatpush1.msra.mxu0 0.0
  %1133 = vmatprep.subr.mxu0 0.0
  %1134 = vmatpush1.msra.mxu0 0.0
  %1135 = vmatprep.subr.mxu0 0.0
  %1136 = vmatpush1.msra.mxu0 0.0
  %1137 = vmatprep.subr.mxu0 0.0
  %1138 = vmatpush1.msra.mxu0 0.0
  %1139 = vmatprep.subr.mxu0 0.0
  %1140 = vmatpush1.msra.mxu0 0.0
  %1141 = vmatprep.subr.mxu0 0.0
  %1142 = vmatpush1.msra.mxu0 0.0
  %1143 = vmatprep.subr.mxu0 0.0
  %1144 = vmatpush1.msra.mxu0 0.0
  %1145 = vmatprep.subr.mxu0 0.0
  %1146 = vmatpush1.msra.mxu0 %v177
  %1147 = vmatprep.subr.mxu0 0.0
  %1148 = vmatpush1.msra.mxu0 %v176
  %1149 = vmatprep.subr.mxu0 0.0
  %1150 = vmatpush1.msra.mxu0 %v175
  %1151 = vmatprep.subr.mxu0 0.0
  %1152 = vmatpush1.msra.mxu0 %v174
  %1153 = vmatprep.subr.mxu0 0.0
  %1154 = vmatpush2.msra.mxu0 0.0
  %1155 = vmatprep.subr.mxu0 0.0
  %1156 = vmatpush2.msra.mxu0 0.0
  %1157 = vmatprep.subr.mxu0 0.0
  %1158 = vmatpush2.msra.mxu0 0.0
  %1159 = vmatprep.subr.mxu0 0.0
  %1160 = vmatpush2.msra.mxu0 0.0
  %1161 = vmatprep.subr.mxu0 0.0
  %1162 = vmatpush2.msra.mxu0 0.0
  %1163 = vmatprep.subr.mxu0 0.0
  %1164 = vmatpush2.msra.mxu0 0.0
  %1165 = vmatprep.subr.mxu0 0.0
  %1166 = vmatpush2.msra.mxu0 0.0
  %1167 = vmatprep.subr.mxu0 0.0
  %1168 = vmatpush2.msra.mxu0 0.0
  %1169 = vmatprep.subr.mxu0 0.0
  %1170 = vmatpush2.msra.mxu0 0.0
  %1171 = vmatprep.subr.mxu0 0.0
  %1172 = vmatpush2.msra.mxu0 0.0
  %1173 = vmatprep.subr.mxu0 0.0
  %1174 = vmatpush2.msra.mxu0 0.0
  %1175 = vmatprep.subr.mxu0 0.0
  %1176 = vmatpush2.msra.mxu0 0.0
  %1177 = vmatprep.subr.mxu0 0.0
  %1178 = vmatpush2.msra.mxu0 0.0
  %1179 = vmatprep.subr.mxu0 0.0
  %1180 = vmatpush2.msra.mxu0 0.0
  %1181 = vmatprep.subr.mxu0 0.0
  %1182 = vmatpush2.msra.mxu0 0.0
  %1183 = vmatprep.subr.mxu0 0.0
  %1184 = vmatpush2.msra.mxu0 0.0
  %1185 = vmatprep.mubr.f32.mxu0 0.0
  %1186 = vmatmul.mubr.f32.gmra.mxu0 %v1119
  %v1187 = vpop.f32.mrf.mxu0
  %v1188 = vadd.f32 0.0, %v1187
  %v1189 = vpop.f32.mrf.mxu0
  %1190 = vdwg.mxu0
  %1192 = vrot.lane.b32.xlu0 %v1115, 32
  %v1193 = vpop.permute.xlu0 %1192
  %v1194 = vsel %vm186, %v1193, 0
  %1196 = vmatprep.subr.mxu0 0.0
  %1197 = vmatpush1.msra.mxu0 0.0
  %1198 = vmatprep.subr.mxu0 0.0
  %1199 = vmatpush1.msra.mxu0 0.0
  %1200 = vmatprep.subr.mxu0 0.0
  %1201 = vmatpush1.msra.mxu0 0.0
  %1202 = vmatprep.subr.mxu0 0.0
  %1203 = vmatpush1.msra.mxu0 0.0
  %1204 = vmatprep.subr.mxu0 0.0
  %1205 = vmatpush1.msra.mxu0 0.0
  %1206 = vmatprep.subr.mxu0 0.0
  %1207 = vmatpush1.msra.mxu0 0.0
  %1208 = vmatprep.subr.mxu0 0.0
  %1209 = vmatpush1.msra.mxu0 0.0
  %1210 = vmatprep.subr.mxu0 0.0
  %1211 = vmatpush1.msra.mxu0 0.0
  %1212 = vmatprep.subr.mxu0 0.0
  %1213 = vmatpush1.msra.mxu0 0.0
  %1214 = vmatprep.subr.mxu0 0.0
  %1215 = vmatpush1.msra.mxu0 0.0
  %1216 = vmatprep.subr.mxu0 0.0
  %1217 = vmatpush1.msra.mxu0 0.0
  %1218 = vmatprep.subr.mxu0 0.0
  %1219 = vmatpush1.msra.mxu0 0.0
  %1220 = vmatprep.subr.mxu0 0.0
  %1221 = vmatpush1.msra.mxu0 %v173
  %1222 = vmatprep.subr.mxu0 0.0
  %1223 = vmatpush1.msra.mxu0 %v172
  %1224 = vmatprep.subr.mxu0 0.0
  %1225 = vmatpush1.msra.mxu0 %v171
  %1226 = vmatprep.subr.mxu0 0.0
  %1227 = vmatpush1.msra.mxu0 %v170
  %1228 = vmatprep.subr.mxu0 0.0
  %1229 = vmatpush2.msra.mxu0 0.0
  %1230 = vmatprep.subr.mxu0 0.0
  %1231 = vmatpush2.msra.mxu0 0.0
  %1232 = vmatprep.subr.mxu0 0.0
  %1233 = vmatpush2.msra.mxu0 0.0
  %1234 = vmatprep.subr.mxu0 0.0
  %1235 = vmatpush2.msra.mxu0 0.0
  %1236 = vmatprep.subr.mxu0 0.0
  %1237 = vmatpush2.msra.mxu0 0.0
  %1238 = vmatprep.subr.mxu0 0.0
  %1239 = vmatpush2.msra.mxu0 0.0
  %1240 = vmatprep.subr.mxu0 0.0
  %1241 = vmatpush2.msra.mxu0 0.0
  %1242 = vmatprep.subr.mxu0 0.0
  %1243 = vmatpush2.msra.mxu0 0.0
  %1244 = vmatprep.subr.mxu0 0.0
  %1245 = vmatpush2.msra.mxu0 0.0
  %1246 = vmatprep.subr.mxu0 0.0
  %1247 = vmatpush2.msra.mxu0 0.0
  %1248 = vmatprep.subr.mxu0 0.0
  %1249 = vmatpush2.msra.mxu0 0.0
  %1250 = vmatprep.subr.mxu0 0.0
  %1251 = vmatpush2.msra.mxu0 0.0
  %1252 = vmatprep.subr.mxu0 0.0
  %1253 = vmatpush2.msra.mxu0 0.0
  %1254 = vmatprep.subr.mxu0 0.0
  %1255 = vmatpush2.msra.mxu0 0.0
  %1256 = vmatprep.subr.mxu0 0.0
  %1257 = vmatpush2.msra.mxu0 0.0
  %1258 = vmatprep.subr.mxu0 0.0
  %1259 = vmatpush2.msra.mxu0 0.0
  %1260 = vmatprep.mubr.f32.mxu0 0.0
  %1261 = vmatmul.mubr.f32.gmra.mxu0 %v1194
  %v1262 = vpop.f32.mrf.mxu0
  %v1263 = vadd.f32 %v1188, %v1262
  %v1264 = vpop.f32.mrf.mxu0
  %1265 = vdwg.mxu0
  %v1266 = vadd.f32 %v1263, %v447
  %v1267 = vmul.f32 %v1266, 0.5
  %v1268 = vsel %vm164, %v1266, %v1267
  %v1269 = vtanh.pop %v1268
  %v1270 = vmul.f32 %v1269, 0.5
  %v1271 = vadd.f32 %v1270, 0.5
  %v1272 = vsel %vm164, %v1269, %v1271
  %v1273 = vmul.f32 %v1272, %v1012
  %1275 = vrot.lane.b32.xlu0 %v1272, 64
  %v1276 = vpop.permute.xlu0 %1275
  %v1278 = vmul.f32 %v1272, %v1276
  %1280 = vrot.lane.b32.xlu0 %v1278, 32
  %v1281 = vpop.permute.xlu0 %1280
  %v1283 = vadd.f32 %v1273, %v1281
  %v1284 = vtanh.pop %v1283
  %1286 = vrot.lane.b32.xlu0 %v1284, 64
  %v1287 = vpop.permute.xlu0 %1286
  %v1289 = vmul.f32 %v1272, %v1287
  %s1290 = scalar_lea.vmem [#allocation2], 32
  %v1291 = vld [vmem:[%s1290] sm:$0xff]
  %1292 = vmatprep.subr.mxu0 0.0
  %1293 = vmatpush1.msra.mxu0 0.0
  %1294 = vmatprep.subr.mxu0 0.0
  %1295 = vmatpush1.msra.mxu0 0.0
  %1296 = vmatprep.subr.mxu0 0.0
  %1297 = vmatpush1.msra.mxu0 0.0
  %1298 = vmatprep.subr.mxu0 0.0
  %1299 = vmatpush1.msra.mxu0 0.0
  %1300 = vmatprep.subr.mxu0 0.0
  %1301 = vmatpush1.msra.mxu0 0.0
  %1302 = vmatprep.subr.mxu0 0.0
  %1303 = vmatpush1.msra.mxu0 0.0
  %1304 = vmatprep.subr.mxu0 0.0
  %1305 = vmatpush1.msra.mxu0 0.0
  %1306 = vmatprep.subr.mxu0 0.0
  %1307 = vmatpush1.msra.mxu0 0.0
  %1308 = vmatprep.subr.mxu0 0.0
  %1309 = vmatpush1.msra.mxu0 0.0
  %1310 = vmatprep.subr.mxu0 0.0
  %1311 = vmatpush1.msra.mxu0 0.0
  %1312 = vmatprep.subr.mxu0 0.0
  %1313 = vmatpush1.msra.mxu0 0.0
  %1314 = vmatprep.subr.mxu0 0.0
  %1315 = vmatpush1.msra.mxu0 0.0
  %1316 = vmatprep.subr.mxu0 0.0
  %1317 = vmatpush1.msra.mxu0 %v168
  %1318 = vmatprep.subr.mxu0 0.0
  %1319 = vmatpush1.msra.mxu0 %v167
  %1320 = vmatprep.subr.mxu0 0.0
  %1321 = vmatpush1.msra.mxu0 %v166
  %1322 = vmatprep.subr.mxu0 0.0
  %1323 = vmatpush1.msra.mxu0 %v165
  %1324 = vmatprep.subr.mxu0 0.0
  %1325 = vmatpush2.msra.mxu0 0.0
  %1326 = vmatprep.subr.mxu0 0.0
  %1327 = vmatpush2.msra.mxu0 0.0
  %1328 = vmatprep.subr.mxu0 0.0
  %1329 = vmatpush2.msra.mxu0 0.0
  %1330 = vmatprep.subr.mxu0 0.0
  %1331 = vmatpush2.msra.mxu0 0.0
  %1332 = vmatprep.subr.mxu0 0.0
  %1333 = vmatpush2.msra.mxu0 0.0
  %1334 = vmatprep.subr.mxu0 0.0
  %1335 = vmatpush2.msra.mxu0 0.0
  %1336 = vmatprep.subr.mxu0 0.0
  %1337 = vmatpush2.msra.mxu0 0.0
  %1338 = vmatprep.subr.mxu0 0.0
  %1339 = vmatpush2.msra.mxu0 0.0
  %1340 = vmatprep.subr.mxu0 0.0
  %1341 = vmatpush2.msra.mxu0 0.0
  %1342 = vmatprep.subr.mxu0 0.0
  %1343 = vmatpush2.msra.mxu0 0.0
  %1344 = vmatprep.subr.mxu0 0.0
  %1345 = vmatpush2.msra.mxu0 0.0
  %1346 = vmatprep.subr.mxu0 0.0
  %1347 = vmatpush2.msra.mxu0 0.0
  %1348 = vmatprep.subr.mxu0 0.0
  %1349 = vmatpush2.msra.mxu0 0.0
  %1350 = vmatprep.subr.mxu0 0.0
  %1351 = vmatpush2.msra.mxu0 0.0
  %1352 = vmatprep.subr.mxu0 0.0
  %1353 = vmatpush2.msra.mxu0 0.0
  %1354 = vmatprep.subr.mxu0 0.0
  %1355 = vmatpush2.msra.mxu0 0.0
  %1356 = vmatprep.mubr.f32.mxu0 0.0
  %1357 = vmatmul.mubr.f32.gmra.mxu0 %v1194
  %v1358 = vpop.f32.mrf.mxu0
  %v1359 = vadd.f32 0.0, %v1358
  %v1360 = vpop.f32.mrf.mxu0
  %1361 = vdwg.mxu0
  %v1362 = vadd.f32 %v1291, %v1359
  %v1363 = vadd.f32 %v1362, %v265
  %v1364 = vmul.f32 %v1363, 0.5
  %v1365 = vsel %vm164, %v1363, %v1364
  %v1366 = vtanh.pop %v1365
  %v1367 = vmul.f32 %v1366, 0.5
  %v1368 = vadd.f32 %v1367, 0.5
  %v1369 = vsel %vm164, %v1366, %v1368
  %v1370 = vmul.f32 %v1369, %v1109
  %1372 = vrot.lane.b32.xlu0 %v1369, 64
  %v1373 = vpop.permute.xlu0 %1372
  %v1375 = vmul.f32 %v1369, %v1373
  %1377 = vrot.lane.b32.xlu0 %v1375, 32
  %v1378 = vpop.permute.xlu0 %1377
  %v1380 = vadd.f32 %v1370, %v1378
  %v1381 = vtanh.pop %v1380
  %1383 = vrot.lane.b32.xlu0 %v1381, 64
  %v1384 = vpop.permute.xlu0 %1383
  %v1386 = vmul.f32 %v1369, %v1384
  %1388 = vrot.lane.b32.xlu0 %v1289, 32
  %v1389 = vpop.permute.xlu0 %1388
  %v1390 = vsel %vm186, %v1389, 0
  %1392 = vmatprep.subr.mxu0 0.0
  %1393 = vmatpush1.msra.mxu0 0.0
  %1394 = vmatprep.subr.mxu0 0.0
  %1395 = vmatpush1.msra.mxu0 0.0
  %1396 = vmatprep.subr.mxu0 0.0
  %1397 = vmatpush1.msra.mxu0 0.0
  %1398 = vmatprep.subr.mxu0 0.0
  %1399 = vmatpush1.msra.mxu0 0.0
  %1400 = vmatprep.subr.mxu0 0.0
  %1401 = vmatpush1.msra.mxu0 0.0
  %1402 = vmatprep.subr.mxu0 0.0
  %1403 = vmatpush1.msra.mxu0 0.0
  %1404 = vmatprep.subr.mxu0 0.0
  %1405 = vmatpush1.msra.mxu0 0.0
  %1406 = vmatprep.subr.mxu0 0.0
  %1407 = vmatpush1.msra.mxu0 0.0
  %1408 = vmatprep.subr.mxu0 0.0
  %1409 = vmatpush1.msra.mxu0 0.0
  %1410 = vmatprep.subr.mxu0 0.0
  %1411 = vmatpush1.msra.mxu0 0.0
  %1412 = vmatprep.subr.mxu0 0.0
  %1413 = vmatpush1.msra.mxu0 0.0
  %1414 = vmatprep.subr.mxu0 0.0
  %1415 = vmatpush1.msra.mxu0 0.0
  %1416 = vmatprep.subr.mxu0 0.0
  %1417 = vmatpush1.msra.mxu0 %v177
  %1418 = vmatprep.subr.mxu0 0.0
  %1419 = vmatpush1.msra.mxu0 %v176
  %1420 = vmatprep.subr.mxu0 0.0
  %1421 = vmatpush1.msra.mxu0 %v175
  %1422 = vmatprep.subr.mxu0 0.0
  %1423 = vmatpush1.msra.mxu0 %v174
  %1424 = vmatprep.subr.mxu0 0.0
  %1425 = vmatpush2.msra.mxu0 0.0
  %1426 = vmatprep.subr.mxu0 0.0
  %1427 = vmatpush2.msra.mxu0 0.0
  %1428 = vmatprep.subr.mxu0 0.0
  %1429 = vmatpush2.msra.mxu0 0.0
  %1430 = vmatprep.subr.mxu0 0.0
  %1431 = vmatpush2.msra.mxu0 0.0
  %1432 = vmatprep.subr.mxu0 0.0
  %1433 = vmatpush2.msra.mxu0 0.0
  %1434 = vmatprep.subr.mxu0 0.0
  %1435 = vmatpush2.msra.mxu0 0.0
  %1436 = vmatprep.subr.mxu0 0.0
  %1437 = vmatpush2.msra.mxu0 0.0
  %1438 = vmatprep.subr.mxu0 0.0
  %1439 = vmatpush2.msra.mxu0 0.0
  %1440 = vmatprep.subr.mxu0 0.0
  %1441 = vmatpush2.msra.mxu0 0.0
  %1442 = vmatprep.subr.mxu0 0.0
  %1443 = vmatpush2.msra.mxu0 0.0
  %1444 = vmatprep.subr.mxu0 0.0
  %1445 = vmatpush2.msra.mxu0 0.0
  %1446 = vmatprep.subr.mxu0 0.0
  %1447 = vmatpush2.msra.mxu0 0.0
  %1448 = vmatprep.subr.mxu0 0.0
  %1449 = vmatpush2.msra.mxu0 0.0
  %1450 = vmatprep.subr.mxu0 0.0
  %1451 = vmatpush2.msra.mxu0 0.0
  %1452 = vmatprep.subr.mxu0 0.0
  %1453 = vmatpush2.msra.mxu0 0.0
  %1454 = vmatprep.subr.mxu0 0.0
  %1455 = vmatpush2.msra.mxu0 0.0
  %1456 = vmatprep.mubr.f32.mxu0 0.0
  %1457 = vmatmul.mubr.f32.gmra.mxu0 %v1390
  %v1458 = vpop.f32.mrf.mxu0
  %v1459 = vadd.f32 0.0, %v1458
  %v1460 = vpop.f32.mrf.mxu0
  %1461 = vdwg.mxu0
  %1463 = vrot.lane.b32.xlu0 %v1386, 32
  %v1464 = vpop.permute.xlu0 %1463
  %v1465 = vsel %vm186, %v1464, 0
  %1467 = vmatprep.subr.mxu0 0.0
  %1468 = vmatpush1.msra.mxu0 0.0
  %1469 = vmatprep.subr.mxu0 0.0
  %1470 = vmatpush1.msra.mxu0 0.0
  %1471 = vmatprep.subr.mxu0 0.0
  %1472 = vmatpush1.msra.mxu0 0.0
  %1473 = vmatprep.subr.mxu0 0.0
  %1474 = vmatpush1.msra.mxu0 0.0
  %1475 = vmatprep.subr.mxu0 0.0
  %1476 = vmatpush1.msra.mxu0 0.0
  %1477 = vmatprep.subr.mxu0 0.0
  %1478 = vmatpush1.msra.mxu0 0.0
  %1479 = vmatprep.subr.mxu0 0.0
  %1480 = vmatpush1.msra.mxu0 0.0
  %1481 = vmatprep.subr.mxu0 0.0
  %1482 = vmatpush1.msra.mxu0 0.0
  %1483 = vmatprep.subr.mxu0 0.0
  %1484 = vmatpush1.msra.mxu0 0.0
  %1485 = vmatprep.subr.mxu0 0.0
  %1486 = vmatpush1.msra.mxu0 0.0
  %1487 = vmatprep.subr.mxu0 0.0
  %1488 = vmatpush1.msra.mxu0 0.0
  %1489 = vmatprep.subr.mxu0 0.0
  %1490 = vmatpush1.msra.mxu0 0.0
  %1491 = vmatprep.subr.mxu0 0.0
  %1492 = vmatpush1.msra.mxu0 %v173
  %1493 = vmatprep.subr.mxu0 0.0
  %1494 = vmatpush1.msra.mxu0 %v172
  %1495 = vmatprep.subr.mxu0 0.0
  %1496 = vmatpush1.msra.mxu0 %v171
  %1497 = vmatprep.subr.mxu0 0.0
  %1498 = vmatpush1.msra.mxu0 %v170
  %1499 = vmatprep.subr.mxu0 0.0
  %1500 = vmatpush2.msra.mxu0 0.0
  %1501 = vmatprep.subr.mxu0 0.0
  %1502 = vmatpush2.msra.mxu0 0.0
  %1503 = vmatprep.subr.mxu0 0.0
  %1504 = vmatpush2.msra.mxu0 0.0
  %1505 = vmatprep.subr.mxu0 0.0
  %1506 = vmatpush2.msra.mxu0 0.0
  %1507 = vmatprep.subr.mxu0 0.0
  %1508 = vmatpush2.msra.mxu0 0.0
  %1509 = vmatprep.subr.mxu0 0.0
  %1510 = vmatpush2.msra.mxu0 0.0
  %1511 = vmatprep.subr.mxu0 0.0
  %1512 = vmatpush2.msra.mxu0 0.0
  %1513 = vmatprep.subr.mxu0 0.0
  %1514 = vmatpush2.msra.mxu0 0.0
  %1515 = vmatprep.subr.mxu0 0.0
  %1516 = vmatpush2.msra.mxu0 0.0
  %1517 = vmatprep.subr.mxu0 0.0
  %1518 = vmatpush2.msra.mxu0 0.0
  %1519 = vmatprep.subr.mxu0 0.0
  %1520 = vmatpush2.msra.mxu0 0.0
  %1521 = vmatprep.subr.mxu0 0.0
  %1522 = vmatpush2.msra.mxu0 0.0
  %1523 = vmatprep.subr.mxu0 0.0
  %1524 = vmatpush2.msra.mxu0 0.0
  %1525 = vmatprep.subr.mxu0 0.0
  %1526 = vmatpush2.msra.mxu0 0.0
  %1527 = vmatprep.subr.mxu0 0.0
  %1528 = vmatpush2.msra.mxu0 0.0
  %1529 = vmatprep.subr.mxu0 0.0
  %1530 = vmatpush2.msra.mxu0 0.0
  %1531 = vmatprep.mubr.f32.mxu0 0.0
  %1532 = vmatmul.mubr.f32.gmra.mxu0 %v1465
  %v1533 = vpop.f32.mrf.mxu0
  %v1534 = vadd.f32 %v1459, %v1533
  %v1535 = vpop.f32.mrf.mxu0
  %1536 = vdwg.mxu0
  %v1537 = vadd.f32 %v1534, %v447
  %v1538 = vmul.f32 %v1537, 0.5
  %v1539 = vsel %vm164, %v1537, %v1538
  %v1540 = vtanh.pop %v1539
  %v1541 = vmul.f32 %v1540, 0.5
  %v1542 = vadd.f32 %v1541, 0.5
  %v1543 = vsel %vm164, %v1540, %v1542
  %v1544 = vmul.f32 %v1543, %v1283
  %1546 = vrot.lane.b32.xlu0 %v1543, 64
  %v1547 = vpop.permute.xlu0 %1546
  %v1549 = vmul.f32 %v1543, %v1547
  %1551 = vrot.lane.b32.xlu0 %v1549, 32
  %v1552 = vpop.permute.xlu0 %1551
  %v1554 = vadd.f32 %v1544, %v1552
  %v1555 = vtanh.pop %v1554
  %1557 = vrot.lane.b32.xlu0 %v1555, 64
  %v1558 = vpop.permute.xlu0 %1557
  %v1560 = vmul.f32 %v1543, %v1558
  %s1561 = scalar_lea.vmem [#allocation2], 40
  %v1562 = vld [vmem:[%s1561] sm:$0xff]
  %1563 = vmatprep.subr.mxu0 0.0
  %1564 = vmatpush1.msra.mxu0 0.0
  %1565 = vmatprep.subr.mxu0 0.0
  %1566 = vmatpush1.msra.mxu0 0.0
  %1567 = vmatprep.subr.mxu0 0.0
  %1568 = vmatpush1.msra.mxu0 0.0
  %1569 = vmatprep.subr.mxu0 0.0
  %1570 = vmatpush1.msra.mxu0 0.0
  %1571 = vmatprep.subr.mxu0 0.0
  %1572 = vmatpush1.msra.mxu0 0.0
  %1573 = vmatprep.subr.mxu0 0.0
  %1574 = vmatpush1.msra.mxu0 0.0
  %1575 = vmatprep.subr.mxu0 0.0
  %1576 = vmatpush1.msra.mxu0 0.0
  %1577 = vmatprep.subr.mxu0 0.0
  %1578 = vmatpush1.msra.mxu0 0.0
  %1579 = vmatprep.subr.mxu0 0.0
  %1580 = vmatpush1.msra.mxu0 0.0
  %1581 = vmatprep.subr.mxu0 0.0
  %1582 = vmatpush1.msra.mxu0 0.0
  %1583 = vmatprep.subr.mxu0 0.0
  %1584 = vmatpush1.msra.mxu0 0.0
  %1585 = vmatprep.subr.mxu0 0.0
  %1586 = vmatpush1.msra.mxu0 0.0
  %1587 = vmatprep.subr.mxu0 0.0
  %1588 = vmatpush1.msra.mxu0 %v168
  %1589 = vmatprep.subr.mxu0 0.0
  %1590 = vmatpush1.msra.mxu0 %v167
  %1591 = vmatprep.subr.mxu0 0.0
  %1592 = vmatpush1.msra.mxu0 %v166
  %1593 = vmatprep.subr.mxu0 0.0
  %1594 = vmatpush1.msra.mxu0 %v165
  %1595 = vmatprep.subr.mxu0 0.0
  %1596 = vmatpush2.msra.mxu0 0.0
  %1597 = vmatprep.subr.mxu0 0.0
  %1598 = vmatpush2.msra.mxu0 0.0
  %1599 = vmatprep.subr.mxu0 0.0
  %1600 = vmatpush2.msra.mxu0 0.0
  %1601 = vmatprep.subr.mxu0 0.0
  %1602 = vmatpush2.msra.mxu0 0.0
  %1603 = vmatprep.subr.mxu0 0.0
  %1604 = vmatpush2.msra.mxu0 0.0
  %1605 = vmatprep.subr.mxu0 0.0
  %1606 = vmatpush2.msra.mxu0 0.0
  %1607 = vmatprep.subr.mxu0 0.0
  %1608 = vmatpush2.msra.mxu0 0.0
  %1609 = vmatprep.subr.mxu0 0.0
  %1610 = vmatpush2.msra.mxu0 0.0
  %1611 = vmatprep.subr.mxu0 0.0
  %1612 = vmatpush2.msra.mxu0 0.0
  %1613 = vmatprep.subr.mxu0 0.0
  %1614 = vmatpush2.msra.mxu0 0.0
  %1615 = vmatprep.subr.mxu0 0.0
  %1616 = vmatpush2.msra.mxu0 0.0
  %1617 = vmatprep.subr.mxu0 0.0
  %1618 = vmatpush2.msra.mxu0 0.0
  %1619 = vmatprep.subr.mxu0 0.0
  %1620 = vmatpush2.msra.mxu0 0.0
  %1621 = vmatprep.subr.mxu0 0.0
  %1622 = vmatpush2.msra.mxu0 0.0
  %1623 = vmatprep.subr.mxu0 0.0
  %1624 = vmatpush2.msra.mxu0 0.0
  %1625 = vmatprep.subr.mxu0 0.0
  %1626 = vmatpush2.msra.mxu0 0.0
  %1627 = vmatprep.mubr.f32.mxu0 0.0
  %1628 = vmatmul.mubr.f32.gmra.mxu0 %v1465
  %v1629 = vpop.f32.mrf.mxu0
  %v1630 = vadd.f32 0.0, %v1629
  %v1631 = vpop.f32.mrf.mxu0
  %1632 = vdwg.mxu0
  %v1633 = vadd.f32 %v1562, %v1630
  %v1634 = vadd.f32 %v1633, %v265
  %v1635 = vmul.f32 %v1634, 0.5
  %v1636 = vsel %vm164, %v1634, %v1635
  %v1637 = vtanh.pop %v1636
  %v1638 = vmul.f32 %v1637, 0.5
  %v1639 = vadd.f32 %v1638, 0.5
  %v1640 = vsel %vm164, %v1637, %v1639
  %v1641 = vmul.f32 %v1640, %v1380
  %1643 = vrot.lane.b32.xlu0 %v1640, 64
  %v1644 = vpop.permute.xlu0 %1643
  %v1646 = vmul.f32 %v1640, %v1644
  %1648 = vrot.lane.b32.xlu0 %v1646, 32
  %v1649 = vpop.permute.xlu0 %1648
  %v1651 = vadd.f32 %v1641, %v1649
  %v1652 = vtanh.pop %v1651
  %1654 = vrot.lane.b32.xlu0 %v1652, 64
  %v1655 = vpop.permute.xlu0 %1654
  %v1657 = vmul.f32 %v1640, %v1655
  %1659 = vrot.lane.b32.xlu0 %v1560, 32
  %v1660 = vpop.permute.xlu0 %1659
  %v1661 = vsel %vm186, %v1660, 0
  %1663 = vmatprep.subr.mxu0 0.0
  %1664 = vmatpush1.msra.mxu0 0.0
  %1665 = vmatprep.subr.mxu0 0.0
  %1666 = vmatpush1.msra.mxu0 0.0
  %1667 = vmatprep.subr.mxu0 0.0
  %1668 = vmatpush1.msra.mxu0 0.0
  %1669 = vmatprep.subr.mxu0 0.0
  %1670 = vmatpush1.msra.mxu0 0.0
  %1671 = vmatprep.subr.mxu0 0.0
  %1672 = vmatpush1.msra.mxu0 0.0
  %1673 = vmatprep.subr.mxu0 0.0
  %1674 = vmatpush1.msra.mxu0 0.0
  %1675 = vmatprep.subr.mxu0 0.0
  %1676 = vmatpush1.msra.mxu0 0.0
  %1677 = vmatprep.subr.mxu0 0.0
  %1678 = vmatpush1.msra.mxu0 0.0
  %1679 = vmatprep.subr.mxu0 0.0
  %1680 = vmatpush1.msra.mxu0 0.0
  %1681 = vmatprep.subr.mxu0 0.0
  %1682 = vmatpush1.msra.mxu0 0.0
  %1683 = vmatprep.subr.mxu0 0.0
  %1684 = vmatpush1.msra.mxu0 0.0
  %1685 = vmatprep.subr.mxu0 0.0
  %1686 = vmatpush1.msra.mxu0 0.0
  %1687 = vmatprep.subr.mxu0 0.0
  %1688 = vmatpush1.msra.mxu0 %v177
  %1689 = vmatprep.subr.mxu0 0.0
  %1690 = vmatpush1.msra.mxu0 %v176
  %1691 = vmatprep.subr.mxu0 0.0
  %1692 = vmatpush1.msra.mxu0 %v175
  %1693 = vmatprep.subr.mxu0 0.0
  %1694 = vmatpush1.msra.mxu0 %v174
  %1695 = vmatprep.subr.mxu0 0.0
  %1696 = vmatpush2.msra.mxu0 0.0
  %1697 = vmatprep.subr.mxu0 0.0
  %1698 = vmatpush2.msra.mxu0 0.0
  %1699 = vmatprep.subr.mxu0 0.0
  %1700 = vmatpush2.msra.mxu0 0.0
  %1701 = vmatprep.subr.mxu0 0.0
  %1702 = vmatpush2.msra.mxu0 0.0
  %1703 = vmatprep.subr.mxu0 0.0
  %1704 = vmatpush2.msra.mxu0 0.0
  %1705 = vmatprep.subr.mxu0 0.0
  %1706 = vmatpush2.msra.mxu0 0.0
  %1707 = vmatprep.subr.mxu0 0.0
  %1708 = vmatpush2.msra.mxu0 0.0
  %1709 = vmatprep.subr.mxu0 0.0
  %1710 = vmatpush2.msra.mxu0 0.0
  %1711 = vmatprep.subr.mxu0 0.0
  %1712 = vmatpush2.msra.mxu0 0.0
  %1713 = vmatprep.subr.mxu0 0.0
  %1714 = vmatpush2.msra.mxu0 0.0
  %1715 = vmatprep.subr.mxu0 0.0
  %1716 = vmatpush2.msra.mxu0 0.0
  %1717 = vmatprep.subr.mxu0 0.0
  %1718 = vmatpush2.msra.mxu0 0.0
  %1719 = vmatprep.subr.mxu0 0.0
  %1720 = vmatpush2.msra.mxu0 0.0
  %1721 = vmatprep.subr.mxu0 0.0
  %1722 = vmatpush2.msra.mxu0 0.0
  %1723 = vmatprep.subr.mxu0 0.0
  %1724 = vmatpush2.msra.mxu0 0.0
  %1725 = vmatprep.subr.mxu0 0.0
  %1726 = vmatpush2.msra.mxu0 0.0
  %1727 = vmatprep.mubr.f32.mxu0 0.0
  %1728 = vmatmul.mubr.f32.gmra.mxu0 %v1661
  %v1729 = vpop.f32.mrf.mxu0
  %v1730 = vadd.f32 0.0, %v1729
  %v1731 = vpop.f32.mrf.mxu0
  %1732 = vdwg.mxu0
  %1734 = vrot.lane.b32.xlu0 %v1657, 32
  %v1735 = vpop.permute.xlu0 %1734
  %v1736 = vsel %vm186, %v1735, 0
  %1738 = vmatprep.subr.mxu0 0.0
  %1739 = vmatpush1.msra.mxu0 0.0
  %1740 = vmatprep.subr.mxu0 0.0
  %1741 = vmatpush1.msra.mxu0 0.0
  %1742 = vmatprep.subr.mxu0 0.0
  %1743 = vmatpush1.msra.mxu0 0.0
  %1744 = vmatprep.subr.mxu0 0.0
  %1745 = vmatpush1.msra.mxu0 0.0
  %1746 = vmatprep.subr.mxu0 0.0
  %1747 = vmatpush1.msra.mxu0 0.0
  %1748 = vmatprep.subr.mxu0 0.0
  %1749 = vmatpush1.msra.mxu0 0.0
  %1750 = vmatprep.subr.mxu0 0.0
  %1751 = vmatpush1.msra.mxu0 0.0
  %1752 = vmatprep.subr.mxu0 0.0
  %1753 = vmatpush1.msra.mxu0 0.0
  %1754 = vmatprep.subr.mxu0 0.0
  %1755 = vmatpush1.msra.mxu0 0.0
  %1756 = vmatprep.subr.mxu0 0.0
  %1757 = vmatpush1.msra.mxu0 0.0
  %1758 = vmatprep.subr.mxu0 0.0
  %1759 = vmatpush1.msra.mxu0 0.0
  %1760 = vmatprep.subr.mxu0 0.0
  %1761 = vmatpush1.msra.mxu0 0.0
  %1762 = vmatprep.subr.mxu0 0.0
  %1763 = vmatpush1.msra.mxu0 %v173
  %1764 = vmatprep.subr.mxu0 0.0
  %1765 = vmatpush1.msra.mxu0 %v172
  %1766 = vmatprep.subr.mxu0 0.0
  %1767 = vmatpush1.msra.mxu0 %v171
  %1768 = vmatprep.subr.mxu0 0.0
  %1769 = vmatpush1.msra.mxu0 %v170
  %1770 = vmatprep.subr.mxu0 0.0
  %1771 = vmatpush2.msra.mxu0 0.0
  %1772 = vmatprep.subr.mxu0 0.0
  %1773 = vmatpush2.msra.mxu0 0.0
  %1774 = vmatprep.subr.mxu0 0.0
  %1775 = vmatpush2.msra.mxu0 0.0
  %1776 = vmatprep.subr.mxu0 0.0
  %1777 = vmatpush2.msra.mxu0 0.0
  %1778 = vmatprep.subr.mxu0 0.0
  %1779 = vmatpush2.msra.mxu0 0.0
  %1780 = vmatprep.subr.mxu0 0.0
  %1781 = vmatpush2.msra.mxu0 0.0
  %1782 = vmatprep.subr.mxu0 0.0
  %1783 = vmatpush2.msra.mxu0 0.0
  %1784 = vmatprep.subr.mxu0 0.0
  %1785 = vmatpush2.msra.mxu0 0.0
  %1786 = vmatprep.subr.mxu0 0.0
  %1787 = vmatpush2.msra.mxu0 0.0
  %1788 = vmatprep.subr.mxu0 0.0
  %1789 = vmatpush2.msra.mxu0 0.0
  %1790 = vmatprep.subr.mxu0 0.0
  %1791 = vmatpush2.msra.mxu0 0.0
  %1792 = vmatprep.subr.mxu0 0.0
  %1793 = vmatpush2.msra.mxu0 0.0
  %1794 = vmatprep.subr.mxu0 0.0
  %1795 = vmatpush2.msra.mxu0 0.0
  %1796 = vmatprep.subr.mxu0 0.0
  %1797 = vmatpush2.msra.mxu0 0.0
  %1798 = vmatprep.subr.mxu0 0.0
  %1799 = vmatpush2.msra.mxu0 0.0
  %1800 = vmatprep.subr.mxu0 0.0
  %1801 = vmatpush2.msra.mxu0 0.0
  %1802 = vmatprep.mubr.f32.mxu0 0.0
  %1803 = vmatmul.mubr.f32.gmra.mxu0 %v1736
  %v1804 = vpop.f32.mrf.mxu0
  %v1805 = vadd.f32 %v1730, %v1804
  %v1806 = vpop.f32.mrf.mxu0
  %1807 = vdwg.mxu0
  %v1808 = vadd.f32 %v1805, %v447
  %v1809 = vmul.f32 %v1808, 0.5
  %v1810 = vsel %vm164, %v1808, %v1809
  %v1811 = vtanh.pop %v1810
  %v1812 = vmul.f32 %v1811, 0.5
  %v1813 = vadd.f32 %v1812, 0.5
  %v1814 = vsel %vm164, %v1811, %v1813
  %v1815 = vmul.f32 %v1814, %v1554
  %1817 = vrot.lane.b32.xlu0 %v1814, 64
  %v1818 = vpop.permute.xlu0 %1817
  %v1820 = vmul.f32 %v1814, %v1818
  %1822 = vrot.lane.b32.xlu0 %v1820, 32
  %v1823 = vpop.permute.xlu0 %1822
  %v1825 = vadd.f32 %v1815, %v1823
  %v1826 = vtanh.pop %v1825
  %1828 = vrot.lane.b32.xlu0 %v1826, 64
  %v1829 = vpop.permute.xlu0 %1828
  %v1831 = vmul.f32 %v1814, %v1829
  %1833 = vrot.lane.b32.xlu0 %v1831, 32
  %v1834 = vpop.permute.xlu0 %1833
  %1836 = vst.msk [vmem:[%s9] sm:$0xff] %vm186, %v1834
  // Predicated region
  $region38: #{_lambda_.3} parent=0 // pred_check
    _
  $region39: #{_lambda_.3} parent=0 // pred_check_branch
    %1838 = sbr.rel (0) target = $region41
  $region40: #{_lambda_.3} parent=0 // pred_region
    _
  $region41: #{_lambda_.3} parent=0 // pred_fallthru
    _
  // Predicated region
  $region42: #{_lambda_.3} parent=0 // pred_check
    _
  $region43: #{_lambda_.3} parent=0 // pred_check_branch
    %1840 = sbr.rel (0) target = $region45
  $region44: #{_lambda_.3} parent=0 // pred_region
    _
  $region45: #{_lambda_.3} parent=0 // pred_fallthru
    _

</llo_original>
